<compile_context>
chip_gen: v7x
topology: tpu7x:2x2x1
jax: 0.10.0
libtpu: 0.0.40
codegen_flags: <defaults>
</compile_context>

<pallas_src>
import functools
import math

import jax
import jax.numpy as jnp
import numpy as np
from jax import lax
from jax.experimental import pallas as pl
from jax.experimental.pallas import tpu as pltpu


def _round_up(v, m):
    return (v + m - 1) // m * m


def _conv3x3_im2col(xp, w2d, hout, wout, c, stride):
    """3x3 conv on an already zero-padded (H+2, W+2, C) tile.

    Gathers the 9 shifted views into one im2col slab [Hout*Wout, 9*C] (bf16)
    and performs a single MXU matmul with f32 accumulation.
    """
    cols = []
    for ky in range(3):
        for kx in range(3):
            if stride == 1:
                patch = xp[ky:ky + hout, kx:kx + wout, :]
            else:
                # TODO(synk): stride>1 uses an in-kernel strided slice; could be
                # moved to the DMA/index_map level for large strided layers.
                patch = lax.slice(
                    xp, (ky, kx, 0),
                    (ky + (hout - 1) * stride + 1,
                     kx + (wout - 1) * stride + 1, c),
                    (stride, stride, 1))
            cols.append(patch.reshape(hout * wout, c).astype(jnp.bfloat16))
    patches = jnp.concatenate(cols, axis=1)              # (Hout*Wout, 9*C) bf16
    return jnp.dot(patches, w2d, preferred_element_type=jnp.float32)


def _write_padded(pad_ref, interior, h, w, c):
    """Write `interior` (h, w, c) into pad_ref (h+2, w+2, c), zeroing only the halo ring."""
    zrow = jnp.zeros((1, w + 2, c), jnp.float32)
    zcol = jnp.zeros((h + 2, 1, c), jnp.float32)
    pad_ref[0:1, :, :] = zrow
    pad_ref[h + 1:h + 2, :, :] = zrow
    pad_ref[:, 0:1, :] = zcol
    pad_ref[:, w + 1:w + 2, :] = zcol
    pad_ref[1:h + 1, 1:w + 1, :] = interior


def _basic_block_kernel(*refs, stride, equal_in_out):
    if equal_in_out:
        (x_ref, s1_ref, b1_ref, w1_ref, s2_ref, b2_ref, w2_ref,
         out_ref, pad1_ref, pad2_ref) = refs
        ws_ref = None
    else:
        (x_ref, s1_ref, b1_ref, w1_ref, s2_ref, b2_ref, w2_ref, ws_ref,
         out_ref, pad1_ref, pad2_ref) = refs

    _, h, w, cp = x_ref.shape
    _, hout, wout, cop = out_ref.shape

    # ---- bn1 + relu1 (folded per-channel scale/shift, f32) ----
    x = x_ref[0]                                          # (h, w, cp)
    a = jnp.maximum(x * s1_ref[...].reshape(1, 1, cp)
                    + b1_ref[...].reshape(1, 1, cp), 0.0)

    # ---- conv1: 3x3, stride, pad=1 (single im2col matmul) ----
    _write_padded(pad1_ref, a, h, w, cp)
    acc1 = _conv3x3_im2col(pad1_ref[...], w1_ref[...], hout, wout, cp, stride)

    # ---- bn2 + relu2, fused on the conv1 accumulator ----
    h1 = jnp.maximum(acc1 * s2_ref[...] + b2_ref[...], 0.0)
    # TODO(synk): F.dropout (droprate > 0) not implemented; module default is 0.0.

    # ---- conv2: 3x3, stride=1, pad=1 ----
    _write_padded(pad2_ref, h1.reshape(hout, wout, cop), hout, wout, cop)
    acc2 = _conv3x3_im2col(pad2_ref[...], w2_ref[...], hout, wout, cop, 1)

    # ---- shortcut ----
    if equal_in_out:
        shortcut = x.reshape(h * w, cp)                   # identity (stride == 1)
    else:
        if stride == 1:
            a_s = a
        else:
            a_s = lax.slice(a, (0, 0, 0),
                            ((hout - 1) * stride + 1,
                             (wout - 1) * stride + 1, cp),
                            (stride, stride, 1))
        shortcut = jnp.dot(a_s.reshape(hout * wout, cp).astype(jnp.bfloat16),
                           ws_ref[...], preferred_element_type=jnp.float32)

    out_ref[0] = (acc2 + shortcut).reshape(hout, wout, cop)


def basic_block_forward(x_nchw, params, *, stride, eps=1e-5):
    """Fused BasicBlock forward. Input/output are NCHW float32 (inference-mode BN)."""
    x = jnp.transpose(x_nchw, (0, 2, 3, 1)).astype(jnp.float32)   # NCHW -> NHWC
    n, h, w, cin = x.shape
    cout = params["conv1_w"].shape[0]
    equal_in_out = (cin == cout)
    if equal_in_out and stride != 1:
        raise ValueError("identity shortcut requires stride == 1")

    cp = _round_up(cin, 128)            # lane-dense channel padding
    cop = _round_up(cout, 128)
    hout = (h - 1) // stride + 1
    wout = (w - 1) // stride + 1

    if cp != cin:
        x = jnp.pad(x, ((0, 0), (0, 0), (0, 0), (0, cp - cin)))

    # Fold BN (eval mode) into per-channel scale / shift; zero-pad channels.
    def fold(g, b, m, v, c_to):
        s = g / jnp.sqrt(v + eps)
        t = b - m * s
        s = jnp.pad(s, (0, c_to - s.shape[0]))
        t = jnp.pad(t, (0, c_to - t.shape[0]))
        return s.reshape(1, c_to), t.reshape(1, c_to)

    s1, b1 = fold(params["bn1_gamma"], params["bn1_beta"],
                  params["bn1_mean"], params["bn1_var"], cp)
    s2, b2 = fold(params["bn2_gamma"], params["bn2_beta"],
                  params["bn2_mean"], params["bn2_var"], cop)

    # Conv weights: OIHW -> HWIO, channel-pad, flatten to (KH*KW*Cin_pad, Cout_pad), bf16.
    def conv_w(w_oihw, ci_to, co_to):
        wt = jnp.transpose(w_oihw, (2, 3, 1, 0))
        kh, kw, ci, co = wt.shape
        wt = jnp.pad(wt, ((0, 0), (0, 0), (0, ci_to - ci), (0, co_to - co)))
        return wt.reshape(kh * kw * ci_to, co_to).astype(jnp.bfloat16)

    w1r = conv_w(params["conv1_w"], cp, cop)              # (9*cp, cop)
    w2r = conv_w(params["conv2_w"], cop, cop)             # (9*cop, cop)

    args = [x, s1, b1, w1r, s2, b2, w2r]
    in_specs = [
        pl.BlockSpec((1, h, w, cp), lambda b: (b, 0, 0, 0)),
        pl.BlockSpec((1, cp), lambda b: (0, 0)),
        pl.BlockSpec((1, cp), lambda b: (0, 0)),
        pl.BlockSpec((9 * cp, cop), lambda b: (0, 0)),
        pl.BlockSpec((1, cop), lambda b: (0, 0)),
        pl.BlockSpec((1, cop), lambda b: (0, 0)),
        pl.BlockSpec((9 * cop, cop), lambda b: (0, 0)),
    ]
    if not equal_in_out:
        wsr = conv_w(params["convs_w"], cp, cop)          # (cp, cop)
        args.append(wsr)
        in_specs.append(pl.BlockSpec((cp, cop), lambda b: (0, 0)))

    kernel = functools.partial(_basic_block_kernel, stride=stride,
                               equal_in_out=equal_in_out)

    out_nhwc = pl.pallas_call(
        kernel,
        out_shape=jax.ShapeDtypeStruct((n, hout, wout, cop), jnp.float32),
        grid=(n,),
        in_specs=in_specs,
        out_specs=pl.BlockSpec((1, hout, wout, cop), lambda b: (b, 0, 0, 0)),
        scratch_shapes=[
            pltpu.VMEM((h + 2, w + 2, cp), jnp.float32),        # padded conv1 input
            pltpu.VMEM((hout + 2, wout + 2, cop), jnp.float32),  # padded conv2 input
        ],
        compiler_params=pltpu.CompilerParams(
            dimension_semantics=("parallel",),
            vmem_limit_bytes=48 * 1024 * 1024,
        ),
    )(*args)

    out_nhwc = out_nhwc[..., :cout]                       # drop channel padding
    return jnp.transpose(out_nhwc, (0, 3, 1, 2))          # NHWC -> NCHW


def reference_forward(x, params, stride, eps=1e-5):
    """Pure-JAX (XLA conv) reference mirroring the PyTorch forward, NCHW."""
    def bn(t, g, b, m, v):
        g, b, m, v = (u[None, :, None, None] for u in (g, b, m, v))
        return (t - m) / jnp.sqrt(v + eps) * g + b

    def conv(t, wt, s, p):
        return lax.conv_general_dilated(
            t, wt, (s, s), [(p, p), (p, p)],
            dimension_numbers=("NCHW", "OIHW", "NCHW"))

    cin = x.shape[1]
    cout = params["conv1_w"].shape[0]
    a = jax.nn.relu(bn(x, params["bn1_gamma"], params["bn1_beta"],
                       params["bn1_mean"], params["bn1_var"]))
    out = conv(a, params["conv1_w"], stride, 1)
    out = jax.nn.relu(bn(out, params["bn2_gamma"], params["bn2_beta"],
                         params["bn2_mean"], params["bn2_var"]))
    out = conv(out, params["conv2_w"], 1, 1)
    if cin == cout:
        return x + out
    return conv(a, params["convs_w"], stride, 0) + out


if __name__ == "__main__":
    def make_params(key, cin, cout):
        keys = jax.random.split(key, 11)
        return {
            "bn1_gamma": jax.random.uniform(keys[0], (cin,), jnp.float32, 0.5, 1.5),
            "bn1_beta":  jax.random.normal(keys[1], (cin,), jnp.float32) * 0.1,
            "bn1_mean":  jax.random.normal(keys[2], (cin,), jnp.float32) * 0.1,
            "bn1_var":   jax.random.uniform(keys[3], (cin,), jnp.float32, 0.5, 1.5),
            "conv1_w":   jax.random.normal(keys[4], (cout, cin, 3, 3), jnp.float32)
                         * (1.0 / math.sqrt(cin * 9)),
            "bn2_gamma": jax.random.uniform(keys[5], (cout,), jnp.float32, 0.5, 1.5),
            "bn2_beta":  jax.random.normal(keys[6], (cout,), jnp.float32) * 0.1,
            "bn2_mean":  jax.random.normal(keys[7], (cout,), jnp.float32) * 0.1,
            "bn2_var":   jax.random.uniform(keys[8], (cout,), jnp.float32, 0.5, 1.5),
            "conv2_w":   jax.random.normal(keys[9], (cout, cout, 3, 3), jnp.float32)
                         * (1.0 / math.sqrt(cout * 9)),
            "convs_w":   jax.random.normal(keys[10], (cout, cin, 1, 1), jnp.float32)
                         * (1.0 / math.sqrt(cin)),
        }

    root = jax.random.PRNGKey(0)
    k_p1, k_p2, k_x1, k_x2 = jax.random.split(root, 4)

    # Case 1: in_planes != out_planes -> 1x1 conv shortcut path.
    N, Cin, H, W, Cout, stride = 2, 4, 16, 16, 8, 1
    params1 = make_params(k_p1, Cin, Cout)
    x1 = jax.random.normal(k_x1, (N, Cin, H, W), jnp.float32)
    out1 = jax.block_until_ready(basic_block_forward(x1, params1, stride=stride))
    ref1 = reference_forward(x1, params1, stride)
    np.testing.assert_allclose(np.asarray(out1), np.asarray(ref1), rtol=5e-2, atol=5e-2)

    # Case 2: in_planes == out_planes -> identity shortcut path.
    params2 = make_params(k_p2, Cout, Cout)
    x2 = jax.random.normal(k_x2, (N, Cout, H, W), jnp.float32)
    out2 = jax.block_until_ready(basic_block_forward(x2, params2, stride=1))
    ref2 = reference_forward(x2, params2, 1)
    np.testing.assert_allclose(np.asarray(out2), np.asarray(ref2), rtol=5e-2, atol=5e-2)

    print("KERNEL_OK")
</pallas_src>

<mosaic_0001>
module attributes {stable_mosaic.version = 11 : i64} {
  func.func @_basic_block_kernel(%arg0: i32, %arg1: memref<1x16x16x128xf32, #tpu.memory_space<vmem>>, %arg2: memref<1x128xf32, #tpu.memory_space<vmem>>, %arg3: memref<1x128xf32, #tpu.memory_space<vmem>>, %arg4: memref<1152x128xbf16, #tpu.memory_space<vmem>>, %arg5: memref<1x128xf32, #tpu.memory_space<vmem>>, %arg6: memref<1x128xf32, #tpu.memory_space<vmem>>, %arg7: memref<1152x128xbf16, #tpu.memory_space<vmem>>, %arg8: memref<128x128xbf16, #tpu.memory_space<vmem>>, %arg9: memref<1x16x16x128xf32, #tpu.memory_space<vmem>>, %arg10: memref<18x18x128xf32, #tpu.memory_space<vmem>>, %arg11: memref<18x18x128xf32, #tpu.memory_space<vmem>>) attributes {dimension_semantics = [#tpu.dimension_semantics<parallel>], iteration_bounds = array<i64: 2>, scalar_prefetch = 0 : i64, scratch_operands = 2 : i64, tpu.core_type = #tpu.core_type<tc>, window_params = [{transform_indices = @transform_0, window_bounds = array<i64: 1, 16, 16, 128>}, {pipeline_mode = #tpu.pipeline_mode<synchronous>, transform_indices = @transform_1, window_bounds = array<i64: 1, 128>}, {pipeline_mode = #tpu.pipeline_mode<synchronous>, transform_indices = @transform_2, window_bounds = array<i64: 1, 128>}, {pipeline_mode = #tpu.pipeline_mode<synchronous>, transform_indices = @transform_3, window_bounds = array<i64: 1152, 128>}, {pipeline_mode = #tpu.pipeline_mode<synchronous>, transform_indices = @transform_4, window_bounds = array<i64: 1, 128>}, {pipeline_mode = #tpu.pipeline_mode<synchronous>, transform_indices = @transform_5, window_bounds = array<i64: 1, 128>}, {pipeline_mode = #tpu.pipeline_mode<synchronous>, transform_indices = @transform_6, window_bounds = array<i64: 1152, 128>}, {pipeline_mode = #tpu.pipeline_mode<synchronous>, transform_indices = @transform_7, window_bounds = array<i64: 128, 128>}, {transform_indices = @transform_8, window_bounds = array<i64: 1, 16, 16, 128>}]} {
    %c0 = arith.constant 0 : index
    %c0_0 = arith.constant 0 : index
    %c0_1 = arith.constant 0 : index
    %c0_2 = arith.constant 0 : index
    %0 = vector.load %arg1[%c0, %c0_0, %c0_1, %c0_2] : memref<1x16x16x128xf32, #tpu.memory_space<vmem>>, vector<1x16x16x128xf32>
    %1 = vector.shape_cast %0 : vector<1x16x16x128xf32> to vector<16x16x128xf32>
    %c0_3 = arith.constant 0 : index
    %c0_4 = arith.constant 0 : index
    %2 = vector.load %arg2[%c0_3, %c0_4] : memref<1x128xf32, #tpu.memory_space<vmem>>, vector<1x128xf32>
    %3 = vector.shape_cast %2 : vector<1x128xf32> to vector<1x1x128xf32>
    %4 = vector.broadcast %3 : vector<1x1x128xf32> to vector<16x16x128xf32>
    %5 = arith.mulf %1, %4 : vector<16x16x128xf32>
    %c0_5 = arith.constant 0 : index
    %c0_6 = arith.constant 0 : index
    %6 = vector.load %arg3[%c0_5, %c0_6] : memref<1x128xf32, #tpu.memory_space<vmem>>, vector<1x128xf32>
    %7 = vector.shape_cast %6 : vector<1x128xf32> to vector<1x1x128xf32>
    %8 = vector.broadcast %7 : vector<1x1x128xf32> to vector<16x16x128xf32>
    %9 = arith.addf %5, %8 : vector<16x16x128xf32>
    %cst = arith.constant 0.000000e+00 : f32
    %10 = vector.broadcast %cst : f32 to vector<16x16x128xf32>
    %11 = arith.maximumf %9, %10 : vector<16x16x128xf32>
    %cst_7 = arith.constant 0.000000e+00 : f32
    %12 = vector.broadcast %cst_7 : f32 to vector<1x18x128xf32>
    %cst_8 = arith.constant 0.000000e+00 : f32
    %13 = vector.broadcast %cst_8 : f32 to vector<18x1x128xf32>
    %c0_9 = arith.constant 0 : index
    %c0_10 = arith.constant 0 : index
    %c0_11 = arith.constant 0 : index
    %14 = vector.load %arg10[%c0_9, %c0_10, %c0_11] : memref<18x18x128xf32, #tpu.memory_space<vmem>>, vector<1x18x128xf32>
    tpu.vector_store %arg10[%c0_9, %c0_10, %c0_11], %12 {strides = array<i32>} : memref<18x18x128xf32, #tpu.memory_space<vmem>>, vector<1x18x128xf32>,
    %c17 = arith.constant 17 : index
    %c0_12 = arith.constant 0 : index
    %c0_13 = arith.constant 0 : index
    %15 = vector.load %arg10[%c17, %c0_12, %c0_13] : memref<18x18x128xf32, #tpu.memory_space<vmem>>, vector<1x18x128xf32>
    tpu.vector_store %arg10[%c17, %c0_12, %c0_13], %12 {strides = array<i32>} : memref<18x18x128xf32, #tpu.memory_space<vmem>>, vector<1x18x128xf32>,
    %c0_14 = arith.constant 0 : index
    %c0_15 = arith.constant 0 : index
    %c0_16 = arith.constant 0 : index
    %16 = vector.load %arg10[%c0_14, %c0_15, %c0_16] : memref<18x18x128xf32, #tpu.memory_space<vmem>>, vector<18x1x128xf32>
    tpu.vector_store %arg10[%c0_14, %c0_15, %c0_16], %13 {strides = array<i32>} : memref<18x18x128xf32, #tpu.memory_space<vmem>>, vector<18x1x128xf32>,
    %c0_17 = arith.constant 0 : index
    %c17_18 = arith.constant 17 : index
    %c0_19 = arith.constant 0 : index
    %17 = vector.load %arg10[%c0_17, %c17_18, %c0_19] : memref<18x18x128xf32, #tpu.memory_space<vmem>>, vector<18x1x128xf32>
    tpu.vector_store %arg10[%c0_17, %c17_18, %c0_19], %13 {strides = array<i32>} : memref<18x18x128xf32, #tpu.memory_space<vmem>>, vector<18x1x128xf32>,
    %c1 = arith.constant 1 : index
    %c1_20 = arith.constant 1 : index
    %c0_21 = arith.constant 0 : index
    %18 = vector.load %arg10[%c1, %c1_20, %c0_21] : memref<18x18x128xf32, #tpu.memory_space<vmem>>, vector<16x16x128xf32>
    tpu.vector_store %arg10[%c1, %c1_20, %c0_21], %11 {strides = array<i32>} : memref<18x18x128xf32, #tpu.memory_space<vmem>>, vector<16x16x128xf32>,
    %c0_22 = arith.constant 0 : index
    %c0_23 = arith.constant 0 : index
    %c0_24 = arith.constant 0 : index
    %19 = vector.load %arg10[%c0_22, %c0_23, %c0_24] : memref<18x18x128xf32, #tpu.memory_space<vmem>>, vector<18x18x128xf32>
    %c0_25 = arith.constant 0 : index
    %c0_26 = arith.constant 0 : index
    %20 = vector.load %arg4[%c0_25, %c0_26] : memref<1152x128xbf16, #tpu.memory_space<vmem>>, vector<1152x128xbf16>
    %21 = vector.extract_strided_slice %19 {offsets = [0, 0, 0], sizes = [16, 16, 128], strides = [1, 1, 1]} : vector<18x18x128xf32> to vector<16x16x128xf32>
    %22 = vector.shape_cast %21 : vector<16x16x128xf32> to vector<256x128xf32>
    %23 = arith.truncf %22 : vector<256x128xf32> to vector<256x128xbf16>
    %24 = vector.extract_strided_slice %19 {offsets = [0, 1, 0], sizes = [16, 16, 128], strides = [1, 1, 1]} : vector<18x18x128xf32> to vector<16x16x128xf32>
    %25 = vector.shape_cast %24 : vector<16x16x128xf32> to vector<256x128xf32>
    %26 = arith.truncf %25 : vector<256x128xf32> to vector<256x128xbf16>
    %27 = vector.extract_strided_slice %19 {offsets = [0, 2, 0], sizes = [16, 16, 128], strides = [1, 1, 1]} : vector<18x18x128xf32> to vector<16x16x128xf32>
    %28 = vector.shape_cast %27 : vector<16x16x128xf32> to vector<256x128xf32>
    %29 = arith.truncf %28 : vector<256x128xf32> to vector<256x128xbf16>
    %30 = vector.extract_strided_slice %19 {offsets = [1, 0, 0], sizes = [16, 16, 128], strides = [1, 1, 1]} : vector<18x18x128xf32> to vector<16x16x128xf32>
    %31 = vector.shape_cast %30 : vector<16x16x128xf32> to vector<256x128xf32>
    %32 = arith.truncf %31 : vector<256x128xf32> to vector<256x128xbf16>
    %33 = vector.extract_strided_slice %19 {offsets = [1, 1, 0], sizes = [16, 16, 128], strides = [1, 1, 1]} : vector<18x18x128xf32> to vector<16x16x128xf32>
    %34 = vector.shape_cast %33 : vector<16x16x128xf32> to vector<256x128xf32>
    %35 = arith.truncf %34 : vector<256x128xf32> to vector<256x128xbf16>
    %36 = vector.extract_strided_slice %19 {offsets = [1, 2, 0], sizes = [16, 16, 128], strides = [1, 1, 1]} : vector<18x18x128xf32> to vector<16x16x128xf32>
    %37 = vector.shape_cast %36 : vector<16x16x128xf32> to vector<256x128xf32>
    %38 = arith.truncf %37 : vector<256x128xf32> to vector<256x128xbf16>
    %39 = vector.extract_strided_slice %19 {offsets = [2, 0, 0], sizes = [16, 16, 128], strides = [1, 1, 1]} : vector<18x18x128xf32> to vector<16x16x128xf32>
    %40 = vector.shape_cast %39 : vector<16x16x128xf32> to vector<256x128xf32>
    %41 = arith.truncf %40 : vector<256x128xf32> to vector<256x128xbf16>
    %42 = vector.extract_strided_slice %19 {offsets = [2, 1, 0], sizes = [16, 16, 128], strides = [1, 1, 1]} : vector<18x18x128xf32> to vector<16x16x128xf32>
    %43 = vector.shape_cast %42 : vector<16x16x128xf32> to vector<256x128xf32>
    %44 = arith.truncf %43 : vector<256x128xf32> to vector<256x128xbf16>
    %45 = vector.extract_strided_slice %19 {offsets = [2, 2, 0], sizes = [16, 16, 128], strides = [1, 1, 1]} : vector<18x18x128xf32> to vector<16x16x128xf32>
    %46 = vector.shape_cast %45 : vector<16x16x128xf32> to vector<256x128xf32>
    %47 = arith.truncf %46 : vector<256x128xf32> to vector<256x128xbf16>
    %48 = tpu.concatenate %23, %26, %29, %32, %35, %38, %41, %44, %47 in 1 : vector<256x128xbf16>, vector<256x128xbf16>, vector<256x128xbf16>, vector<256x128xbf16>, vector<256x128xbf16>, vector<256x128xbf16>, vector<256x128xbf16>, vector<256x128xbf16>, vector<256x128xbf16> -> vector<256x1152xbf16>
    %cst_27 = arith.constant dense<0.000000e+00> : vector<256x128xf32>
    %49 = tpu.matmul %48, %20, %cst_27 {dimension_numbers = #tpu.dot_dimension_numbers<[1], [0], [0], [1], [0, 0, 1, 1], [], []>} : vector<256x1152xbf16>, vector<1152x128xbf16>, vector<256x128xf32> -> vector<256x128xf32>
    %c0_28 = arith.constant 0 : index
    %c0_29 = arith.constant 0 : index
    %50 = vector.load %arg5[%c0_28, %c0_29] : memref<1x128xf32, #tpu.memory_space<vmem>>, vector<1x128xf32>
    %51 = vector.broadcast %50 : vector<1x128xf32> to vector<256x128xf32>
    %52 = arith.mulf %49, %51 : vector<256x128xf32>
    %c0_30 = arith.constant 0 : index
    %c0_31 = arith.constant 0 : index
    %53 = vector.load %arg6[%c0_30, %c0_31] : memref<1x128xf32, #tpu.memory_space<vmem>>, vector<1x128xf32>
    %54 = vector.broadcast %53 : vector<1x128xf32> to vector<256x128xf32>
    %55 = arith.addf %52, %54 : vector<256x128xf32>
    %cst_32 = arith.constant 0.000000e+00 : f32
    %56 = vector.broadcast %cst_32 : f32 to vector<256x128xf32>
    %57 = arith.maximumf %55, %56 : vector<256x128xf32>
    %58 = vector.shape_cast %57 : vector<256x128xf32> to vector<16x16x128xf32>
    %cst_33 = arith.constant 0.000000e+00 : f32
    %59 = vector.broadcast %cst_33 : f32 to vector<1x18x128xf32>
    %cst_34 = arith.constant 0.000000e+00 : f32
    %60 = vector.broadcast %cst_34 : f32 to vector<18x1x128xf32>
    %c0_35 = arith.constant 0 : index
    %c0_36 = arith.constant 0 : index
    %c0_37 = arith.constant 0 : index
    %61 = vector.load %arg11[%c0_35, %c0_36, %c0_37] : memref<18x18x128xf32, #tpu.memory_space<vmem>>, vector<1x18x128xf32>
    tpu.vector_store %arg11[%c0_35, %c0_36, %c0_37], %59 {strides = array<i32>} : memref<18x18x128xf32, #tpu.memory_space<vmem>>, vector<1x18x128xf32>,
    %c17_38 = arith.constant 17 : index
    %c0_39 = arith.constant 0 : index
    %c0_40 = arith.constant 0 : index
    %62 = vector.load %arg11[%c17_38, %c0_39, %c0_40] : memref<18x18x128xf32, #tpu.memory_space<vmem>>, vector<1x18x128xf32>
    tpu.vector_store %arg11[%c17_38, %c0_39, %c0_40], %59 {strides = array<i32>} : memref<18x18x128xf32, #tpu.memory_space<vmem>>, vector<1x18x128xf32>,
    %c0_41 = arith.constant 0 : index
    %c0_42 = arith.constant 0 : index
    %c0_43 = arith.constant 0 : index
    %63 = vector.load %arg11[%c0_41, %c0_42, %c0_43] : memref<18x18x128xf32, #tpu.memory_space<vmem>>, vector<18x1x128xf32>
    tpu.vector_store %arg11[%c0_41, %c0_42, %c0_43], %60 {strides = array<i32>} : memref<18x18x128xf32, #tpu.memory_space<vmem>>, vector<18x1x128xf32>,
    %c0_44 = arith.constant 0 : index
    %c17_45 = arith.constant 17 : index
    %c0_46 = arith.constant 0 : index
    %64 = vector.load %arg11[%c0_44, %c17_45, %c0_46] : memref<18x18x128xf32, #tpu.memory_space<vmem>>, vector<18x1x128xf32>
    tpu.vector_store %arg11[%c0_44, %c17_45, %c0_46], %60 {strides = array<i32>} : memref<18x18x128xf32, #tpu.memory_space<vmem>>, vector<18x1x128xf32>,
    %c1_47 = arith.constant 1 : index
    %c1_48 = arith.constant 1 : index
    %c0_49 = arith.constant 0 : index
    %65 = vector.load %arg11[%c1_47, %c1_48, %c0_49] : memref<18x18x128xf32, #tpu.memory_space<vmem>>, vector<16x16x128xf32>
    tpu.vector_store %arg11[%c1_47, %c1_48, %c0_49], %58 {strides = array<i32>} : memref<18x18x128xf32, #tpu.memory_space<vmem>>, vector<16x16x128xf32>,
    %c0_50 = arith.constant 0 : index
    %c0_51 = arith.constant 0 : index
    %c0_52 = arith.constant 0 : index
    %66 = vector.load %arg11[%c0_50, %c0_51, %c0_52] : memref<18x18x128xf32, #tpu.memory_space<vmem>>, vector<18x18x128xf32>
    %c0_53 = arith.constant 0 : index
    %c0_54 = arith.constant 0 : index
    %67 = vector.load %arg7[%c0_53, %c0_54] : memref<1152x128xbf16, #tpu.memory_space<vmem>>, vector<1152x128xbf16>
    %68 = vector.extract_strided_slice %66 {offsets = [0, 0, 0], sizes = [16, 16, 128], strides = [1, 1, 1]} : vector<18x18x128xf32> to vector<16x16x128xf32>
    %69 = vector.shape_cast %68 : vector<16x16x128xf32> to vector<256x128xf32>
    %70 = arith.truncf %69 : vector<256x128xf32> to vector<256x128xbf16>
    %71 = vector.extract_strided_slice %66 {offsets = [0, 1, 0], sizes = [16, 16, 128], strides = [1, 1, 1]} : vector<18x18x128xf32> to vector<16x16x128xf32>
    %72 = vector.shape_cast %71 : vector<16x16x128xf32> to vector<256x128xf32>
    %73 = arith.truncf %72 : vector<256x128xf32> to vector<256x128xbf16>
    %74 = vector.extract_strided_slice %66 {offsets = [0, 2, 0], sizes = [16, 16, 128], strides = [1, 1, 1]} : vector<18x18x128xf32> to vector<16x16x128xf32>
    %75 = vector.shape_cast %74 : vector<16x16x128xf32> to vector<256x128xf32>
    %76 = arith.truncf %75 : vector<256x128xf32> to vector<256x128xbf16>
    %77 = vector.extract_strided_slice %66 {offsets = [1, 0, 0], sizes = [16, 16, 128], strides = [1, 1, 1]} : vector<18x18x128xf32> to vector<16x16x128xf32>
    %78 = vector.shape_cast %77 : vector<16x16x128xf32> to vector<256x128xf32>
    %79 = arith.truncf %78 : vector<256x128xf32> to vector<256x128xbf16>
    %80 = vector.extract_strided_slice %66 {offsets = [1, 1, 0], sizes = [16, 16, 128], strides = [1, 1, 1]} : vector<18x18x128xf32> to vector<16x16x128xf32>
    %81 = vector.shape_cast %80 : vector<16x16x128xf32> to vector<256x128xf32>
    %82 = arith.truncf %81 : vector<256x128xf32> to vector<256x128xbf16>
    %83 = vector.extract_strided_slice %66 {offsets = [1, 2, 0], sizes = [16, 16, 128], strides = [1, 1, 1]} : vector<18x18x128xf32> to vector<16x16x128xf32>
    %84 = vector.shape_cast %83 : vector<16x16x128xf32> to vector<256x128xf32>
    %85 = arith.truncf %84 : vector<256x128xf32> to vector<256x128xbf16>
    %86 = vector.extract_strided_slice %66 {offsets = [2, 0, 0], sizes = [16, 16, 128], strides = [1, 1, 1]} : vector<18x18x128xf32> to vector<16x16x128xf32>
    %87 = vector.shape_cast %86 : vector<16x16x128xf32> to vector<256x128xf32>
    %88 = arith.truncf %87 : vector<256x128xf32> to vector<256x128xbf16>
    %89 = vector.extract_strided_slice %66 {offsets = [2, 1, 0], sizes = [16, 16, 128], strides = [1, 1, 1]} : vector<18x18x128xf32> to vector<16x16x128xf32>
    %90 = vector.shape_cast %89 : vector<16x16x128xf32> to vector<256x128xf32>
    %91 = arith.truncf %90 : vector<256x128xf32> to vector<256x128xbf16>
    %92 = vector.extract_strided_slice %66 {offsets = [2, 2, 0], sizes = [16, 16, 128], strides = [1, 1, 1]} : vector<18x18x128xf32> to vector<16x16x128xf32>
    %93 = vector.shape_cast %92 : vector<16x16x128xf32> to vector<256x128xf32>
    %94 = arith.truncf %93 : vector<256x128xf32> to vector<256x128xbf16>
    %95 = tpu.concatenate %70, %73, %76, %79, %82, %85, %88, %91, %94 in 1 : vector<256x128xbf16>, vector<256x128xbf16>, vector<256x128xbf16>, vector<256x128xbf16>, vector<256x128xbf16>, vector<256x128xbf16>, vector<256x128xbf16>, vector<256x128xbf16>, vector<256x128xbf16> -> vector<256x1152xbf16>
    %cst_55 = arith.constant dense<0.000000e+00> : vector<256x128xf32>
    %96 = tpu.matmul %95, %67, %cst_55 {dimension_numbers = #tpu.dot_dimension_numbers<[1], [0], [0], [1], [0, 0, 1, 1], [], []>} : vector<256x1152xbf16>, vector<1152x128xbf16>, vector<256x128xf32> -> vector<256x128xf32>
    %97 = vector.shape_cast %11 : vector<16x16x128xf32> to vector<256x128xf32>
    %98 = arith.truncf %97 : vector<256x128xf32> to vector<256x128xbf16>
    %c0_56 = arith.constant 0 : index
    %c0_57 = arith.constant 0 : index
    %99 = vector.load %arg8[%c0_56, %c0_57] : memref<128x128xbf16, #tpu.memory_space<vmem>>, vector<128x128xbf16>
    %cst_58 = arith.constant dense<0.000000e+00> : vector<256x128xf32>
    %100 = tpu.matmul %98, %99, %cst_58 {dimension_numbers = #tpu.dot_dimension_numbers<[1], [0], [0], [1], [0, 0, 1, 1], [], []>} : vector<256x128xbf16>, vector<128x128xbf16>, vector<256x128xf32> -> vector<256x128xf32>
    %101 = arith.addf %96, %100 : vector<256x128xf32>
    %102 = vector.shape_cast %101 : vector<256x128xf32> to vector<16x16x128xf32>
    %c0_59 = arith.constant 0 : index
    %c0_60 = arith.constant 0 : index
    %c0_61 = arith.constant 0 : index
    %c0_62 = arith.constant 0 : index
    %103 = vector.load %arg9[%c0_59, %c0_60, %c0_61, %c0_62] : memref<1x16x16x128xf32, #tpu.memory_space<vmem>>, vector<1x16x16x128xf32>
    %104 = vector.shape_cast %103 : vector<1x16x16x128xf32> to vector<16x16x128xf32>
    %105 = vector.shape_cast %102 : vector<16x16x128xf32> to vector<1x16x16x128xf32>
    tpu.vector_store %arg9[%c0_59, %c0_60, %c0_61, %c0_62], %105 {strides = array<i32>} : memref<1x16x16x128xf32, #tpu.memory_space<vmem>>, vector<1x16x16x128xf32>,
    return
  }
  func.func @transform_0(%arg0: i32) -> (i32, i32, i32, i32) {
    %c0_i32 = arith.constant 0 : i32
    %c0_i32_0 = arith.constant 0 : i32
    %c0_i32_1 = arith.constant 0 : i32
    %c0_i32_2 = arith.constant 0 : i32
    return %arg0, %c0_i32, %c0_i32_0, %c0_i32_1 : i32, i32, i32, i32
  }
  func.func @transform_1(%arg0: i32) -> (i32, i32) {
    %c0_i32 = arith.constant 0 : i32
    %c0_i32_0 = arith.constant 0 : i32
    %c0_i32_1 = arith.constant 0 : i32
    return %c0_i32, %c0_i32_0 : i32, i32
  }
  func.func @transform_2(%arg0: i32) -> (i32, i32) {
    %c0_i32 = arith.constant 0 : i32
    %c0_i32_0 = arith.constant 0 : i32
    %c0_i32_1 = arith.constant 0 : i32
    return %c0_i32, %c0_i32_0 : i32, i32
  }
  func.func @transform_3(%arg0: i32) -> (i32, i32) {
    %c0_i32 = arith.constant 0 : i32
    %c0_i32_0 = arith.constant 0 : i32
    %c0_i32_1 = arith.constant 0 : i32
    return %c0_i32, %c0_i32_0 : i32, i32
  }
  func.func @transform_4(%arg0: i32) -> (i32, i32) {
    %c0_i32 = arith.constant 0 : i32
    %c0_i32_0 = arith.constant 0 : i32
    %c0_i32_1 = arith.constant 0 : i32
    return %c0_i32, %c0_i32_0 : i32, i32
  }
  func.func @transform_5(%arg0: i32) -> (i32, i32) {
    %c0_i32 = arith.constant 0 : i32
    %c0_i32_0 = arith.constant 0 : i32
    %c0_i32_1 = arith.constant 0 : i32
    return %c0_i32, %c0_i32_0 : i32, i32
  }
  func.func @transform_6(%arg0: i32) -> (i32, i32) {
    %c0_i32 = arith.constant 0 : i32
    %c0_i32_0 = arith.constant 0 : i32
    %c0_i32_1 = arith.constant 0 : i32
    return %c0_i32, %c0_i32_0 : i32, i32
  }
  func.func @transform_7(%arg0: i32) -> (i32, i32) {
    %c0_i32 = arith.constant 0 : i32
    %c0_i32_0 = arith.constant 0 : i32
    %c0_i32_1 = arith.constant 0 : i32
    return %c0_i32, %c0_i32_0 : i32, i32
  }
  func.func @transform_8(%arg0: i32) -> (i32, i32, i32, i32) {
    %c0_i32 = arith.constant 0 : i32
    %c0_i32_0 = arith.constant 0 : i32
    %c0_i32_1 = arith.constant 0 : i32
    %c0_i32_2 = arith.constant 0 : i32
    return %arg0, %c0_i32, %c0_i32_0, %c0_i32_1 : i32, i32, i32, i32
  }
}

</mosaic_0001>

<llo_original>
// kernel: tpu_custom_call.1
$region0: #{tpu_custom_call.1}
  #allocation0 [shape = 'u32[]', space=smem, size = 0x4, offset = 0x4, fixed_abs, tag = 'smem constant byte address 0x4 - core index']
  #allocation1 [shape = 'u32[144,128]{1,0:T(1,128)}', space=vmem, size = 0x12000, scoped, tag = 'internal scratch']
  #allocation2 [shape = 'f32[18,18,128]{2,1,0:T(8,128)}', space=vmem, size = 0x36000, scoped, tag = 'scratch operand']
  #allocation3 [shape = 'f32[18,18,128]{2,1,0:T(8,128)}', space=vmem, size = 0x36000, scoped, tag = 'scratch operand']
  %s0 = inlined_call_operand.hbm [shape: f32[2,16,16,128], index: 0, kind: input, shape index: {}]
  %s1 = inlined_call_operand.vmem [shape: f32[1,128], index: 1, kind: input, shape index: {}]
  %s2 = inlined_call_operand.vmem [shape: f32[1,128], index: 2, kind: input, shape index: {}]
  %s3 = inlined_call_operand.hbm [shape: bf16[1152,128], index: 3, kind: input, shape index: {}]
  %s4 = inlined_call_operand.vmem [shape: f32[1,128], index: 4, kind: input, shape index: {}]
  %s5 = inlined_call_operand.vmem [shape: f32[1,128], index: 5, kind: input, shape index: {}]
  %s6 = inlined_call_operand.hbm [shape: bf16[1152,128], index: 6, kind: input, shape index: {}]
  %s7 = inlined_call_operand.hbm [shape: bf16[128,128], index: 7, kind: input, shape index: {}]
  %s8 = inlined_call_operand.hbm [shape: f32[2,16,16,128], index: 8, kind: output, shape index: {}]
  %s9 = sld [smem:[#allocation0]]
  $region81: #{tpu_custom_call.1} parent=0
    _
  %s11 = ssub.s32 1, %s9
  %s12 = scalar_select 0, %s11, %s9
  $region1: #{tpu_custom_call.1} parent=0
    #allocation4 [shape = 'u8[262144]{0}', space=vmem, size = 0x40000, scoped, tag = 'input window, operand 0']
    #allocation5 [shape = 's32[2]{0}', space=sflag, size = 0x8, scoped, tag = 'scoped memory for tpu_custom_call.1']
    #allocation6 [shape = 's32[2]{0}', space=sflag, size = 0x8, scoped, tag = 'scoped memory for tpu_custom_call.1']
    #allocation7 [shape = 'u8[294912]{0}', space=vmem, size = 0x48000, scoped, tag = 'input window, operand 3, single buffered']
    #allocation8 [shape = 's32[1]{0}', space=sflag, size = 0x4, scoped, tag = 'scoped memory for tpu_custom_call.1']
    #allocation9 [shape = 'u8[294912]{0}', space=vmem, size = 0x48000, scoped, tag = 'input window, operand 6, single buffered']
    #allocation10 [shape = 'u8[32768]{0}', space=vmem, size = 0x8000, scoped, tag = 'input window, operand 7, single buffered']
    #allocation11 [shape = 's32[1]{0}', space=sflag, size = 0x4, scoped, tag = 'scoped memory for tpu_custom_call.1']
    #allocation12 [shape = 'u8[262144]{0}', space=vmem, size = 0x40000, scoped, tag = 'output window, operand 0']
    %13 = vsyncpa [#allocation5], 0
    %s14 = scalar_lea.sflag [#allocation5], 1
    %15 = vsyncpa %s14, 0
    %16 = vsyncpa [#allocation8], 0
    %17 = vsyncpa [#allocation11], 0
    %18 = vsyncpa [#allocation6], 0
    %s19 = scalar_lea.sflag [#allocation6], 1
    %20 = vsyncpa %s19, 0
    loop: start=0, step=1, limit=4
    $region2: #{tpu_custom_call.1} parent=1 // loop_pre_header
      _
    $region3: #{tpu_custom_call.1} parent=1 // loop_header
      %s22 = sphi 0, %s26
      %p23 = scmp.ge.s32.totalorder %s22, 4
      %s32 = sphi 0, %s34
      %s35 = sphi 0, %s32
      %s36 = sphi 0, %s35
      %s52 = sphi 0, %s36
      %s56 = sphi 0, %s56
      %s58 = sphi 0, %s56
      %s59 = sphi 0, %s58
      %s73 = sphi 0, %s59
      %s77 = sphi 0, %s77
      %s79 = sphi 0, %s77
      %s80 = sphi 0, %s79
      %s94 = sphi 0, %s80
      %s98 = sphi 0, %s98
      %s100 = sphi 0, %s98
      %s101 = sphi 0, %s100
      %s115 = sphi 0, %s101
      %s119 = sphi 0, %s119
      %s121 = sphi 0, %s119
      %s122 = sphi 0, %s121
      %s136 = sphi 0, %s122
      %s140 = sphi 0, %s140
      %s142 = sphi 0, %s140
      %s143 = sphi 0, %s142
      %s157 = sphi 0, %s143
      %s161 = sphi 0, %s161
      %s163 = sphi 0, %s161
      %s164 = sphi 0, %s163
      %s178 = sphi 0, %s164
      %s182 = sphi 0, %s182
      %s184 = sphi 0, %s182
      %s185 = sphi 0, %s184
      %s199 = sphi 0, %s185
      %s205 = sphi 0, %s207
      %s208 = sphi 0, %s205
      %s209 = sphi 0, %s208
      %s225 = sphi 0, %s209
    $region4: #{tpu_custom_call.1} parent=1 // loop_header_branch
      %25 = sbr.rel (%p23) target = $region8
    $region5: #{tpu_custom_call.1} parent=1 // loop_body
      %s27 = ssub.s32 %s22, 1
      %s28 = ssub.s32 %s22, 2
      %s29 = sadd.s32 %s22, 1
      %s30 = ssub.s32 %s22, %s29
      %p31 = scmp.eq.s32.totalorder %s30, 0
      %s33 = sadd.s32 %s32, 1
      %s34 = scalar_select %p31, %s32, %s33
      %p37 = pneg %p31
      %p38 = scmp.eq.s32.totalorder %s22, 1
      %p39 = por %p37, %p38
      %p40 = scmp.ne.s32.totalorder %s32, %s35
      %p41 = scmp.eq.s32.totalorder %s22, 0
      %p42 = por %p40, %p41
      %p43 = scmp.ne.s32.totalorder %s32, %s35
      %p44 = scmp.eq.s32.totalorder %s27, 1
      %p45 = por %p43, %p44
      %p46 = scmp.ne.s32.totalorder %s35, %s36
      %p47 = scmp.eq.s32.totalorder %s27, 0
      %p48 = por %p46, %p47
      %p49 = scmp.ne.s32.totalorder %s35, %s36
      %p50 = scmp.eq.s32.totalorder %s28, 1
      %p51 = por %p49, %p50
      %p53 = scmp.ne.s32.totalorder %s36, %s52
      %p54 = scmp.eq.s32.totalorder %s28, 0
      %p55 = por %p53, %p54
      %s57 = sadd.s32 %s56, 1
      %p60 = scmp.eq.s32.totalorder %s22, 1
      %p61 = scmp.ne.s32.totalorder %s56, %s58
      %p62 = scmp.eq.s32.totalorder %s22, 0
      %p63 = por %p61, %p62
      %p64 = scmp.ne.s32.totalorder %s56, %s58
      %p65 = scmp.eq.s32.totalorder %s27, 1
      %p66 = por %p64, %p65
      %p67 = scmp.ne.s32.totalorder %s58, %s59
      %p68 = scmp.eq.s32.totalorder %s27, 0
      %p69 = por %p67, %p68
      %p70 = scmp.ne.s32.totalorder %s58, %s59
      %p71 = scmp.eq.s32.totalorder %s28, 1
      %p72 = por %p70, %p71
      %p74 = scmp.ne.s32.totalorder %s59, %s73
      %p75 = scmp.eq.s32.totalorder %s28, 0
      %p76 = por %p74, %p75
      %s78 = sadd.s32 %s77, 1
      %p81 = scmp.eq.s32.totalorder %s22, 1
      %p82 = scmp.ne.s32.totalorder %s77, %s79
      %p83 = scmp.eq.s32.totalorder %s22, 0
      %p84 = por %p82, %p83
      %p85 = scmp.ne.s32.totalorder %s77, %s79
      %p86 = scmp.eq.s32.totalorder %s27, 1
      %p87 = por %p85, %p86
      %p88 = scmp.ne.s32.totalorder %s79, %s80
      %p89 = scmp.eq.s32.totalorder %s27, 0
      %p90 = por %p88, %p89
      %p91 = scmp.ne.s32.totalorder %s79, %s80
      %p92 = scmp.eq.s32.totalorder %s28, 1
      %p93 = por %p91, %p92
      %p95 = scmp.ne.s32.totalorder %s80, %s94
      %p96 = scmp.eq.s32.totalorder %s28, 0
      %p97 = por %p95, %p96
      %s99 = sadd.s32 %s98, 1
      %p102 = scmp.eq.s32.totalorder %s22, 1
      %p103 = scmp.ne.s32.totalorder %s98, %s100
      %p104 = scmp.eq.s32.totalorder %s22, 0
      %p105 = por %p103, %p104
      %p106 = scmp.ne.s32.totalorder %s98, %s100
      %p107 = scmp.eq.s32.totalorder %s27, 1
      %p108 = por %p106, %p107
      %p109 = scmp.ne.s32.totalorder %s100, %s101
      %p110 = scmp.eq.s32.totalorder %s27, 0
      %p111 = por %p109, %p110
      %p112 = scmp.ne.s32.totalorder %s100, %s101
      %p113 = scmp.eq.s32.totalorder %s28, 1
      %p114 = por %p112, %p113
      %p116 = scmp.ne.s32.totalorder %s101, %s115
      %p117 = scmp.eq.s32.totalorder %s28, 0
      %p118 = por %p116, %p117
      %s120 = sadd.s32 %s119, 1
      %p123 = scmp.eq.s32.totalorder %s22, 1
      %p124 = scmp.ne.s32.totalorder %s119, %s121
      %p125 = scmp.eq.s32.totalorder %s22, 0
      %p126 = por %p124, %p125
      %p127 = scmp.ne.s32.totalorder %s119, %s121
      %p128 = scmp.eq.s32.totalorder %s27, 1
      %p129 = por %p127, %p128
      %p130 = scmp.ne.s32.totalorder %s121, %s122
      %p131 = scmp.eq.s32.totalorder %s27, 0
      %p132 = por %p130, %p131
      %p133 = scmp.ne.s32.totalorder %s121, %s122
      %p134 = scmp.eq.s32.totalorder %s28, 1
      %p135 = por %p133, %p134
      %p137 = scmp.ne.s32.totalorder %s122, %s136
      %p138 = scmp.eq.s32.totalorder %s28, 0
      %p139 = por %p137, %p138
      %s141 = sadd.s32 %s140, 1
      %p144 = scmp.eq.s32.totalorder %s22, 1
      %p145 = scmp.ne.s32.totalorder %s140, %s142
      %p146 = scmp.eq.s32.totalorder %s22, 0
      %p147 = por %p145, %p146
      %p148 = scmp.ne.s32.totalorder %s140, %s142
      %p149 = scmp.eq.s32.totalorder %s27, 1
      %p150 = por %p148, %p149
      %p151 = scmp.ne.s32.totalorder %s142, %s143
      %p152 = scmp.eq.s32.totalorder %s27, 0
      %p153 = por %p151, %p152
      %p154 = scmp.ne.s32.totalorder %s142, %s143
      %p155 = scmp.eq.s32.totalorder %s28, 1
      %p156 = por %p154, %p155
      %p158 = scmp.ne.s32.totalorder %s143, %s157
      %p159 = scmp.eq.s32.totalorder %s28, 0
      %p160 = por %p158, %p159
      %s162 = sadd.s32 %s161, 1
      %p165 = scmp.eq.s32.totalorder %s22, 1
      %p166 = scmp.ne.s32.totalorder %s161, %s163
      %p167 = scmp.eq.s32.totalorder %s22, 0
      %p168 = por %p166, %p167
      %p169 = scmp.ne.s32.totalorder %s161, %s163
      %p170 = scmp.eq.s32.totalorder %s27, 1
      %p171 = por %p169, %p170
      %p172 = scmp.ne.s32.totalorder %s163, %s164
      %p173 = scmp.eq.s32.totalorder %s27, 0
      %p174 = por %p172, %p173
      %p175 = scmp.ne.s32.totalorder %s163, %s164
      %p176 = scmp.eq.s32.totalorder %s28, 1
      %p177 = por %p175, %p176
      %p179 = scmp.ne.s32.totalorder %s164, %s178
      %p180 = scmp.eq.s32.totalorder %s28, 0
      %p181 = por %p179, %p180
      %s183 = sadd.s32 %s182, 1
      %p186 = scmp.eq.s32.totalorder %s22, 1
      %p187 = scmp.ne.s32.totalorder %s182, %s184
      %p188 = scmp.eq.s32.totalorder %s22, 0
      %p189 = por %p187, %p188
      %p190 = scmp.ne.s32.totalorder %s182, %s184
      %p191 = scmp.eq.s32.totalorder %s27, 1
      %p192 = por %p190, %p191
      %p193 = scmp.ne.s32.totalorder %s184, %s185
      %p194 = scmp.eq.s32.totalorder %s27, 0
      %p195 = por %p193, %p194
      %p196 = scmp.ne.s32.totalorder %s184, %s185
      %p197 = scmp.eq.s32.totalorder %s28, 1
      %p198 = por %p196, %p197
      %p200 = scmp.ne.s32.totalorder %s185, %s199
      %p201 = scmp.eq.s32.totalorder %s28, 0
      %p202 = por %p200, %p201
      %s203 = ssub.s32 %s22, %s29
      %p204 = scmp.eq.s32.totalorder %s203, 0
      %s206 = sadd.s32 %s205, 1
      %s207 = scalar_select %p204, %s205, %s206
      %p210 = pneg %p204
      %p211 = scmp.eq.s32.totalorder %s22, 1
      %p212 = por %p210, %p211
      %p213 = scmp.ne.s32.totalorder %s205, %s208
      %p214 = scmp.eq.s32.totalorder %s22, 0
      %p215 = por %p213, %p214
      %p216 = scmp.ne.s32.totalorder %s205, %s208
      %p217 = scmp.eq.s32.totalorder %s27, 1
      %p218 = por %p216, %p217
      %p219 = scmp.ne.s32.totalorder %s208, %s209
      %p220 = scmp.eq.s32.totalorder %s27, 0
      %p221 = por %p219, %p220
      %p222 = scmp.ne.s32.totalorder %s208, %s209
      %p223 = scmp.eq.s32.totalorder %s28, 1
      %p224 = por %p222, %p223
      %p226 = scmp.ne.s32.totalorder %s209, %s225
      %p227 = scmp.eq.s32.totalorder %s28, 0
      %p228 = por %p226, %p227
      %p229 = scmp.le.s32.totalorder 1, %s22
      %p230 = scmp.lt.s32.totalorder %s22, 3
      %p231 = pnand %p229, %p230
      %p232 = pneg %p231
      // Predicated region
      $region9: #{tpu_custom_call.1} parent=5 // pred_check
        _
      $region10: #{tpu_custom_call.1} parent=5 // pred_check_branch
        %234 = sbr.rel (%p231) target = $region12
      $region11: #{tpu_custom_call.1} parent=5 // pred_region
        %s235 = ssub.s32 %s22, 1
        // Predicated region
        $region13: #{tpu_custom_call.1} parent=11 // pred_check
          %p236 = pneg %p69
        $region14: #{tpu_custom_call.1} parent=11 // pred_check_branch
          %238 = sbr.rel (%p236) target = $region16
        $region15: #{tpu_custom_call.1} parent=11 // pred_region
          _
        $region16: #{tpu_custom_call.1} parent=11 // pred_fallthru
          _
        // Predicated region
        $region17: #{tpu_custom_call.1} parent=11 // pred_check
          %p239 = pneg %p90
        $region18: #{tpu_custom_call.1} parent=11 // pred_check_branch
          %241 = sbr.rel (%p239) target = $region20
        $region19: #{tpu_custom_call.1} parent=11 // pred_region
          _
        $region20: #{tpu_custom_call.1} parent=11 // pred_fallthru
          _
        // Predicated region
        $region21: #{tpu_custom_call.1} parent=11 // pred_check
          %p242 = pneg %p111
        $region22: #{tpu_custom_call.1} parent=11 // pred_check_branch
          %244 = sbr.rel (%p242) target = $region24
        $region23: #{tpu_custom_call.1} parent=11 // pred_region
          %s246 = ssub.s32 9216, 9216
          %247 = vsyncadd [#allocation8], %s246
          %s248 = sshll.u32 [#allocation7], 4
          %s249 = int_to_ptr.vmem [resolvable:$true] %s248
          %254 = dma.hbm_to_vmem [thread:$0]  %s3, 9216, %s249, [#allocation8], 64, 64, 4
        $region24: #{tpu_custom_call.1} parent=11 // pred_fallthru
          _
        // Predicated region
        $region25: #{tpu_custom_call.1} parent=11 // pred_check
          %p255 = pneg %p132
        $region26: #{tpu_custom_call.1} parent=11 // pred_check_branch
          %257 = sbr.rel (%p255) target = $region28
        $region27: #{tpu_custom_call.1} parent=11 // pred_region
          _
        $region28: #{tpu_custom_call.1} parent=11 // pred_fallthru
          _
        // Predicated region
        $region29: #{tpu_custom_call.1} parent=11 // pred_check
          %p258 = pneg %p153
        $region30: #{tpu_custom_call.1} parent=11 // pred_check_branch
          %260 = sbr.rel (%p258) target = $region32
        $region31: #{tpu_custom_call.1} parent=11 // pred_region
          _
        $region32: #{tpu_custom_call.1} parent=11 // pred_fallthru
          _
        // Predicated region
        $region33: #{tpu_custom_call.1} parent=11 // pred_check
          %p261 = pneg %p174
        $region34: #{tpu_custom_call.1} parent=11 // pred_check_branch
          %263 = sbr.rel (%p261) target = $region36
        $region35: #{tpu_custom_call.1} parent=11 // pred_region
          %s265 = ssub.s32 9216, 9216
          %266 = vsyncadd [#allocation8], %s265
          %s267 = sshll.u32 [#allocation9], 4
          %s268 = int_to_ptr.vmem [resolvable:$true] %s267
          %273 = dma.hbm_to_vmem [thread:$0]  %s6, 9216, %s268, [#allocation8], 64, 64, 4
        $region36: #{tpu_custom_call.1} parent=11 // pred_fallthru
          _
        // Predicated region
        $region37: #{tpu_custom_call.1} parent=11 // pred_check
          %p274 = pneg %p195
        $region38: #{tpu_custom_call.1} parent=11 // pred_check_branch
          %276 = sbr.rel (%p274) target = $region40
        $region39: #{tpu_custom_call.1} parent=11 // pred_region
          %s278 = ssub.s32 1024, 1024
          %279 = vsyncadd [#allocation11], %s278
          %s280 = sshll.u32 [#allocation10], 4
          %s281 = int_to_ptr.vmem [resolvable:$true] %s280
          %286 = dma.hbm_to_vmem [thread:$0]  %s7, 1024, %s281, [#allocation11], 64, 64, 4
        $region40: #{tpu_custom_call.1} parent=11 // pred_fallthru
          _
      $region12: #{tpu_custom_call.1} parent=5 // pred_fallthru
        _
      %p287 = scmp.lt.s32.totalorder %s22, 2
      // Predicated region
      $region41: #{tpu_custom_call.1} parent=5 // pred_check
        %p288 = pneg %p287
      $region42: #{tpu_custom_call.1} parent=5 // pred_check_branch
        %290 = sbr.rel (%p288) target = $region44
      $region43: #{tpu_custom_call.1} parent=5 // pred_region
        // Predicated region
        $region45: #{tpu_custom_call.1} parent=43 // pred_check
          %p291 = pneg %p42
        $region46: #{tpu_custom_call.1} parent=43 // pred_check_branch
          %293 = sbr.rel (%p291) target = $region48
        $region47: #{tpu_custom_call.1} parent=43 // pred_region
          %s294 = sand.u32 %s32, 1
          %s295 = scalar_lea.sflag [#allocation5], %s294
          %s296 = sand.u32 %s32, 1
          %s297 = smul.addr %s296, 256
          %s298 = scalar_lea.vmem [#allocation4], %s297
          %s300 = ssub.s32 4096, 4096
          %301 = vsyncadd %s295, %s300
          %s302 = smul.addr %s22, 32
          %s303 = smul.addr %s302, 128
          %s304 = scalar_lea.hbm %s0, %s303
          %s305 = sshll.u32 %s298, 4
          %s306 = int_to_ptr.vmem [resolvable:$true] %s305
          %311 = dma.hbm_to_vmem [thread:$0]  %s304, 4096, %s306, %s295, 128, 128, 8
        $region48: #{tpu_custom_call.1} parent=43 // pred_fallthru
          _
      $region44: #{tpu_custom_call.1} parent=5 // pred_fallthru
        _
      %p312 = scmp.le.s32.totalorder 1, %s22
      %p313 = scmp.lt.s32.totalorder %s22, 3
      %p314 = pnand %p312, %p313
      %p315 = pneg %p314
      // Predicated region
      $region49: #{tpu_custom_call.1} parent=5 // pred_check
        _
      $region50: #{tpu_custom_call.1} parent=5 // pred_check_branch
        %317 = sbr.rel (%p314) target = $region52
      $region51: #{tpu_custom_call.1} parent=5 // pred_region
        %s318 = ssub.s32 %s22, 1
        %s319 = sand.u32 %s35, 1
        %s320 = scalar_lea.sflag [#allocation5], %s319
        %s321 = sand.u32 %s35, 1
        %s322 = smul.addr %s321, 256
        %s323 = scalar_lea.vmem [#allocation4], %s322
        // Predicated region
        $region53: #{tpu_custom_call.1} parent=51 // pred_check
          %p324 = pneg %p48
        $region54: #{tpu_custom_call.1} parent=51 // pred_check_branch
          %326 = sbr.rel (%p324) target = $region56
        $region55: #{tpu_custom_call.1} parent=51 // pred_region
          %327 = dma.done %s320, 4096
        $region56: #{tpu_custom_call.1} parent=51 // pred_fallthru
          _
        // Predicated region
        $region57: #{tpu_custom_call.1} parent=51 // pred_check
          %p328 = pneg %p111
        $region58: #{tpu_custom_call.1} parent=51 // pred_check_branch
          %330 = sbr.rel (%p328) target = $region60
        $region59: #{tpu_custom_call.1} parent=51 // pred_region
          %331 = dma.done [#allocation8], 9216
        $region60: #{tpu_custom_call.1} parent=51 // pred_fallthru
          _
        // Predicated region
        $region61: #{tpu_custom_call.1} parent=51 // pred_check
          %p332 = pneg %p174
        $region62: #{tpu_custom_call.1} parent=51 // pred_check_branch
          %334 = sbr.rel (%p332) target = $region64
        $region63: #{tpu_custom_call.1} parent=51 // pred_region
          %335 = dma.done [#allocation8], 9216
        $region64: #{tpu_custom_call.1} parent=51 // pred_fallthru
          _
        // Predicated region
        $region65: #{tpu_custom_call.1} parent=51 // pred_check
          %p336 = pneg %p195
        $region66: #{tpu_custom_call.1} parent=51 // pred_check_branch
          %338 = sbr.rel (%p336) target = $region68
        $region67: #{tpu_custom_call.1} parent=51 // pred_region
          %339 = dma.done [#allocation11], 1024
        $region68: #{tpu_custom_call.1} parent=51 // pred_fallthru
          _
        %s340 = sand.u32 %s35, 1
        %s341 = scalar_lea.sflag [#allocation5], %s340
        %s342 = sand.u32 %s35, 1
        %s343 = smul.addr %s342, 256
        %s344 = scalar_lea.vmem [#allocation4], %s343
        %p345 = pneg %p48
        %p346 = pneg %p45
        %p347 = pneg %p69
        %p348 = pneg %p66
        %p349 = pneg %p90
        %p350 = pneg %p87
        %p351 = pneg %p111
        %p352 = pneg %p108
        %p353 = pneg %p132
        %p354 = pneg %p129
        %p355 = pneg %p153
        %p356 = pneg %p150
        %p357 = pneg %p174
        %p358 = pneg %p171
        %p359 = pneg %p195
        %p360 = pneg %p192
        %p361 = pneg %p221
        %p362 = pneg %p218
        %s363 = sand.u32 %s208, 1
        %s364 = scalar_lea.sflag [#allocation6], %s363
        %s365 = sand.u32 %s208, 1
        %s366 = smul.addr %s365, 256
        %s367 = scalar_lea.vmem [#allocation12], %s366
        %v369 = vld [vmem:[%s323] sm:$0xff]
        %v370 = vld [vmem:[%s323 + $0x8] sm:$0xff]
        %v371 = vld [vmem:[%s323 + $0x10] sm:$0xff]
        %v372 = vld [vmem:[%s323 + $0x18] sm:$0xff]
        %v373 = vld [vmem:[%s323 + $0x20] sm:$0xff]
        %v374 = vld [vmem:[%s323 + $0x28] sm:$0xff]
        %v375 = vld [vmem:[%s323 + $0x30] sm:$0xff]
        %v376 = vld [vmem:[%s323 + $0x38] sm:$0xff]
        %v377 = vld [vmem:[%s323 + $0x40] sm:$0xff]
        %v378 = vld [vmem:[%s323 + $0x48] sm:$0xff]
        %v379 = vld [vmem:[%s323 + $0x50] sm:$0xff]
        %v380 = vld [vmem:[%s323 + $0x58] sm:$0xff]
        %v381 = vld [vmem:[%s323 + $0x60] sm:$0xff]
        %v382 = vld [vmem:[%s323 + $0x68] sm:$0xff]
        %v383 = vld [vmem:[%s323 + $0x70] sm:$0xff]
        %v384 = vld [vmem:[%s323 + $0x78] sm:$0xff]
        %v385 = vld [vmem:[%s323 + $0x80] sm:$0xff]
        %v386 = vld [vmem:[%s323 + $0x88] sm:$0xff]
        %v387 = vld [vmem:[%s323 + $0x90] sm:$0xff]
        %v388 = vld [vmem:[%s323 + $0x98] sm:$0xff]
        %v389 = vld [vmem:[%s323 + $0xa0] sm:$0xff]
        %v390 = vld [vmem:[%s323 + $0xa8] sm:$0xff]
        %v391 = vld [vmem:[%s323 + $0xb0] sm:$0xff]
        %v392 = vld [vmem:[%s323 + $0xb8] sm:$0xff]
        %v393 = vld [vmem:[%s323 + $0xc0] sm:$0xff]
        %v394 = vld [vmem:[%s323 + $0xc8] sm:$0xff]
        %v395 = vld [vmem:[%s323 + $0xd0] sm:$0xff]
        %v396 = vld [vmem:[%s323 + $0xd8] sm:$0xff]
        %v397 = vld [vmem:[%s323 + $0xe0] sm:$0xff]
        %v398 = vld [vmem:[%s323 + $0xe8] sm:$0xff]
        %v399 = vld [vmem:[%s323 + $0xf0] sm:$0xff]
        %v400 = vld [vmem:[%s323 + $0xf8] sm:$0xff]
        %v401 = vld [vmem:[%s1] sm:$0x1]
        %v403 = vlaneseq
        %v404 = vshrl.u32 %v403, 7
        %v405 = vsub.s32 0, %v404
        %v406 = vrot.slane %v401, %v405
        %v408 = vmul.f32 %v369, %v406
        %v409 = vmul.f32 %v370, %v406
        %v410 = vmul.f32 %v371, %v406
        %v411 = vmul.f32 %v372, %v406
        %v412 = vmul.f32 %v373, %v406
        %v413 = vmul.f32 %v374, %v406
        %v414 = vmul.f32 %v375, %v406
        %v415 = vmul.f32 %v376, %v406
        %v416 = vmul.f32 %v377, %v406
        %v417 = vmul.f32 %v378, %v406
        %v418 = vmul.f32 %v379, %v406
        %v419 = vmul.f32 %v380, %v406
        %v420 = vmul.f32 %v381, %v406
        %v421 = vmul.f32 %v382, %v406
        %v422 = vmul.f32 %v383, %v406
        %v423 = vmul.f32 %v384, %v406
        %v424 = vmul.f32 %v385, %v406
        %v425 = vmul.f32 %v386, %v406
        %v426 = vmul.f32 %v387, %v406
        %v427 = vmul.f32 %v388, %v406
        %v428 = vmul.f32 %v389, %v406
        %v429 = vmul.f32 %v390, %v406
        %v430 = vmul.f32 %v391, %v406
        %v431 = vmul.f32 %v392, %v406
        %v432 = vmul.f32 %v393, %v406
        %v433 = vmul.f32 %v394, %v406
        %v434 = vmul.f32 %v395, %v406
        %v435 = vmul.f32 %v396, %v406
        %v436 = vmul.f32 %v397, %v406
        %v437 = vmul.f32 %v398, %v406
        %v438 = vmul.f32 %v399, %v406
        %v439 = vmul.f32 %v400, %v406
        %v440 = vld [vmem:[%s2] sm:$0x1]
        %v442 = vlaneseq
        %v443 = vshrl.u32 %v442, 7
        %v444 = vsub.s32 0, %v443
        %v445 = vrot.slane %v440, %v444
        %v447 = vadd.f32 %v408, %v445
        %v448 = vadd.f32 %v409, %v445
        %v449 = vadd.f32 %v410, %v445
        %v450 = vadd.f32 %v411, %v445
        %v451 = vadd.f32 %v412, %v445
        %v452 = vadd.f32 %v413, %v445
        %v453 = vadd.f32 %v414, %v445
        %v454 = vadd.f32 %v415, %v445
        %v455 = vadd.f32 %v416, %v445
        %v456 = vadd.f32 %v417, %v445
        %v457 = vadd.f32 %v418, %v445
        %v458 = vadd.f32 %v419, %v445
        %v459 = vadd.f32 %v420, %v445
        %v460 = vadd.f32 %v421, %v445
        %v461 = vadd.f32 %v422, %v445
        %v462 = vadd.f32 %v423, %v445
        %v463 = vadd.f32 %v424, %v445
        %v464 = vadd.f32 %v425, %v445
        %v465 = vadd.f32 %v426, %v445
        %v466 = vadd.f32 %v427, %v445
        %v467 = vadd.f32 %v428, %v445
        %v468 = vadd.f32 %v429, %v445
        %v469 = vadd.f32 %v430, %v445
        %v470 = vadd.f32 %v431, %v445
        %v471 = vadd.f32 %v432, %v445
        %v472 = vadd.f32 %v433, %v445
        %v473 = vadd.f32 %v434, %v445
        %v474 = vadd.f32 %v435, %v445
        %v475 = vadd.f32 %v436, %v445
        %v476 = vadd.f32 %v437, %v445
        %v477 = vadd.f32 %v438, %v445
        %v478 = vadd.f32 %v439, %v445
        %v479 = vmax.f32 %v447, 0.0
        %v480 = vmax.f32 %v448, 0.0
        %v481 = vmax.f32 %v449, 0.0
        %v482 = vmax.f32 %v450, 0.0
        %v483 = vmax.f32 %v451, 0.0
        %v484 = vmax.f32 %v452, 0.0
        %v485 = vmax.f32 %v453, 0.0
        %v486 = vmax.f32 %v454, 0.0
        %v487 = vmax.f32 %v455, 0.0
        %v488 = vmax.f32 %v456, 0.0
        %v489 = vmax.f32 %v457, 0.0
        %v490 = vmax.f32 %v458, 0.0
        %v491 = vmax.f32 %v459, 0.0
        %v492 = vmax.f32 %v460, 0.0
        %v493 = vmax.f32 %v461, 0.0
        %v494 = vmax.f32 %v462, 0.0
        %v495 = vmax.f32 %v463, 0.0
        %v496 = vmax.f32 %v464, 0.0
        %v497 = vmax.f32 %v465, 0.0
        %v498 = vmax.f32 %v466, 0.0
        %v499 = vmax.f32 %v467, 0.0
        %v500 = vmax.f32 %v468, 0.0
        %v501 = vmax.f32 %v469, 0.0
        %v502 = vmax.f32 %v470, 0.0
        %v503 = vmax.f32 %v471, 0.0
        %v504 = vmax.f32 %v472, 0.0
        %v505 = vmax.f32 %v473, 0.0
        %v506 = vmax.f32 %v474, 0.0
        %v507 = vmax.f32 %v475, 0.0
        %v508 = vmax.f32 %v476, 0.0
        %v509 = vmax.f32 %v477, 0.0
        %v510 = vmax.f32 %v478, 0.0
        %511 = vst [vmem:[#allocation2] sm:$0xff] 0.0
        %512 = vst [vmem:[#allocation2 + $0x8] sm:$0xff] 0.0
        %513 = vst [vmem:[#allocation2 + $0x10] sm:$0x3] 0.0
        %s514 = scalar_lea.vmem [#allocation2], 408
        %515 = vst [vmem:[%s514] sm:$0xff] 0.0
        %516 = vst [vmem:[%s514 + $0x8] sm:$0xff] 0.0
        %517 = vst [vmem:[%s514 + $0x10] sm:$0x3] 0.0
        %518 = vst [vmem:[#allocation2] sm:$0x1] 0.0
        %519 = vst [vmem:[#allocation2 + $0x18] sm:$0x1] 0.0
        %520 = vst [vmem:[#allocation2 + $0x30] sm:$0x1] 0.0
        %521 = vst [vmem:[#allocation2 + $0x48] sm:$0x1] 0.0
        %522 = vst [vmem:[#allocation2 + $0x60] sm:$0x1] 0.0
        %523 = vst [vmem:[#allocation2 + $0x78] sm:$0x1] 0.0
        %524 = vst [vmem:[#allocation2 + $0x90] sm:$0x1] 0.0
        %525 = vst [vmem:[#allocation2 + $0xa8] sm:$0x1] 0.0
        %526 = vst [vmem:[#allocation2 + $0xc0] sm:$0x1] 0.0
        %527 = vst [vmem:[#allocation2 + $0xd8] sm:$0x1] 0.0
        %528 = vst [vmem:[#allocation2 + $0xf0] sm:$0x1] 0.0
        %529 = vst [vmem:[#allocation2 + $0x108] sm:$0x1] 0.0
        %530 = vst [vmem:[#allocation2 + $0x120] sm:$0x1] 0.0
        %531 = vst [vmem:[#allocation2 + $0x138] sm:$0x1] 0.0
        %532 = vst [vmem:[#allocation2 + $0x150] sm:$0x1] 0.0
        %533 = vst [vmem:[#allocation2 + $0x168] sm:$0x1] 0.0
        %534 = vst [vmem:[#allocation2 + $0x180] sm:$0x1] 0.0
        %535 = vst [vmem:[#allocation2 + $0x198] sm:$0x1] 0.0
        %536 = vst [vmem:[#allocation2 + $0x11] sm:$0x1] 0.0
        %537 = vst [vmem:[#allocation2 + $0x29] sm:$0x1] 0.0
        %538 = vst [vmem:[#allocation2 + $0x41] sm:$0x1] 0.0
        %539 = vst [vmem:[#allocation2 + $0x59] sm:$0x1] 0.0
        %540 = vst [vmem:[#allocation2 + $0x71] sm:$0x1] 0.0
        %541 = vst [vmem:[#allocation2 + $0x89] sm:$0x1] 0.0
        %542 = vst [vmem:[#allocation2 + $0xa1] sm:$0x1] 0.0
        %543 = vst [vmem:[#allocation2 + $0xb9] sm:$0x1] 0.0
        %544 = vst [vmem:[#allocation2 + $0xd1] sm:$0x1] 0.0
        %545 = vst [vmem:[#allocation2 + $0xe9] sm:$0x1] 0.0
        %546 = vst [vmem:[#allocation2 + $0x101] sm:$0x1] 0.0
        %547 = vst [vmem:[#allocation2 + $0x119] sm:$0x1] 0.0
        %548 = vst [vmem:[#allocation2 + $0x131] sm:$0x1] 0.0
        %549 = vst [vmem:[#allocation2 + $0x149] sm:$0x1] 0.0
        %550 = vst [vmem:[#allocation2 + $0x161] sm:$0x1] 0.0
        %551 = vst [vmem:[#allocation2 + $0x179] sm:$0x1] 0.0
        %552 = vst [vmem:[#allocation2 + $0x191] sm:$0x1] 0.0
        %553 = vst [vmem:[#allocation2 + $0x1a9] sm:$0x1] 0.0
        %s554 = scalar_lea.vmem [#allocation2], 24
        %555 = vst [vmem:[%s554 + $0x1] sm:$0xff] %v479
        %556 = vst [vmem:[%s554 + $0x9] sm:$0xff] %v480
        %557 = vst [vmem:[%s554 + $0x19] sm:$0xff] %v481
        %558 = vst [vmem:[%s554 + $0x21] sm:$0xff] %v482
        %559 = vst [vmem:[%s554 + $0x31] sm:$0xff] %v483
        %560 = vst [vmem:[%s554 + $0x39] sm:$0xff] %v484
        %561 = vst [vmem:[%s554 + $0x49] sm:$0xff] %v485
        %562 = vst [vmem:[%s554 + $0x51] sm:$0xff] %v486
        %563 = vst [vmem:[%s554 + $0x61] sm:$0xff] %v487
        %564 = vst [vmem:[%s554 + $0x69] sm:$0xff] %v488
        %565 = vst [vmem:[%s554 + $0x79] sm:$0xff] %v489
        %566 = vst [vmem:[%s554 + $0x81] sm:$0xff] %v490
        %567 = vst [vmem:[%s554 + $0x91] sm:$0xff] %v491
        %568 = vst [vmem:[%s554 + $0x99] sm:$0xff] %v492
        %569 = vst [vmem:[%s554 + $0xa9] sm:$0xff] %v493
        %570 = vst [vmem:[%s554 + $0xb1] sm:$0xff] %v494
        %571 = vst [vmem:[%s554 + $0xc1] sm:$0xff] %v495
        %572 = vst [vmem:[%s554 + $0xc9] sm:$0xff] %v496
        %573 = vst [vmem:[%s554 + $0xd9] sm:$0xff] %v497
        %574 = vst [vmem:[%s554 + $0xe1] sm:$0xff] %v498
        %575 = vst [vmem:[%s554 + $0xf1] sm:$0xff] %v499
        %576 = vst [vmem:[%s554 + $0xf9] sm:$0xff] %v500
        %577 = vst [vmem:[%s554 + $0x109] sm:$0xff] %v501
        %578 = vst [vmem:[%s554 + $0x111] sm:$0xff] %v502
        %579 = vst [vmem:[%s554 + $0x121] sm:$0xff] %v503
        %580 = vst [vmem:[%s554 + $0x129] sm:$0xff] %v504
        %581 = vst [vmem:[%s554 + $0x139] sm:$0xff] %v505
        %582 = vst [vmem:[%s554 + $0x141] sm:$0xff] %v506
        %583 = vst [vmem:[%s554 + $0x151] sm:$0xff] %v507
        %584 = vst [vmem:[%s554 + $0x159] sm:$0xff] %v508
        %585 = vst [vmem:[%s554 + $0x169] sm:$0xff] %v509
        %586 = vst [vmem:[%s554 + $0x171] sm:$0xff] %v510
        %v587 = vld [vmem:[#allocation2] sm:$0xff]
        %v588 = vld [vmem:[#allocation2 + $0x8] sm:$0xff]
        %v589 = vld [vmem:[#allocation2 + $0x10] sm:$0x3]
        %v590 = vld [vmem:[#allocation2 + $0x18] sm:$0xff]
        %v591 = vld [vmem:[#allocation2 + $0x20] sm:$0xff]
        %v592 = vld [vmem:[#allocation2 + $0x28] sm:$0x3]
        %v593 = vld [vmem:[#allocation2 + $0x30] sm:$0xff]
        %v594 = vld [vmem:[#allocation2 + $0x38] sm:$0xff]
        %v595 = vld [vmem:[#allocation2 + $0x40] sm:$0x3]
        %v596 = vld [vmem:[#allocation2 + $0x48] sm:$0xff]
        %v597 = vld [vmem:[#allocation2 + $0x50] sm:$0xff]
        %v598 = vld [vmem:[#allocation2 + $0x58] sm:$0x3]
        %v599 = vld [vmem:[#allocation2 + $0x60] sm:$0xff]
        %v600 = vld [vmem:[#allocation2 + $0x68] sm:$0xff]
        %v601 = vld [vmem:[#allocation2 + $0x70] sm:$0x3]
        %v602 = vld [vmem:[#allocation2 + $0x78] sm:$0xff]
        %v603 = vld [vmem:[#allocation2 + $0x80] sm:$0xff]
        %v604 = vld [vmem:[#allocation2 + $0x88] sm:$0x3]
        %v605 = vld [vmem:[#allocation2 + $0x90] sm:$0xff]
        %v606 = vld [vmem:[#allocation2 + $0x98] sm:$0xff]
        %v607 = vld [vmem:[#allocation2 + $0xa0] sm:$0x3]
        %v608 = vld [vmem:[#allocation2 + $0xa8] sm:$0xff]
        %v609 = vld [vmem:[#allocation2 + $0xb0] sm:$0xff]
        %v610 = vld [vmem:[#allocation2 + $0xb8] sm:$0x3]
        %v611 = vld [vmem:[#allocation2 + $0xc0] sm:$0xff]
        %v612 = vld [vmem:[#allocation2 + $0xc8] sm:$0xff]
        %v613 = vld [vmem:[#allocation2 + $0xd0] sm:$0x3]
        %v614 = vld [vmem:[#allocation2 + $0xd8] sm:$0xff]
        %v615 = vld [vmem:[#allocation2 + $0xe0] sm:$0xff]
        %v616 = vld [vmem:[#allocation2 + $0xe8] sm:$0x3]
        %v617 = vld [vmem:[#allocation2 + $0xf0] sm:$0xff]
        %v618 = vld [vmem:[#allocation2 + $0xf8] sm:$0xff]
        %v619 = vld [vmem:[#allocation2 + $0x100] sm:$0x3]
        %v620 = vld [vmem:[#allocation2 + $0x108] sm:$0xff]
        %v621 = vld [vmem:[#allocation2 + $0x110] sm:$0xff]
        %v622 = vld [vmem:[#allocation2 + $0x118] sm:$0x3]
        %v623 = vld [vmem:[#allocation2 + $0x120] sm:$0xff]
        %v624 = vld [vmem:[#allocation2 + $0x128] sm:$0xff]
        %v625 = vld [vmem:[#allocation2 + $0x130] sm:$0x3]
        %v626 = vld [vmem:[#allocation2 + $0x138] sm:$0xff]
        %v627 = vld [vmem:[#allocation2 + $0x140] sm:$0xff]
        %v628 = vld [vmem:[#allocation2 + $0x148] sm:$0x3]
        %v629 = vld [vmem:[#allocation2 + $0x150] sm:$0xff]
        %v630 = vld [vmem:[#allocation2 + $0x158] sm:$0xff]
        %v631 = vld [vmem:[#allocation2 + $0x160] sm:$0x3]
        %v632 = vld [vmem:[#allocation2 + $0x168] sm:$0xff]
        %v633 = vld [vmem:[#allocation2 + $0x170] sm:$0xff]
        %v634 = vld [vmem:[#allocation2 + $0x178] sm:$0x3]
        %v635 = vld [vmem:[#allocation2 + $0x180] sm:$0xff]
        %v636 = vld [vmem:[#allocation2 + $0x188] sm:$0xff]
        %v637 = vld [vmem:[#allocation2 + $0x190] sm:$0x3]
        %v638 = vld [vmem:[#allocation2 + $0x198] sm:$0xff]
        %v639 = vld [vmem:[#allocation2 + $0x1a0] sm:$0xff]
        %v640 = vld [vmem:[#allocation2 + $0x1a8] sm:$0x3]
        %v641 = vld [vmem:[#allocation7] sm:$0xf]
        %v642 = vld [vmem:[#allocation7 + $0x4] sm:$0xf]
        %v643 = vld [vmem:[#allocation7 + $0x8] sm:$0xf]
        %v644 = vld [vmem:[#allocation7 + $0xc] sm:$0xf]
        %v645 = vld [vmem:[#allocation7 + $0x10] sm:$0xf]
        %v646 = vld [vmem:[#allocation7 + $0x14] sm:$0xf]
        %v647 = vld [vmem:[#allocation7 + $0x18] sm:$0xf]
        %v648 = vld [vmem:[#allocation7 + $0x1c] sm:$0xf]
        %v649 = vld [vmem:[#allocation7 + $0x20] sm:$0xf]
        %v650 = vld [vmem:[#allocation7 + $0x24] sm:$0xf]
        %v651 = vld [vmem:[#allocation7 + $0x28] sm:$0xf]
        %v652 = vld [vmem:[#allocation7 + $0x2c] sm:$0xf]
        %v653 = vld [vmem:[#allocation7 + $0x30] sm:$0xf]
        %v654 = vld [vmem:[#allocation7 + $0x34] sm:$0xf]
        %v655 = vld [vmem:[#allocation7 + $0x38] sm:$0xf]
        %v656 = vld [vmem:[#allocation7 + $0x3c] sm:$0xf]
        %v657 = vld [vmem:[#allocation7 + $0x40] sm:$0xf]
        %v658 = vld [vmem:[#allocation7 + $0x44] sm:$0xf]
        %v659 = vld [vmem:[#allocation7 + $0x48] sm:$0xf]
        %v660 = vld [vmem:[#allocation7 + $0x4c] sm:$0xf]
        %v661 = vld [vmem:[#allocation7 + $0x50] sm:$0xf]
        %v662 = vld [vmem:[#allocation7 + $0x54] sm:$0xf]
        %v663 = vld [vmem:[#allocation7 + $0x58] sm:$0xf]
        %v664 = vld [vmem:[#allocation7 + $0x5c] sm:$0xf]
        %v665 = vld [vmem:[#allocation7 + $0x60] sm:$0xf]
        %v666 = vld [vmem:[#allocation7 + $0x64] sm:$0xf]
        %v667 = vld [vmem:[#allocation7 + $0x68] sm:$0xf]
        %v668 = vld [vmem:[#allocation7 + $0x6c] sm:$0xf]
        %v669 = vld [vmem:[#allocation7 + $0x70] sm:$0xf]
        %v670 = vld [vmem:[#allocation7 + $0x74] sm:$0xf]
        %v671 = vld [vmem:[#allocation7 + $0x78] sm:$0xf]
        %v672 = vld [vmem:[#allocation7 + $0x7c] sm:$0xf]
        %v673 = vld [vmem:[#allocation7 + $0x80] sm:$0xf]
        %v674 = vld [vmem:[#allocation7 + $0x84] sm:$0xf]
        %v675 = vld [vmem:[#allocation7 + $0x88] sm:$0xf]
        %v676 = vld [vmem:[#allocation7 + $0x8c] sm:$0xf]
        %v677 = vld [vmem:[#allocation7 + $0x90] sm:$0xf]
        %v678 = vld [vmem:[#allocation7 + $0x94] sm:$0xf]
        %v679 = vld [vmem:[#allocation7 + $0x98] sm:$0xf]
        %v680 = vld [vmem:[#allocation7 + $0x9c] sm:$0xf]
        %v681 = vld [vmem:[#allocation7 + $0xa0] sm:$0xf]
        %v682 = vld [vmem:[#allocation7 + $0xa4] sm:$0xf]
        %v683 = vld [vmem:[#allocation7 + $0xa8] sm:$0xf]
        %v684 = vld [vmem:[#allocation7 + $0xac] sm:$0xf]
        %v685 = vld [vmem:[#allocation7 + $0xb0] sm:$0xf]
        %v686 = vld [vmem:[#allocation7 + $0xb4] sm:$0xf]
        %v687 = vld [vmem:[#allocation7 + $0xb8] sm:$0xf]
        %v688 = vld [vmem:[#allocation7 + $0xbc] sm:$0xf]
        %v689 = vld [vmem:[#allocation7 + $0xc0] sm:$0xf]
        %v690 = vld [vmem:[#allocation7 + $0xc4] sm:$0xf]
        %v691 = vld [vmem:[#allocation7 + $0xc8] sm:$0xf]
        %v692 = vld [vmem:[#allocation7 + $0xcc] sm:$0xf]
        %v693 = vld [vmem:[#allocation7 + $0xd0] sm:$0xf]
        %v694 = vld [vmem:[#allocation7 + $0xd4] sm:$0xf]
        %v695 = vld [vmem:[#allocation7 + $0xd8] sm:$0xf]
        %v696 = vld [vmem:[#allocation7 + $0xdc] sm:$0xf]
        %v697 = vld [vmem:[#allocation7 + $0xe0] sm:$0xf]
        %v698 = vld [vmem:[#allocation7 + $0xe4] sm:$0xf]
        %v699 = vld [vmem:[#allocation7 + $0xe8] sm:$0xf]
        %v700 = vld [vmem:[#allocation7 + $0xec] sm:$0xf]
        %v701 = vld [vmem:[#allocation7 + $0xf0] sm:$0xf]
        %v702 = vld [vmem:[#allocation7 + $0xf4] sm:$0xf]
        %v703 = vld [vmem:[#allocation7 + $0xf8] sm:$0xf]
        %v704 = vld [vmem:[#allocation7 + $0xfc] sm:$0xf]
        %v705 = vld [vmem:[#allocation7 + $0x100] sm:$0xf]
        %v706 = vld [vmem:[#allocation7 + $0x104] sm:$0xf]
        %v707 = vld [vmem:[#allocation7 + $0x108] sm:$0xf]
        %v708 = vld [vmem:[#allocation7 + $0x10c] sm:$0xf]
        %v709 = vld [vmem:[#allocation7 + $0x110] sm:$0xf]
        %v710 = vld [vmem:[#allocation7 + $0x114] sm:$0xf]
        %v711 = vld [vmem:[#allocation7 + $0x118] sm:$0xf]
        %v712 = vld [vmem:[#allocation7 + $0x11c] sm:$0xf]
        %v713 = vld [vmem:[#allocation7 + $0x120] sm:$0xf]
        %v714 = vld [vmem:[#allocation7 + $0x124] sm:$0xf]
        %v715 = vld [vmem:[#allocation7 + $0x128] sm:$0xf]
        %v716 = vld [vmem:[#allocation7 + $0x12c] sm:$0xf]
        %v717 = vld [vmem:[#allocation7 + $0x130] sm:$0xf]
        %v718 = vld [vmem:[#allocation7 + $0x134] sm:$0xf]
        %v719 = vld [vmem:[#allocation7 + $0x138] sm:$0xf]
        %v720 = vld [vmem:[#allocation7 + $0x13c] sm:$0xf]
        %v721 = vld [vmem:[#allocation7 + $0x140] sm:$0xf]
        %v722 = vld [vmem:[#allocation7 + $0x144] sm:$0xf]
        %v723 = vld [vmem:[#allocation7 + $0x148] sm:$0xf]
        %v724 = vld [vmem:[#allocation7 + $0x14c] sm:$0xf]
        %v725 = vld [vmem:[#allocation7 + $0x150] sm:$0xf]
        %v726 = vld [vmem:[#allocation7 + $0x154] sm:$0xf]
        %v727 = vld [vmem:[#allocation7 + $0x158] sm:$0xf]
        %v728 = vld [vmem:[#allocation7 + $0x15c] sm:$0xf]
        %v729 = vld [vmem:[#allocation7 + $0x160] sm:$0xf]
        %v730 = vld [vmem:[#allocation7 + $0x164] sm:$0xf]
        %v731 = vld [vmem:[#allocation7 + $0x168] sm:$0xf]
        %v732 = vld [vmem:[#allocation7 + $0x16c] sm:$0xf]
        %v733 = vld [vmem:[#allocation7 + $0x170] sm:$0xf]
        %v734 = vld [vmem:[#allocation7 + $0x174] sm:$0xf]
        %v735 = vld [vmem:[#allocation7 + $0x178] sm:$0xf]
        %v736 = vld [vmem:[#allocation7 + $0x17c] sm:$0xf]
        %v737 = vld [vmem:[#allocation7 + $0x180] sm:$0xf]
        %v738 = vld [vmem:[#allocation7 + $0x184] sm:$0xf]
        %v739 = vld [vmem:[#allocation7 + $0x188] sm:$0xf]
        %v740 = vld [vmem:[#allocation7 + $0x18c] sm:$0xf]
        %v741 = vld [vmem:[#allocation7 + $0x190] sm:$0xf]
        %v742 = vld [vmem:[#allocation7 + $0x194] sm:$0xf]
        %v743 = vld [vmem:[#allocation7 + $0x198] sm:$0xf]
        %v744 = vld [vmem:[#allocation7 + $0x19c] sm:$0xf]
        %v745 = vld [vmem:[#allocation7 + $0x1a0] sm:$0xf]
        %v746 = vld [vmem:[#allocation7 + $0x1a4] sm:$0xf]
        %v747 = vld [vmem:[#allocation7 + $0x1a8] sm:$0xf]
        %v748 = vld [vmem:[#allocation7 + $0x1ac] sm:$0xf]
        %v749 = vld [vmem:[#allocation7 + $0x1b0] sm:$0xf]
        %v750 = vld [vmem:[#allocation7 + $0x1b4] sm:$0xf]
        %v751 = vld [vmem:[#allocation7 + $0x1b8] sm:$0xf]
        %v752 = vld [vmem:[#allocation7 + $0x1bc] sm:$0xf]
        %v753 = vld [vmem:[#allocation7 + $0x1c0] sm:$0xf]
        %v754 = vld [vmem:[#allocation7 + $0x1c4] sm:$0xf]
        %v755 = vld [vmem:[#allocation7 + $0x1c8] sm:$0xf]
        %v756 = vld [vmem:[#allocation7 + $0x1cc] sm:$0xf]
        %v757 = vld [vmem:[#allocation7 + $0x1d0] sm:$0xf]
        %v758 = vld [vmem:[#allocation7 + $0x1d4] sm:$0xf]
        %v759 = vld [vmem:[#allocation7 + $0x1d8] sm:$0xf]
        %v760 = vld [vmem:[#allocation7 + $0x1dc] sm:$0xf]
        %v761 = vld [vmem:[#allocation7 + $0x1e0] sm:$0xf]
        %v762 = vld [vmem:[#allocation7 + $0x1e4] sm:$0xf]
        %v763 = vld [vmem:[#allocation7 + $0x1e8] sm:$0xf]
        %v764 = vld [vmem:[#allocation7 + $0x1ec] sm:$0xf]
        %v765 = vld [vmem:[#allocation7 + $0x1f0] sm:$0xf]
        %v766 = vld [vmem:[#allocation7 + $0x1f4] sm:$0xf]
        %v767 = vld [vmem:[#allocation7 + $0x1f8] sm:$0xf]
        %v768 = vld [vmem:[#allocation7 + $0x1fc] sm:$0xf]
        %v769 = vld [vmem:[#allocation7 + $0x200] sm:$0xf]
        %v770 = vld [vmem:[#allocation7 + $0x204] sm:$0xf]
        %v771 = vld [vmem:[#allocation7 + $0x208] sm:$0xf]
        %v772 = vld [vmem:[#allocation7 + $0x20c] sm:$0xf]
        %v773 = vld [vmem:[#allocation7 + $0x210] sm:$0xf]
        %v774 = vld [vmem:[#allocation7 + $0x214] sm:$0xf]
        %v775 = vld [vmem:[#allocation7 + $0x218] sm:$0xf]
        %v776 = vld [vmem:[#allocation7 + $0x21c] sm:$0xf]
        %v777 = vld [vmem:[#allocation7 + $0x220] sm:$0xf]
        %v778 = vld [vmem:[#allocation7 + $0x224] sm:$0xf]
        %v779 = vld [vmem:[#allocation7 + $0x228] sm:$0xf]
        %v780 = vld [vmem:[#allocation7 + $0x22c] sm:$0xf]
        %v781 = vld [vmem:[#allocation7 + $0x230] sm:$0xf]
        %v782 = vld [vmem:[#allocation7 + $0x234] sm:$0xf]
        %v783 = vld [vmem:[#allocation7 + $0x238] sm:$0xf]
        %v784 = vld [vmem:[#allocation7 + $0x23c] sm:$0xf]
        %v785 = vpack.c.bf16 %v588, %v587
        %v786 = vpack.c.bf16 %v591, %v590
        %v787 = vpack.c.bf16 %v594, %v593
        %v788 = vpack.c.bf16 %v597, %v596
        %v789 = vpack.c.bf16 %v600, %v599
        %v790 = vpack.c.bf16 %v603, %v602
        %v791 = vpack.c.bf16 %v606, %v605
        %v792 = vpack.c.bf16 %v609, %v608
        %v793 = vpack.c.bf16 %v612, %v611
        %v794 = vpack.c.bf16 %v615, %v614
        %v795 = vpack.c.bf16 %v618, %v617
        %v796 = vpack.c.bf16 %v621, %v620
        %v797 = vpack.c.bf16 %v624, %v623
        %v798 = vpack.c.bf16 %v627, %v626
        %v799 = vpack.c.bf16 %v630, %v629
        %v800 = vpack.c.bf16 %v633, %v632
        %vm849 = vcmask 1046528
        %v850 = vrot.slane %v587, 1
        %v851 = vrot.slane %v588, 1
        %v852 = vsel %vm849, %v850, %v851
        %v853 = vrot.slane %v589, 1
        %v854 = vsel %vm849, %v851, %v853
        %v855 = vrot.slane %v590, 1
        %v856 = vrot.slane %v591, 1
        %v857 = vsel %vm849, %v855, %v856
        %v858 = vrot.slane %v592, 1
        %v859 = vsel %vm849, %v856, %v858
        %v860 = vrot.slane %v593, 1
        %v861 = vrot.slane %v594, 1
        %v862 = vsel %vm849, %v860, %v861
        %v863 = vrot.slane %v595, 1
        %v864 = vsel %vm849, %v861, %v863
        %v865 = vrot.slane %v596, 1
        %v866 = vrot.slane %v597, 1
        %v867 = vsel %vm849, %v865, %v866
        %v868 = vrot.slane %v598, 1
        %v869 = vsel %vm849, %v866, %v868
        %v870 = vrot.slane %v599, 1
        %v871 = vrot.slane %v600, 1
        %v872 = vsel %vm849, %v870, %v871
        %v873 = vrot.slane %v601, 1
        %v874 = vsel %vm849, %v871, %v873
        %v875 = vrot.slane %v602, 1
        %v876 = vrot.slane %v603, 1
        %v877 = vsel %vm849, %v875, %v876
        %v878 = vrot.slane %v604, 1
        %v879 = vsel %vm849, %v876, %v878
        %v880 = vrot.slane %v605, 1
        %v881 = vrot.slane %v606, 1
        %v882 = vsel %vm849, %v880, %v881
        %v883 = vrot.slane %v607, 1
        %v884 = vsel %vm849, %v881, %v883
        %v885 = vrot.slane %v608, 1
        %v886 = vrot.slane %v609, 1
        %v887 = vsel %vm849, %v885, %v886
        %v888 = vrot.slane %v610, 1
        %v889 = vsel %vm849, %v886, %v888
        %v890 = vrot.slane %v611, 1
        %v891 = vrot.slane %v612, 1
        %v892 = vsel %vm849, %v890, %v891
        %v893 = vrot.slane %v613, 1
        %v894 = vsel %vm849, %v891, %v893
        %v895 = vrot.slane %v614, 1
        %v896 = vrot.slane %v615, 1
        %v897 = vsel %vm849, %v895, %v896
        %v898 = vrot.slane %v616, 1
        %v899 = vsel %vm849, %v896, %v898
        %v900 = vrot.slane %v617, 1
        %v901 = vrot.slane %v618, 1
        %v902 = vsel %vm849, %v900, %v901
        %v903 = vrot.slane %v619, 1
        %v904 = vsel %vm849, %v901, %v903
        %v905 = vrot.slane %v620, 1
        %v906 = vrot.slane %v621, 1
        %v907 = vsel %vm849, %v905, %v906
        %v908 = vrot.slane %v622, 1
        %v909 = vsel %vm849, %v906, %v908
        %v910 = vrot.slane %v623, 1
        %v911 = vrot.slane %v624, 1
        %v912 = vsel %vm849, %v910, %v911
        %v913 = vrot.slane %v625, 1
        %v914 = vsel %vm849, %v911, %v913
        %v915 = vrot.slane %v626, 1
        %v916 = vrot.slane %v627, 1
        %v917 = vsel %vm849, %v915, %v916
        %v918 = vrot.slane %v628, 1
        %v919 = vsel %vm849, %v916, %v918
        %v920 = vrot.slane %v629, 1
        %v921 = vrot.slane %v630, 1
        %v922 = vsel %vm849, %v920, %v921
        %v923 = vrot.slane %v631, 1
        %v924 = vsel %vm849, %v921, %v923
        %v925 = vrot.slane %v632, 1
        %v926 = vrot.slane %v633, 1
        %v927 = vsel %vm849, %v925, %v926
        %v928 = vrot.slane %v634, 1
        %v929 = vsel %vm849, %v926, %v928
        %v962 = vpack.c.bf16 %v854, %v852
        %v963 = vpack.c.bf16 %v859, %v857
        %v964 = vpack.c.bf16 %v864, %v862
        %v965 = vpack.c.bf16 %v869, %v867
        %v966 = vpack.c.bf16 %v874, %v872
        %v967 = vpack.c.bf16 %v879, %v877
        %v968 = vpack.c.bf16 %v884, %v882
        %v969 = vpack.c.bf16 %v889, %v887
        %v970 = vpack.c.bf16 %v894, %v892
        %v971 = vpack.c.bf16 %v899, %v897
        %v972 = vpack.c.bf16 %v904, %v902
        %v973 = vpack.c.bf16 %v909, %v907
        %v974 = vpack.c.bf16 %v914, %v912
        %v975 = vpack.c.bf16 %v919, %v917
        %v976 = vpack.c.bf16 %v924, %v922
        %v977 = vpack.c.bf16 %v929, %v927
        %vm978 = vcmask 1045504
        %v979 = vrot.slane %v587, 2
        %v980 = vrot.slane %v588, 2
        %v981 = vsel %vm978, %v979, %v980
        %v982 = vrot.slane %v589, 2
        %v983 = vsel %vm978, %v980, %v982
        %v984 = vrot.slane %v590, 2
        %v985 = vrot.slane %v591, 2
        %v986 = vsel %vm978, %v984, %v985
        %v987 = vrot.slane %v592, 2
        %v988 = vsel %vm978, %v985, %v987
        %v989 = vrot.slane %v593, 2
        %v990 = vrot.slane %v594, 2
        %v991 = vsel %vm978, %v989, %v990
        %v992 = vrot.slane %v595, 2
        %v993 = vsel %vm978, %v990, %v992
        %v994 = vrot.slane %v596, 2
        %v995 = vrot.slane %v597, 2
        %v996 = vsel %vm978, %v994, %v995
        %v997 = vrot.slane %v598, 2
        %v998 = vsel %vm978, %v995, %v997
        %v999 = vrot.slane %v599, 2
        %v1000 = vrot.slane %v600, 2
        %v1001 = vsel %vm978, %v999, %v1000
        %v1002 = vrot.slane %v601, 2
        %v1003 = vsel %vm978, %v1000, %v1002
        %v1004 = vrot.slane %v602, 2
        %v1005 = vrot.slane %v603, 2
        %v1006 = vsel %vm978, %v1004, %v1005
        %v1007 = vrot.slane %v604, 2
        %v1008 = vsel %vm978, %v1005, %v1007
        %v1009 = vrot.slane %v605, 2
        %v1010 = vrot.slane %v606, 2
        %v1011 = vsel %vm978, %v1009, %v1010
        %v1012 = vrot.slane %v607, 2
        %v1013 = vsel %vm978, %v1010, %v1012
        %v1014 = vrot.slane %v608, 2
        %v1015 = vrot.slane %v609, 2
        %v1016 = vsel %vm978, %v1014, %v1015
        %v1017 = vrot.slane %v610, 2
        %v1018 = vsel %vm978, %v1015, %v1017
        %v1019 = vrot.slane %v611, 2
        %v1020 = vrot.slane %v612, 2
        %v1021 = vsel %vm978, %v1019, %v1020
        %v1022 = vrot.slane %v613, 2
        %v1023 = vsel %vm978, %v1020, %v1022
        %v1024 = vrot.slane %v614, 2
        %v1025 = vrot.slane %v615, 2
        %v1026 = vsel %vm978, %v1024, %v1025
        %v1027 = vrot.slane %v616, 2
        %v1028 = vsel %vm978, %v1025, %v1027
        %v1029 = vrot.slane %v617, 2
        %v1030 = vrot.slane %v618, 2
        %v1031 = vsel %vm978, %v1029, %v1030
        %v1032 = vrot.slane %v619, 2
        %v1033 = vsel %vm978, %v1030, %v1032
        %v1034 = vrot.slane %v620, 2
        %v1035 = vrot.slane %v621, 2
        %v1036 = vsel %vm978, %v1034, %v1035
        %v1037 = vrot.slane %v622, 2
        %v1038 = vsel %vm978, %v1035, %v1037
        %v1039 = vrot.slane %v623, 2
        %v1040 = vrot.slane %v624, 2
        %v1041 = vsel %vm978, %v1039, %v1040
        %v1042 = vrot.slane %v625, 2
        %v1043 = vsel %vm978, %v1040, %v1042
        %v1044 = vrot.slane %v626, 2
        %v1045 = vrot.slane %v627, 2
        %v1046 = vsel %vm978, %v1044, %v1045
        %v1047 = vrot.slane %v628, 2
        %v1048 = vsel %vm978, %v1045, %v1047
        %v1049 = vrot.slane %v629, 2
        %v1050 = vrot.slane %v630, 2
        %v1051 = vsel %vm978, %v1049, %v1050
        %v1052 = vrot.slane %v631, 2
        %v1053 = vsel %vm978, %v1050, %v1052
        %v1054 = vrot.slane %v632, 2
        %v1055 = vrot.slane %v633, 2
        %v1056 = vsel %vm978, %v1054, %v1055
        %v1057 = vrot.slane %v634, 2
        %v1058 = vsel %vm978, %v1055, %v1057
        %v1091 = vpack.c.bf16 %v983, %v981
        %v1092 = vpack.c.bf16 %v988, %v986
        %v1093 = vpack.c.bf16 %v993, %v991
        %v1094 = vpack.c.bf16 %v998, %v996
        %v1095 = vpack.c.bf16 %v1003, %v1001
        %v1096 = vpack.c.bf16 %v1008, %v1006
        %v1097 = vpack.c.bf16 %v1013, %v1011
        %v1098 = vpack.c.bf16 %v1018, %v1016
        %v1099 = vpack.c.bf16 %v1023, %v1021
        %v1100 = vpack.c.bf16 %v1028, %v1026
        %v1101 = vpack.c.bf16 %v1033, %v1031
        %v1102 = vpack.c.bf16 %v1038, %v1036
        %v1103 = vpack.c.bf16 %v1043, %v1041
        %v1104 = vpack.c.bf16 %v1048, %v1046
        %v1105 = vpack.c.bf16 %v1053, %v1051
        %v1106 = vpack.c.bf16 %v1058, %v1056
        %v1107 = vpack.c.bf16 %v636, %v635
        %v1111 = vrot.slane %v635, 1
        %v1112 = vrot.slane %v636, 1
        %v1113 = vsel %vm849, %v1111, %v1112
        %v1114 = vrot.slane %v637, 1
        %v1115 = vsel %vm849, %v1112, %v1114
        %v1118 = vpack.c.bf16 %v1115, %v1113
        %v1119 = vrot.slane %v635, 2
        %v1120 = vrot.slane %v636, 2
        %v1121 = vsel %vm978, %v1119, %v1120
        %v1122 = vrot.slane %v637, 2
        %v1123 = vsel %vm978, %v1120, %v1122
        %v1126 = vpack.c.bf16 %v1123, %v1121
        %v1127 = vpack.c.bf16 %v639, %v638
        %v1131 = vrot.slane %v638, 1
        %v1132 = vrot.slane %v639, 1
        %v1133 = vsel %vm849, %v1131, %v1132
        %v1134 = vrot.slane %v640, 1
        %v1135 = vsel %vm849, %v1132, %v1134
        %v1138 = vpack.c.bf16 %v1135, %v1133
        %v1139 = vrot.slane %v638, 2
        %v1140 = vrot.slane %v639, 2
        %v1141 = vsel %vm978, %v1139, %v1140
        %v1142 = vrot.slane %v640, 2
        %v1143 = vsel %vm978, %v1140, %v1142
        %v1146 = vpack.c.bf16 %v1143, %v1141
        %v1291 = vunpack.c.l.b16 %v641
        %v1292 = vunpack.c.l.b16 %v642
        %v1293 = vunpack.c.l.b16 %v643
        %v1294 = vunpack.c.l.b16 %v644
        %v1295 = vunpack.c.l.b16 %v645
        %v1296 = vunpack.c.l.b16 %v646
        %v1297 = vunpack.c.l.b16 %v647
        %v1298 = vunpack.c.l.b16 %v648
        %v1299 = vunpack.c.l.b16 %v649
        %v1300 = vunpack.c.l.b16 %v650
        %v1301 = vunpack.c.l.b16 %v651
        %v1302 = vunpack.c.l.b16 %v652
        %v1303 = vunpack.c.l.b16 %v653
        %v1304 = vunpack.c.l.b16 %v654
        %v1305 = vunpack.c.l.b16 %v655
        %v1306 = vunpack.c.l.b16 %v656
        %v1307 = vunpack.c.l.b16 %v657
        %v1308 = vunpack.c.l.b16 %v658
        %v1309 = vunpack.c.l.b16 %v659
        %v1310 = vunpack.c.l.b16 %v660
        %v1311 = vunpack.c.l.b16 %v661
        %v1312 = vunpack.c.l.b16 %v662
        %v1313 = vunpack.c.l.b16 %v663
        %v1314 = vunpack.c.l.b16 %v664
        %v1315 = vunpack.c.l.b16 %v665
        %v1316 = vunpack.c.l.b16 %v666
        %v1317 = vunpack.c.l.b16 %v667
        %v1318 = vunpack.c.l.b16 %v668
        %v1319 = vunpack.c.l.b16 %v669
        %v1320 = vunpack.c.l.b16 %v670
        %v1321 = vunpack.c.l.b16 %v671
        %v1322 = vunpack.c.l.b16 %v672
        %v1323 = vunpack.c.l.b16 %v673
        %v1324 = vunpack.c.l.b16 %v674
        %v1325 = vunpack.c.l.b16 %v675
        %v1326 = vunpack.c.l.b16 %v676
        %v1327 = vunpack.c.l.b16 %v677
        %v1328 = vunpack.c.l.b16 %v678
        %v1329 = vunpack.c.l.b16 %v679
        %v1330 = vunpack.c.l.b16 %v680
        %v1331 = vunpack.c.l.b16 %v681
        %v1332 = vunpack.c.l.b16 %v682
        %v1333 = vunpack.c.l.b16 %v683
        %v1334 = vunpack.c.l.b16 %v684
        %v1335 = vunpack.c.l.b16 %v685
        %v1336 = vunpack.c.l.b16 %v686
        %v1337 = vunpack.c.l.b16 %v687
        %v1338 = vunpack.c.l.b16 %v688
        %v1339 = vunpack.c.l.b16 %v689
        %v1340 = vunpack.c.l.b16 %v690
        %v1341 = vunpack.c.l.b16 %v691
        %v1342 = vunpack.c.l.b16 %v692
        %v1343 = vunpack.c.l.b16 %v693
        %v1344 = vunpack.c.l.b16 %v694
        %v1345 = vunpack.c.l.b16 %v695
        %v1346 = vunpack.c.l.b16 %v696
        %v1347 = vunpack.c.l.b16 %v697
        %v1348 = vunpack.c.l.b16 %v698
        %v1349 = vunpack.c.l.b16 %v699
        %v1350 = vunpack.c.l.b16 %v700
        %v1351 = vunpack.c.l.b16 %v701
        %v1352 = vunpack.c.l.b16 %v702
        %v1353 = vunpack.c.l.b16 %v703
        %v1354 = vunpack.c.l.b16 %v704
        %v1355 = vunpack.c.l.b16 %v705
        %v1356 = vunpack.c.l.b16 %v706
        %v1357 = vunpack.c.l.b16 %v707
        %v1358 = vunpack.c.l.b16 %v708
        %v1359 = vunpack.c.l.b16 %v709
        %v1360 = vunpack.c.l.b16 %v710
        %v1361 = vunpack.c.l.b16 %v711
        %v1362 = vunpack.c.l.b16 %v712
        %v1363 = vunpack.c.l.b16 %v713
        %v1364 = vunpack.c.l.b16 %v714
        %v1365 = vunpack.c.l.b16 %v715
        %v1366 = vunpack.c.l.b16 %v716
        %v1367 = vunpack.c.l.b16 %v717
        %v1368 = vunpack.c.l.b16 %v718
        %v1369 = vunpack.c.l.b16 %v719
        %v1370 = vunpack.c.l.b16 %v720
        %v1371 = vunpack.c.l.b16 %v721
        %v1372 = vunpack.c.l.b16 %v722
        %v1373 = vunpack.c.l.b16 %v723
        %v1374 = vunpack.c.l.b16 %v724
        %v1375 = vunpack.c.l.b16 %v725
        %v1376 = vunpack.c.l.b16 %v726
        %v1377 = vunpack.c.l.b16 %v727
        %v1378 = vunpack.c.l.b16 %v728
        %v1379 = vunpack.c.l.b16 %v729
        %v1380 = vunpack.c.l.b16 %v730
        %v1381 = vunpack.c.l.b16 %v731
        %v1382 = vunpack.c.l.b16 %v732
        %v1383 = vunpack.c.l.b16 %v733
        %v1384 = vunpack.c.l.b16 %v734
        %v1385 = vunpack.c.l.b16 %v735
        %v1386 = vunpack.c.l.b16 %v736
        %v1387 = vunpack.c.l.b16 %v737
        %v1388 = vunpack.c.l.b16 %v738
        %v1389 = vunpack.c.l.b16 %v739
        %v1390 = vunpack.c.l.b16 %v740
        %v1391 = vunpack.c.l.b16 %v741
        %v1392 = vunpack.c.l.b16 %v742
        %v1393 = vunpack.c.l.b16 %v743
        %v1394 = vunpack.c.l.b16 %v744
        %v1395 = vunpack.c.l.b16 %v745
        %v1396 = vunpack.c.l.b16 %v746
        %v1397 = vunpack.c.l.b16 %v747
        %v1398 = vunpack.c.l.b16 %v748
        %v1399 = vunpack.c.l.b16 %v749
        %v1400 = vunpack.c.l.b16 %v750
        %v1401 = vunpack.c.l.b16 %v751
        %v1402 = vunpack.c.l.b16 %v752
        %v1403 = vunpack.c.l.b16 %v753
        %v1404 = vunpack.c.l.b16 %v754
        %v1405 = vunpack.c.l.b16 %v755
        %v1406 = vunpack.c.l.b16 %v756
        %v1407 = vunpack.c.l.b16 %v757
        %v1408 = vunpack.c.l.b16 %v758
        %v1409 = vunpack.c.l.b16 %v759
        %v1410 = vunpack.c.l.b16 %v760
        %v1411 = vunpack.c.l.b16 %v761
        %v1412 = vunpack.c.l.b16 %v762
        %v1413 = vunpack.c.l.b16 %v763
        %v1414 = vunpack.c.l.b16 %v764
        %v1415 = vunpack.c.l.b16 %v765
        %v1416 = vunpack.c.l.b16 %v766
        %v1417 = vunpack.c.l.b16 %v767
        %v1418 = vunpack.c.l.b16 %v768
        %v1419 = vunpack.c.l.b16 %v769
        %v1420 = vunpack.c.l.b16 %v770
        %v1421 = vunpack.c.l.b16 %v771
        %v1422 = vunpack.c.l.b16 %v772
        %v1423 = vunpack.c.l.b16 %v773
        %v1424 = vunpack.c.l.b16 %v774
        %v1425 = vunpack.c.l.b16 %v775
        %v1426 = vunpack.c.l.b16 %v776
        %v1427 = vunpack.c.l.b16 %v777
        %v1428 = vunpack.c.l.b16 %v778
        %v1429 = vunpack.c.l.b16 %v779
        %v1430 = vunpack.c.l.b16 %v780
        %v1431 = vunpack.c.l.b16 %v781
        %v1432 = vunpack.c.l.b16 %v782
        %v1433 = vunpack.c.l.b16 %v783
        %v1434 = vunpack.c.l.b16 %v784
        %v1435 = vpack.c.b16 %v1292, %v1291
        %v1436 = vpack.c.b16 %v1294, %v1293
        %v1437 = vpack.c.b16 %v1296, %v1295
        %v1438 = vpack.c.b16 %v1298, %v1297
        %v1439 = vpack.c.b16 %v1300, %v1299
        %v1440 = vpack.c.b16 %v1302, %v1301
        %v1441 = vpack.c.b16 %v1304, %v1303
        %v1442 = vpack.c.b16 %v1306, %v1305
        %v1443 = vpack.c.b16 %v1308, %v1307
        %v1444 = vpack.c.b16 %v1310, %v1309
        %v1445 = vpack.c.b16 %v1312, %v1311
        %v1446 = vpack.c.b16 %v1314, %v1313
        %v1447 = vpack.c.b16 %v1316, %v1315
        %v1448 = vpack.c.b16 %v1318, %v1317
        %v1449 = vpack.c.b16 %v1320, %v1319
        %v1450 = vpack.c.b16 %v1322, %v1321
        %v1451 = vpack.c.b16 %v1324, %v1323
        %v1452 = vpack.c.b16 %v1326, %v1325
        %v1453 = vpack.c.b16 %v1328, %v1327
        %v1454 = vpack.c.b16 %v1330, %v1329
        %v1455 = vpack.c.b16 %v1332, %v1331
        %v1456 = vpack.c.b16 %v1334, %v1333
        %v1457 = vpack.c.b16 %v1336, %v1335
        %v1458 = vpack.c.b16 %v1338, %v1337
        %v1459 = vpack.c.b16 %v1340, %v1339
        %v1460 = vpack.c.b16 %v1342, %v1341
        %v1461 = vpack.c.b16 %v1344, %v1343
        %v1462 = vpack.c.b16 %v1346, %v1345
        %v1463 = vpack.c.b16 %v1348, %v1347
        %v1464 = vpack.c.b16 %v1350, %v1349
        %v1465 = vpack.c.b16 %v1352, %v1351
        %v1466 = vpack.c.b16 %v1354, %v1353
        %v1467 = vpack.c.b16 %v1356, %v1355
        %v1468 = vpack.c.b16 %v1358, %v1357
        %v1469 = vpack.c.b16 %v1360, %v1359
        %v1470 = vpack.c.b16 %v1362, %v1361
        %v1471 = vpack.c.b16 %v1364, %v1363
        %v1472 = vpack.c.b16 %v1366, %v1365
        %v1473 = vpack.c.b16 %v1368, %v1367
        %v1474 = vpack.c.b16 %v1370, %v1369
        %v1475 = vpack.c.b16 %v1372, %v1371
        %v1476 = vpack.c.b16 %v1374, %v1373
        %v1477 = vpack.c.b16 %v1376, %v1375
        %v1478 = vpack.c.b16 %v1378, %v1377
        %v1479 = vpack.c.b16 %v1380, %v1379
        %v1480 = vpack.c.b16 %v1382, %v1381
        %v1481 = vpack.c.b16 %v1384, %v1383
        %v1482 = vpack.c.b16 %v1386, %v1385
        %v1483 = vpack.c.b16 %v1388, %v1387
        %v1484 = vpack.c.b16 %v1390, %v1389
        %v1485 = vpack.c.b16 %v1392, %v1391
        %v1486 = vpack.c.b16 %v1394, %v1393
        %v1487 = vpack.c.b16 %v1396, %v1395
        %v1488 = vpack.c.b16 %v1398, %v1397
        %v1489 = vpack.c.b16 %v1400, %v1399
        %v1490 = vpack.c.b16 %v1402, %v1401
        %v1491 = vpack.c.b16 %v1404, %v1403
        %v1492 = vpack.c.b16 %v1406, %v1405
        %v1493 = vpack.c.b16 %v1408, %v1407
        %v1494 = vpack.c.b16 %v1410, %v1409
        %v1495 = vpack.c.b16 %v1412, %v1411
        %v1496 = vpack.c.b16 %v1414, %v1413
        %v1497 = vpack.c.b16 %v1416, %v1415
        %v1498 = vpack.c.b16 %v1418, %v1417
        %v1499 = vpack.c.b16 %v1420, %v1419
        %v1500 = vpack.c.b16 %v1422, %v1421
        %v1501 = vpack.c.b16 %v1424, %v1423
        %v1502 = vpack.c.b16 %v1426, %v1425
        %v1503 = vpack.c.b16 %v1428, %v1427
        %v1504 = vpack.c.b16 %v1430, %v1429
        %v1505 = vpack.c.b16 %v1432, %v1431
        %v1506 = vpack.c.b16 %v1434, %v1433
        %1579 = vmatprep.subr.bf16.mxu0 0
        %1580 = vmatpush1.bf16.msra.mxu0 %v1435
        %1581 = vmatprep.subr.bf16.mxu0 0
        %1582 = vmatpush1.bf16.msra.mxu0 %v1436
        %1583 = vmatprep.subr.bf16.mxu0 0
        %1584 = vmatpush1.bf16.msra.mxu0 %v1437
        %1585 = vmatprep.subr.bf16.mxu0 0
        %1586 = vmatpush1.bf16.msra.mxu0 %v1438
        %1587 = vmatprep.subr.bf16.mxu0 0
        %1588 = vmatpush1.bf16.msra.mxu0 %v1439
        %1589 = vmatprep.subr.bf16.mxu0 0
        %1590 = vmatpush1.bf16.msra.mxu0 %v1440
        %1591 = vmatprep.subr.bf16.mxu0 0
        %1592 = vmatpush1.bf16.msra.mxu0 %v1441
        %1593 = vmatprep.subr.bf16.mxu0 0
        %1594 = vmatpush1.bf16.msra.mxu0 %v1442
        %1595 = vmatprep.subr.bf16.mxu0 0
        %1596 = vmatpush1.bf16.msra.mxu0 %v1443
        %1597 = vmatprep.subr.bf16.mxu0 0
        %1598 = vmatpush1.bf16.msra.mxu0 %v1444
        %1599 = vmatprep.subr.bf16.mxu0 0
        %1600 = vmatpush1.bf16.msra.mxu0 %v1445
        %1601 = vmatprep.subr.bf16.mxu0 0
        %1602 = vmatpush1.bf16.msra.mxu0 %v1446
        %1603 = vmatprep.subr.bf16.mxu0 0
        %1604 = vmatpush1.bf16.msra.mxu0 %v1447
        %1605 = vmatprep.subr.bf16.mxu0 0
        %1606 = vmatpush1.bf16.msra.mxu0 %v1448
        %1607 = vmatprep.subr.bf16.mxu0 0
        %1608 = vmatpush1.bf16.msra.mxu0 %v1449
        %1609 = vmatprep.subr.bf16.mxu0 0
        %1610 = vmatpush1.bf16.msra.mxu0 %v1450
        %1611 = vmatprep.mubr.bf16.mxu0 %v962
        %1612 = vmatmul.mubr.bf16.gmra.mrb[0].mxu0 %v785
        %v1613 = vpop.f32.mrb[0].mxu0
        %v1614 = vadd.f32 0.0, %v1613
        %v1615 = vpop.f32.mrb[0].mxu0
        %v1616 = vpop.f32.mrb[0].mxu0
        %v1617 = vadd.f32 0.0, %v1616
        %v1618 = vpop.f32.mrb[0].mxu0
        %1619 = vmatprep.mubr.bf16.mxu0 %v963
        %1620 = vmatmul.mubr.bf16.gmra.mrb[0].mxu0 %v786
        %v1621 = vpop.f32.mrb[0].mxu0
        %v1622 = vadd.f32 0.0, %v1621
        %v1623 = vpop.f32.mrb[0].mxu0
        %v1624 = vpop.f32.mrb[0].mxu0
        %v1625 = vadd.f32 0.0, %v1624
        %v1626 = vpop.f32.mrb[0].mxu0
        %1627 = vmatprep.mubr.bf16.mxu0 %v964
        %1628 = vmatmul.mubr.bf16.gmra.mrb[0].mxu0 %v787
        %v1629 = vpop.f32.mrb[0].mxu0
        %v1630 = vadd.f32 0.0, %v1629
        %v1631 = vpop.f32.mrb[0].mxu0
        %v1632 = vpop.f32.mrb[0].mxu0
        %v1633 = vadd.f32 0.0, %v1632
        %v1634 = vpop.f32.mrb[0].mxu0
        %1635 = vmatprep.mubr.bf16.mxu0 %v965
        %1636 = vmatmul.mubr.bf16.gmra.mrb[0].mxu0 %v788
        %v1637 = vpop.f32.mrb[0].mxu0
        %v1638 = vadd.f32 0.0, %v1637
        %v1639 = vpop.f32.mrb[0].mxu0
        %v1640 = vpop.f32.mrb[0].mxu0
        %v1641 = vadd.f32 0.0, %v1640
        %v1642 = vpop.f32.mrb[0].mxu0
        %1643 = vmatprep.mubr.bf16.mxu0 %v966
        %1644 = vmatmul.mubr.bf16.gmra.mrb[0].mxu0 %v789
        %v1645 = vpop.f32.mrb[0].mxu0
        %v1646 = vadd.f32 0.0, %v1645
        %v1647 = vpop.f32.mrb[0].mxu0
        %v1648 = vpop.f32.mrb[0].mxu0
        %v1649 = vadd.f32 0.0, %v1648
        %v1650 = vpop.f32.mrb[0].mxu0
        %1651 = vmatprep.mubr.bf16.mxu0 %v967
        %1652 = vmatmul.mubr.bf16.gmra.mrb[0].mxu0 %v790
        %v1653 = vpop.f32.mrb[0].mxu0
        %v1654 = vadd.f32 0.0, %v1653
        %v1655 = vpop.f32.mrb[0].mxu0
        %v1656 = vpop.f32.mrb[0].mxu0
        %v1657 = vadd.f32 0.0, %v1656
        %v1658 = vpop.f32.mrb[0].mxu0
        %1659 = vmatprep.mubr.bf16.mxu0 %v968
        %1660 = vmatmul.mubr.bf16.gmra.mrb[0].mxu0 %v791
        %v1661 = vpop.f32.mrb[0].mxu0
        %v1662 = vadd.f32 0.0, %v1661
        %v1663 = vpop.f32.mrb[0].mxu0
        %v1664 = vpop.f32.mrb[0].mxu0
        %v1665 = vadd.f32 0.0, %v1664
        %v1666 = vpop.f32.mrb[0].mxu0
        %1667 = vmatprep.mubr.bf16.mxu0 %v969
        %1668 = vmatmul.mubr.bf16.gmra.mrb[0].mxu0 %v792
        %v1669 = vpop.f32.mrb[0].mxu0
        %v1670 = vadd.f32 0.0, %v1669
        %v1671 = vpop.f32.mrb[0].mxu0
        %v1672 = vpop.f32.mrb[0].mxu0
        %v1673 = vadd.f32 0.0, %v1672
        %v1674 = vpop.f32.mrb[0].mxu0
        %1675 = vmatprep.mubr.bf16.mxu0 %v970
        %1676 = vmatmul.mubr.bf16.gmra.mrb[0].mxu0 %v793
        %v1677 = vpop.f32.mrb[0].mxu0
        %v1678 = vadd.f32 0.0, %v1677
        %v1679 = vpop.f32.mrb[0].mxu0
        %v1680 = vpop.f32.mrb[0].mxu0
        %v1681 = vadd.f32 0.0, %v1680
        %v1682 = vpop.f32.mrb[0].mxu0
        %1683 = vmatprep.mubr.bf16.mxu0 %v971
        %1684 = vmatmul.mubr.bf16.gmra.mrb[0].mxu0 %v794
        %v1685 = vpop.f32.mrb[0].mxu0
        %v1686 = vadd.f32 0.0, %v1685
        %v1687 = vpop.f32.mrb[0].mxu0
        %v1688 = vpop.f32.mrb[0].mxu0
        %v1689 = vadd.f32 0.0, %v1688
        %v1690 = vpop.f32.mrb[0].mxu0
        %1691 = vmatprep.mubr.bf16.mxu0 %v972
        %1692 = vmatmul.mubr.bf16.gmra.mrb[0].mxu0 %v795
        %v1693 = vpop.f32.mrb[0].mxu0
        %v1694 = vadd.f32 0.0, %v1693
        %v1695 = vpop.f32.mrb[0].mxu0
        %v1696 = vpop.f32.mrb[0].mxu0
        %v1697 = vadd.f32 0.0, %v1696
        %v1698 = vpop.f32.mrb[0].mxu0
        %1699 = vmatprep.mubr.bf16.mxu0 %v973
        %1700 = vmatmul.mubr.bf16.gmra.mrb[0].mxu0 %v796
        %v1701 = vpop.f32.mrb[0].mxu0
        %v1702 = vadd.f32 0.0, %v1701
        %v1703 = vpop.f32.mrb[0].mxu0
        %v1704 = vpop.f32.mrb[0].mxu0
        %v1705 = vadd.f32 0.0, %v1704
        %v1706 = vpop.f32.mrb[0].mxu0
        %1707 = vmatprep.mubr.bf16.mxu0 %v974
        %1708 = vmatmul.mubr.bf16.gmra.mrb[0].mxu0 %v797
        %v1709 = vpop.f32.mrb[0].mxu0
        %v1710 = vadd.f32 0.0, %v1709
        %v1711 = vpop.f32.mrb[0].mxu0
        %v1712 = vpop.f32.mrb[0].mxu0
        %v1713 = vadd.f32 0.0, %v1712
        %v1714 = vpop.f32.mrb[0].mxu0
        %1715 = vmatprep.mubr.bf16.mxu0 %v975
        %1716 = vmatmul.mubr.bf16.gmra.mrb[0].mxu0 %v798
        %v1717 = vpop.f32.mrb[0].mxu0
        %v1718 = vadd.f32 0.0, %v1717
        %v1719 = vpop.f32.mrb[0].mxu0
        %v1720 = vpop.f32.mrb[0].mxu0
        %v1721 = vadd.f32 0.0, %v1720
        %v1722 = vpop.f32.mrb[0].mxu0
        %1723 = vmatprep.mubr.bf16.mxu0 %v976
        %1724 = vmatmul.mubr.bf16.gmra.mrb[0].mxu0 %v799
        %v1725 = vpop.f32.mrb[0].mxu0
        %v1726 = vadd.f32 0.0, %v1725
        %v1727 = vpop.f32.mrb[0].mxu0
        %v1728 = vpop.f32.mrb[0].mxu0
        %v1729 = vadd.f32 0.0, %v1728
        %v1730 = vpop.f32.mrb[0].mxu0
        %1731 = vmatprep.mubr.bf16.mxu0 %v977
        %1732 = vmatmul.mubr.bf16.gmra.mrb[0].mxu0 %v800
        %v1733 = vpop.f32.mrb[0].mxu0
        %v1734 = vadd.f32 0.0, %v1733
        %v1735 = vpop.f32.mrb[0].mxu0
        %v1736 = vpop.f32.mrb[0].mxu0
        %v1737 = vadd.f32 0.0, %v1736
        %v1738 = vpop.f32.mrb[0].mxu0
        %1739 = vdwg.mxu0
        %1740 = vmatprep.subr.bf16.mxu0 0
        %1741 = vmatpush1.bf16.msra.mxu0 %v1451
        %1742 = vmatprep.subr.bf16.mxu0 0
        %1743 = vmatpush1.bf16.msra.mxu0 %v1452
        %1744 = vmatprep.subr.bf16.mxu0 0
        %1745 = vmatpush1.bf16.msra.mxu0 %v1453
        %1746 = vmatprep.subr.bf16.mxu0 0
        %1747 = vmatpush1.bf16.msra.mxu0 %v1454
        %1748 = vmatprep.subr.bf16.mxu0 0
        %1749 = vmatpush1.bf16.msra.mxu0 %v1455
        %1750 = vmatprep.subr.bf16.mxu0 0
        %1751 = vmatpush1.bf16.msra.mxu0 %v1456
        %1752 = vmatprep.subr.bf16.mxu0 0
        %1753 = vmatpush1.bf16.msra.mxu0 %v1457
        %1754 = vmatprep.subr.bf16.mxu0 0
        %1755 = vmatpush1.bf16.msra.mxu0 %v1458
        %1756 = vmatprep.subr.bf16.mxu0 0
        %1757 = vmatpush1.bf16.msra.mxu0 %v1459
        %1758 = vmatprep.subr.bf16.mxu0 0
        %1759 = vmatpush1.bf16.msra.mxu0 %v1460
        %1760 = vmatprep.subr.bf16.mxu0 0
        %1761 = vmatpush1.bf16.msra.mxu0 %v1461
        %1762 = vmatprep.subr.bf16.mxu0 0
        %1763 = vmatpush1.bf16.msra.mxu0 %v1462
        %1764 = vmatprep.subr.bf16.mxu0 0
        %1765 = vmatpush1.bf16.msra.mxu0 %v1463
        %1766 = vmatprep.subr.bf16.mxu0 0
        %1767 = vmatpush1.bf16.msra.mxu0 %v1464
        %1768 = vmatprep.subr.bf16.mxu0 0
        %1769 = vmatpush1.bf16.msra.mxu0 %v1465
        %1770 = vmatprep.subr.bf16.mxu0 0
        %1771 = vmatpush1.bf16.msra.mxu0 %v1466
        %1772 = vmatprep.mubr.bf16.mxu0 %v786
        %1773 = vmatmul.mubr.bf16.gmra.mrb[0].mxu0 %v1091
        %v1774 = vpop.f32.mrb[0].mxu0
        %v1775 = vadd.f32 %v1614, %v1774
        %v1776 = vpop.f32.mrb[0].mxu0
        %v1777 = vpop.f32.mrb[0].mxu0
        %v1778 = vadd.f32 %v1617, %v1777
        %v1779 = vpop.f32.mrb[0].mxu0
        %1780 = vmatprep.mubr.bf16.mxu0 %v787
        %1781 = vmatmul.mubr.bf16.gmra.mrb[0].mxu0 %v1092
        %v1782 = vpop.f32.mrb[0].mxu0
        %v1783 = vadd.f32 %v1622, %v1782
        %v1784 = vpop.f32.mrb[0].mxu0
        %v1785 = vpop.f32.mrb[0].mxu0
        %v1786 = vadd.f32 %v1625, %v1785
        %v1787 = vpop.f32.mrb[0].mxu0
        %1788 = vmatprep.mubr.bf16.mxu0 %v788
        %1789 = vmatmul.mubr.bf16.gmra.mrb[0].mxu0 %v1093
        %v1790 = vpop.f32.mrb[0].mxu0
        %v1791 = vadd.f32 %v1630, %v1790
        %v1792 = vpop.f32.mrb[0].mxu0
        %v1793 = vpop.f32.mrb[0].mxu0
        %v1794 = vadd.f32 %v1633, %v1793
        %v1795 = vpop.f32.mrb[0].mxu0
        %1796 = vmatprep.mubr.bf16.mxu0 %v789
        %1797 = vmatmul.mubr.bf16.gmra.mrb[0].mxu0 %v1094
        %v1798 = vpop.f32.mrb[0].mxu0
        %v1799 = vadd.f32 %v1638, %v1798
        %v1800 = vpop.f32.mrb[0].mxu0
        %v1801 = vpop.f32.mrb[0].mxu0
        %v1802 = vadd.f32 %v1641, %v1801
        %v1803 = vpop.f32.mrb[0].mxu0
        %1804 = vmatprep.mubr.bf16.mxu0 %v790
        %1805 = vmatmul.mubr.bf16.gmra.mrb[0].mxu0 %v1095
        %v1806 = vpop.f32.mrb[0].mxu0
        %v1807 = vadd.f32 %v1646, %v1806
        %v1808 = vpop.f32.mrb[0].mxu0
        %v1809 = vpop.f32.mrb[0].mxu0
        %v1810 = vadd.f32 %v1649, %v1809
        %v1811 = vpop.f32.mrb[0].mxu0
        %1812 = vmatprep.mubr.bf16.mxu0 %v791
        %1813 = vmatmul.mubr.bf16.gmra.mrb[0].mxu0 %v1096
        %v1814 = vpop.f32.mrb[0].mxu0
        %v1815 = vadd.f32 %v1654, %v1814
        %v1816 = vpop.f32.mrb[0].mxu0
        %v1817 = vpop.f32.mrb[0].mxu0
        %v1818 = vadd.f32 %v1657, %v1817
        %v1819 = vpop.f32.mrb[0].mxu0
        %1820 = vmatprep.mubr.bf16.mxu0 %v792
        %1821 = vmatmul.mubr.bf16.gmra.mrb[0].mxu0 %v1097
        %v1822 = vpop.f32.mrb[0].mxu0
        %v1823 = vadd.f32 %v1662, %v1822
        %v1824 = vpop.f32.mrb[0].mxu0
        %v1825 = vpop.f32.mrb[0].mxu0
        %v1826 = vadd.f32 %v1665, %v1825
        %v1827 = vpop.f32.mrb[0].mxu0
        %1828 = vmatprep.mubr.bf16.mxu0 %v793
        %1829 = vmatmul.mubr.bf16.gmra.mrb[0].mxu0 %v1098
        %v1830 = vpop.f32.mrb[0].mxu0
        %v1831 = vadd.f32 %v1670, %v1830
        %v1832 = vpop.f32.mrb[0].mxu0
        %v1833 = vpop.f32.mrb[0].mxu0
        %v1834 = vadd.f32 %v1673, %v1833
        %v1835 = vpop.f32.mrb[0].mxu0
        %1836 = vmatprep.mubr.bf16.mxu0 %v794
        %1837 = vmatmul.mubr.bf16.gmra.mrb[0].mxu0 %v1099
        %v1838 = vpop.f32.mrb[0].mxu0
        %v1839 = vadd.f32 %v1678, %v1838
        %v1840 = vpop.f32.mrb[0].mxu0
        %v1841 = vpop.f32.mrb[0].mxu0
        %v1842 = vadd.f32 %v1681, %v1841
        %v1843 = vpop.f32.mrb[0].mxu0
        %1844 = vmatprep.mubr.bf16.mxu0 %v795
        %1845 = vmatmul.mubr.bf16.gmra.mrb[0].mxu0 %v1100
        %v1846 = vpop.f32.mrb[0].mxu0
        %v1847 = vadd.f32 %v1686, %v1846
        %v1848 = vpop.f32.mrb[0].mxu0
        %v1849 = vpop.f32.mrb[0].mxu0
        %v1850 = vadd.f32 %v1689, %v1849
        %v1851 = vpop.f32.mrb[0].mxu0
        %1852 = vmatprep.mubr.bf16.mxu0 %v796
        %1853 = vmatmul.mubr.bf16.gmra.mrb[0].mxu0 %v1101
        %v1854 = vpop.f32.mrb[0].mxu0
        %v1855 = vadd.f32 %v1694, %v1854
        %v1856 = vpop.f32.mrb[0].mxu0
        %v1857 = vpop.f32.mrb[0].mxu0
        %v1858 = vadd.f32 %v1697, %v1857
        %v1859 = vpop.f32.mrb[0].mxu0
        %1860 = vmatprep.mubr.bf16.mxu0 %v797
        %1861 = vmatmul.mubr.bf16.gmra.mrb[0].mxu0 %v1102
        %v1862 = vpop.f32.mrb[0].mxu0
        %v1863 = vadd.f32 %v1702, %v1862
        %v1864 = vpop.f32.mrb[0].mxu0
        %v1865 = vpop.f32.mrb[0].mxu0
        %v1866 = vadd.f32 %v1705, %v1865
        %v1867 = vpop.f32.mrb[0].mxu0
        %1868 = vmatprep.mubr.bf16.mxu0 %v798
        %1869 = vmatmul.mubr.bf16.gmra.mrb[0].mxu0 %v1103
        %v1870 = vpop.f32.mrb[0].mxu0
        %v1871 = vadd.f32 %v1710, %v1870
        %v1872 = vpop.f32.mrb[0].mxu0
        %v1873 = vpop.f32.mrb[0].mxu0
        %v1874 = vadd.f32 %v1713, %v1873
        %v1875 = vpop.f32.mrb[0].mxu0
        %1876 = vmatprep.mubr.bf16.mxu0 %v799
        %1877 = vmatmul.mubr.bf16.gmra.mrb[0].mxu0 %v1104
        %v1878 = vpop.f32.mrb[0].mxu0
        %v1879 = vadd.f32 %v1718, %v1878
        %v1880 = vpop.f32.mrb[0].mxu0
        %v1881 = vpop.f32.mrb[0].mxu0
        %v1882 = vadd.f32 %v1721, %v1881
        %v1883 = vpop.f32.mrb[0].mxu0
        %1884 = vmatprep.mubr.bf16.mxu0 %v800
        %1885 = vmatmul.mubr.bf16.gmra.mrb[0].mxu0 %v1105
        %v1886 = vpop.f32.mrb[0].mxu0
        %v1887 = vadd.f32 %v1726, %v1886
        %v1888 = vpop.f32.mrb[0].mxu0
        %v1889 = vpop.f32.mrb[0].mxu0
        %v1890 = vadd.f32 %v1729, %v1889
        %v1891 = vpop.f32.mrb[0].mxu0
        %1892 = vmatprep.mubr.bf16.mxu0 %v1107
        %1893 = vmatmul.mubr.bf16.gmra.mrb[0].mxu0 %v1106
        %v1894 = vpop.f32.mrb[0].mxu0
        %v1895 = vadd.f32 %v1734, %v1894
        %v1896 = vpop.f32.mrb[0].mxu0
        %v1897 = vpop.f32.mrb[0].mxu0
        %v1898 = vadd.f32 %v1737, %v1897
        %v1899 = vpop.f32.mrb[0].mxu0
        %1900 = vdwg.mxu0
        %1901 = vmatprep.subr.bf16.mxu0 0
        %1902 = vmatpush1.bf16.msra.mxu0 %v1467
        %1903 = vmatprep.subr.bf16.mxu0 0
        %1904 = vmatpush1.bf16.msra.mxu0 %v1468
        %1905 = vmatprep.subr.bf16.mxu0 0
        %1906 = vmatpush1.bf16.msra.mxu0 %v1469
        %1907 = vmatprep.subr.bf16.mxu0 0
        %1908 = vmatpush1.bf16.msra.mxu0 %v1470
        %1909 = vmatprep.subr.bf16.mxu0 0
        %1910 = vmatpush1.bf16.msra.mxu0 %v1471
        %1911 = vmatprep.subr.bf16.mxu0 0
        %1912 = vmatpush1.bf16.msra.mxu0 %v1472
        %1913 = vmatprep.subr.bf16.mxu0 0
        %1914 = vmatpush1.bf16.msra.mxu0 %v1473
        %1915 = vmatprep.subr.bf16.mxu0 0
        %1916 = vmatpush1.bf16.msra.mxu0 %v1474
        %1917 = vmatprep.subr.bf16.mxu0 0
        %1918 = vmatpush1.bf16.msra.mxu0 %v1475
        %1919 = vmatprep.subr.bf16.mxu0 0
        %1920 = vmatpush1.bf16.msra.mxu0 %v1476
        %1921 = vmatprep.subr.bf16.mxu0 0
        %1922 = vmatpush1.bf16.msra.mxu0 %v1477
        %1923 = vmatprep.subr.bf16.mxu0 0
        %1924 = vmatpush1.bf16.msra.mxu0 %v1478
        %1925 = vmatprep.subr.bf16.mxu0 0
        %1926 = vmatpush1.bf16.msra.mxu0 %v1479
        %1927 = vmatprep.subr.bf16.mxu0 0
        %1928 = vmatpush1.bf16.msra.mxu0 %v1480
        %1929 = vmatprep.subr.bf16.mxu0 0
        %1930 = vmatpush1.bf16.msra.mxu0 %v1481
        %1931 = vmatprep.subr.bf16.mxu0 0
        %1932 = vmatpush1.bf16.msra.mxu0 %v1482
        %1933 = vmatprep.mubr.bf16.mxu0 %v1092
        %1934 = vmatmul.mubr.bf16.gmra.mrb[0].mxu0 %v963
        %v1935 = vpop.f32.mrb[0].mxu0
        %v1936 = vadd.f32 %v1775, %v1935
        %v1937 = vpop.f32.mrb[0].mxu0
        %v1938 = vpop.f32.mrb[0].mxu0
        %v1939 = vadd.f32 %v1778, %v1938
        %v1940 = vpop.f32.mrb[0].mxu0
        %1941 = vmatprep.mubr.bf16.mxu0 %v1093
        %1942 = vmatmul.mubr.bf16.gmra.mrb[0].mxu0 %v964
        %v1943 = vpop.f32.mrb[0].mxu0
        %v1944 = vadd.f32 %v1783, %v1943
        %v1945 = vpop.f32.mrb[0].mxu0
        %v1946 = vpop.f32.mrb[0].mxu0
        %v1947 = vadd.f32 %v1786, %v1946
        %v1948 = vpop.f32.mrb[0].mxu0
        %1949 = vmatprep.mubr.bf16.mxu0 %v1094
        %1950 = vmatmul.mubr.bf16.gmra.mrb[0].mxu0 %v965
        %v1951 = vpop.f32.mrb[0].mxu0
        %v1952 = vadd.f32 %v1791, %v1951
        %v1953 = vpop.f32.mrb[0].mxu0
        %v1954 = vpop.f32.mrb[0].mxu0
        %v1955 = vadd.f32 %v1794, %v1954
        %v1956 = vpop.f32.mrb[0].mxu0
        %1957 = vmatprep.mubr.bf16.mxu0 %v1095
        %1958 = vmatmul.mubr.bf16.gmra.mrb[0].mxu0 %v966
        %v1959 = vpop.f32.mrb[0].mxu0
        %v1960 = vadd.f32 %v1799, %v1959
        %v1961 = vpop.f32.mrb[0].mxu0
        %v1962 = vpop.f32.mrb[0].mxu0
        %v1963 = vadd.f32 %v1802, %v1962
        %v1964 = vpop.f32.mrb[0].mxu0
        %1965 = vmatprep.mubr.bf16.mxu0 %v1096
        %1966 = vmatmul.mubr.bf16.gmra.mrb[0].mxu0 %v967
        %v1967 = vpop.f32.mrb[0].mxu0
        %v1968 = vadd.f32 %v1807, %v1967
        %v1969 = vpop.f32.mrb[0].mxu0
        %v1970 = vpop.f32.mrb[0].mxu0
        %v1971 = vadd.f32 %v1810, %v1970
        %v1972 = vpop.f32.mrb[0].mxu0
        %1973 = vmatprep.mubr.bf16.mxu0 %v1097
        %1974 = vmatmul.mubr.bf16.gmra.mrb[0].mxu0 %v968
        %v1975 = vpop.f32.mrb[0].mxu0
        %v1976 = vadd.f32 %v1815, %v1975
        %v1977 = vpop.f32.mrb[0].mxu0
        %v1978 = vpop.f32.mrb[0].mxu0
        %v1979 = vadd.f32 %v1818, %v1978
        %v1980 = vpop.f32.mrb[0].mxu0
        %1981 = vmatprep.mubr.bf16.mxu0 %v1098
        %1982 = vmatmul.mubr.bf16.gmra.mrb[0].mxu0 %v969
        %v1983 = vpop.f32.mrb[0].mxu0
        %v1984 = vadd.f32 %v1823, %v1983
        %v1985 = vpop.f32.mrb[0].mxu0
        %v1986 = vpop.f32.mrb[0].mxu0
        %v1987 = vadd.f32 %v1826, %v1986
        %v1988 = vpop.f32.mrb[0].mxu0
        %1989 = vmatprep.mubr.bf16.mxu0 %v1099
        %1990 = vmatmul.mubr.bf16.gmra.mrb[0].mxu0 %v970
        %v1991 = vpop.f32.mrb[0].mxu0
        %v1992 = vadd.f32 %v1831, %v1991
        %v1993 = vpop.f32.mrb[0].mxu0
        %v1994 = vpop.f32.mrb[0].mxu0
        %v1995 = vadd.f32 %v1834, %v1994
        %v1996 = vpop.f32.mrb[0].mxu0
        %1997 = vmatprep.mubr.bf16.mxu0 %v1100
        %1998 = vmatmul.mubr.bf16.gmra.mrb[0].mxu0 %v971
        %v1999 = vpop.f32.mrb[0].mxu0
        %v2000 = vadd.f32 %v1839, %v1999
        %v2001 = vpop.f32.mrb[0].mxu0
        %v2002 = vpop.f32.mrb[0].mxu0
        %v2003 = vadd.f32 %v1842, %v2002
        %v2004 = vpop.f32.mrb[0].mxu0
        %2005 = vmatprep.mubr.bf16.mxu0 %v1101
        %2006 = vmatmul.mubr.bf16.gmra.mrb[0].mxu0 %v972
        %v2007 = vpop.f32.mrb[0].mxu0
        %v2008 = vadd.f32 %v1847, %v2007
        %v2009 = vpop.f32.mrb[0].mxu0
        %v2010 = vpop.f32.mrb[0].mxu0
        %v2011 = vadd.f32 %v1850, %v2010
        %v2012 = vpop.f32.mrb[0].mxu0
        %2013 = vmatprep.mubr.bf16.mxu0 %v1102
        %2014 = vmatmul.mubr.bf16.gmra.mrb[0].mxu0 %v973
        %v2015 = vpop.f32.mrb[0].mxu0
        %v2016 = vadd.f32 %v1855, %v2015
        %v2017 = vpop.f32.mrb[0].mxu0
        %v2018 = vpop.f32.mrb[0].mxu0
        %v2019 = vadd.f32 %v1858, %v2018
        %v2020 = vpop.f32.mrb[0].mxu0
        %2021 = vmatprep.mubr.bf16.mxu0 %v1103
        %2022 = vmatmul.mubr.bf16.gmra.mrb[0].mxu0 %v974
        %v2023 = vpop.f32.mrb[0].mxu0
        %v2024 = vadd.f32 %v1863, %v2023
        %v2025 = vpop.f32.mrb[0].mxu0
        %v2026 = vpop.f32.mrb[0].mxu0
        %v2027 = vadd.f32 %v1866, %v2026
        %v2028 = vpop.f32.mrb[0].mxu0
        %2029 = vmatprep.mubr.bf16.mxu0 %v1104
        %2030 = vmatmul.mubr.bf16.gmra.mrb[0].mxu0 %v975
        %v2031 = vpop.f32.mrb[0].mxu0
        %v2032 = vadd.f32 %v1871, %v2031
        %v2033 = vpop.f32.mrb[0].mxu0
        %v2034 = vpop.f32.mrb[0].mxu0
        %v2035 = vadd.f32 %v1874, %v2034
        %v2036 = vpop.f32.mrb[0].mxu0
        %2037 = vmatprep.mubr.bf16.mxu0 %v1105
        %2038 = vmatmul.mubr.bf16.gmra.mrb[0].mxu0 %v976
        %v2039 = vpop.f32.mrb[0].mxu0
        %v2040 = vadd.f32 %v1879, %v2039
        %v2041 = vpop.f32.mrb[0].mxu0
        %v2042 = vpop.f32.mrb[0].mxu0
        %v2043 = vadd.f32 %v1882, %v2042
        %v2044 = vpop.f32.mrb[0].mxu0
        %2045 = vmatprep.mubr.bf16.mxu0 %v1106
        %2046 = vmatmul.mubr.bf16.gmra.mrb[0].mxu0 %v977
        %v2047 = vpop.f32.mrb[0].mxu0
        %v2048 = vadd.f32 %v1887, %v2047
        %v2049 = vpop.f32.mrb[0].mxu0
        %v2050 = vpop.f32.mrb[0].mxu0
        %v2051 = vadd.f32 %v1890, %v2050
        %v2052 = vpop.f32.mrb[0].mxu0
        %2053 = vmatprep.mubr.bf16.mxu0 %v1126
        %2054 = vmatmul.mubr.bf16.gmra.mrb[0].mxu0 %v1118
        %v2055 = vpop.f32.mrb[0].mxu0
        %v2056 = vadd.f32 %v1895, %v2055
        %v2057 = vpop.f32.mrb[0].mxu0
        %v2058 = vpop.f32.mrb[0].mxu0
        %v2059 = vadd.f32 %v1898, %v2058
        %v2060 = vpop.f32.mrb[0].mxu0
        %2061 = vdwg.mxu0
        %2062 = vmatprep.subr.bf16.mxu0 0
        %2063 = vmatpush1.bf16.msra.mxu0 %v1483
        %2064 = vmatprep.subr.bf16.mxu0 0
        %2065 = vmatpush1.bf16.msra.mxu0 %v1484
        %2066 = vmatprep.subr.bf16.mxu0 0
        %2067 = vmatpush1.bf16.msra.mxu0 %v1485
        %2068 = vmatprep.subr.bf16.mxu0 0
        %2069 = vmatpush1.bf16.msra.mxu0 %v1486
        %2070 = vmatprep.subr.bf16.mxu0 0
        %2071 = vmatpush1.bf16.msra.mxu0 %v1487
        %2072 = vmatprep.subr.bf16.mxu0 0
        %2073 = vmatpush1.bf16.msra.mxu0 %v1488
        %2074 = vmatprep.subr.bf16.mxu0 0
        %2075 = vmatpush1.bf16.msra.mxu0 %v1489
        %2076 = vmatprep.subr.bf16.mxu0 0
        %2077 = vmatpush1.bf16.msra.mxu0 %v1490
        %2078 = vmatprep.subr.bf16.mxu0 0
        %2079 = vmatpush1.bf16.msra.mxu0 %v1491
        %2080 = vmatprep.subr.bf16.mxu0 0
        %2081 = vmatpush1.bf16.msra.mxu0 %v1492
        %2082 = vmatprep.subr.bf16.mxu0 0
        %2083 = vmatpush1.bf16.msra.mxu0 %v1493
        %2084 = vmatprep.subr.bf16.mxu0 0
        %2085 = vmatpush1.bf16.msra.mxu0 %v1494
        %2086 = vmatprep.subr.bf16.mxu0 0
        %2087 = vmatpush1.bf16.msra.mxu0 %v1495
        %2088 = vmatprep.subr.bf16.mxu0 0
        %2089 = vmatpush1.bf16.msra.mxu0 %v1496
        %2090 = vmatprep.subr.bf16.mxu0 0
        %2091 = vmatpush1.bf16.msra.mxu0 %v1497
        %2092 = vmatprep.subr.bf16.mxu0 0
        %2093 = vmatpush1.bf16.msra.mxu0 %v1498
        %2094 = vmatprep.mubr.bf16.mxu0 %v964
        %2095 = vmatmul.mubr.bf16.gmra.mrb[0].mxu0 %v787
        %v2096 = vpop.f32.mrb[0].mxu0
        %v2097 = vadd.f32 %v1936, %v2096
        %v2098 = vpop.f32.mrb[0].mxu0
        %v2099 = vpop.f32.mrb[0].mxu0
        %v2100 = vadd.f32 %v1939, %v2099
        %v2101 = vpop.f32.mrb[0].mxu0
        %2102 = vmatprep.mubr.bf16.mxu0 %v965
        %2103 = vmatmul.mubr.bf16.gmra.mrb[0].mxu0 %v788
        %v2104 = vpop.f32.mrb[0].mxu0
        %v2105 = vadd.f32 %v1944, %v2104
        %v2106 = vpop.f32.mrb[0].mxu0
        %v2107 = vpop.f32.mrb[0].mxu0
        %v2108 = vadd.f32 %v1947, %v2107
        %v2109 = vpop.f32.mrb[0].mxu0
        %2110 = vmatprep.mubr.bf16.mxu0 %v966
        %2111 = vmatmul.mubr.bf16.gmra.mrb[0].mxu0 %v789
        %v2112 = vpop.f32.mrb[0].mxu0
        %v2113 = vadd.f32 %v1952, %v2112
        %v2114 = vpop.f32.mrb[0].mxu0
        %v2115 = vpop.f32.mrb[0].mxu0
        %v2116 = vadd.f32 %v1955, %v2115
        %v2117 = vpop.f32.mrb[0].mxu0
        %2118 = vmatprep.mubr.bf16.mxu0 %v967
        %2119 = vmatmul.mubr.bf16.gmra.mrb[0].mxu0 %v790
        %v2120 = vpop.f32.mrb[0].mxu0
        %v2121 = vadd.f32 %v1960, %v2120
        %v2122 = vpop.f32.mrb[0].mxu0
        %v2123 = vpop.f32.mrb[0].mxu0
        %v2124 = vadd.f32 %v1963, %v2123
        %v2125 = vpop.f32.mrb[0].mxu0
        %2126 = vmatprep.mubr.bf16.mxu0 %v968
        %2127 = vmatmul.mubr.bf16.gmra.mrb[0].mxu0 %v791
        %v2128 = vpop.f32.mrb[0].mxu0
        %v2129 = vadd.f32 %v1968, %v2128
        %v2130 = vpop.f32.mrb[0].mxu0
        %v2131 = vpop.f32.mrb[0].mxu0
        %v2132 = vadd.f32 %v1971, %v2131
        %v2133 = vpop.f32.mrb[0].mxu0
        %2134 = vmatprep.mubr.bf16.mxu0 %v969
        %2135 = vmatmul.mubr.bf16.gmra.mrb[0].mxu0 %v792
        %v2136 = vpop.f32.mrb[0].mxu0
        %v2137 = vadd.f32 %v1976, %v2136
        %v2138 = vpop.f32.mrb[0].mxu0
        %v2139 = vpop.f32.mrb[0].mxu0
        %v2140 = vadd.f32 %v1979, %v2139
        %v2141 = vpop.f32.mrb[0].mxu0
        %2142 = vmatprep.mubr.bf16.mxu0 %v970
        %2143 = vmatmul.mubr.bf16.gmra.mrb[0].mxu0 %v793
        %v2144 = vpop.f32.mrb[0].mxu0
        %v2145 = vadd.f32 %v1984, %v2144
        %v2146 = vpop.f32.mrb[0].mxu0
        %v2147 = vpop.f32.mrb[0].mxu0
        %v2148 = vadd.f32 %v1987, %v2147
        %v2149 = vpop.f32.mrb[0].mxu0
        %2150 = vmatprep.mubr.bf16.mxu0 %v971
        %2151 = vmatmul.mubr.bf16.gmra.mrb[0].mxu0 %v794
        %v2152 = vpop.f32.mrb[0].mxu0
        %v2153 = vadd.f32 %v1992, %v2152
        %v2154 = vpop.f32.mrb[0].mxu0
        %v2155 = vpop.f32.mrb[0].mxu0
        %v2156 = vadd.f32 %v1995, %v2155
        %v2157 = vpop.f32.mrb[0].mxu0
        %2158 = vmatprep.mubr.bf16.mxu0 %v972
        %2159 = vmatmul.mubr.bf16.gmra.mrb[0].mxu0 %v795
        %v2160 = vpop.f32.mrb[0].mxu0
        %v2161 = vadd.f32 %v2000, %v2160
        %v2162 = vpop.f32.mrb[0].mxu0
        %v2163 = vpop.f32.mrb[0].mxu0
        %v2164 = vadd.f32 %v2003, %v2163
        %v2165 = vpop.f32.mrb[0].mxu0
        %2166 = vmatprep.mubr.bf16.mxu0 %v973
        %2167 = vmatmul.mubr.bf16.gmra.mrb[0].mxu0 %v796
        %v2168 = vpop.f32.mrb[0].mxu0
        %v2169 = vadd.f32 %v2008, %v2168
        %v2170 = vpop.f32.mrb[0].mxu0
        %v2171 = vpop.f32.mrb[0].mxu0
        %v2172 = vadd.f32 %v2011, %v2171
        %v2173 = vpop.f32.mrb[0].mxu0
        %2174 = vmatprep.mubr.bf16.mxu0 %v974
        %2175 = vmatmul.mubr.bf16.gmra.mrb[0].mxu0 %v797
        %v2176 = vpop.f32.mrb[0].mxu0
        %v2177 = vadd.f32 %v2016, %v2176
        %v2178 = vpop.f32.mrb[0].mxu0
        %v2179 = vpop.f32.mrb[0].mxu0
        %v2180 = vadd.f32 %v2019, %v2179
        %v2181 = vpop.f32.mrb[0].mxu0
        %2182 = vmatprep.mubr.bf16.mxu0 %v975
        %2183 = vmatmul.mubr.bf16.gmra.mrb[0].mxu0 %v798
        %v2184 = vpop.f32.mrb[0].mxu0
        %v2185 = vadd.f32 %v2024, %v2184
        %v2186 = vpop.f32.mrb[0].mxu0
        %v2187 = vpop.f32.mrb[0].mxu0
        %v2188 = vadd.f32 %v2027, %v2187
        %v2189 = vpop.f32.mrb[0].mxu0
        %2190 = vmatprep.mubr.bf16.mxu0 %v976
        %2191 = vmatmul.mubr.bf16.gmra.mrb[0].mxu0 %v799
        %v2192 = vpop.f32.mrb[0].mxu0
        %v2193 = vadd.f32 %v2032, %v2192
        %v2194 = vpop.f32.mrb[0].mxu0
        %v2195 = vpop.f32.mrb[0].mxu0
        %v2196 = vadd.f32 %v2035, %v2195
        %v2197 = vpop.f32.mrb[0].mxu0
        %2198 = vmatprep.mubr.bf16.mxu0 %v977
        %2199 = vmatmul.mubr.bf16.gmra.mrb[0].mxu0 %v800
        %v2200 = vpop.f32.mrb[0].mxu0
        %v2201 = vadd.f32 %v2040, %v2200
        %v2202 = vpop.f32.mrb[0].mxu0
        %v2203 = vpop.f32.mrb[0].mxu0
        %v2204 = vadd.f32 %v2043, %v2203
        %v2205 = vpop.f32.mrb[0].mxu0
        %2206 = vmatprep.mubr.bf16.mxu0 %v1118
        %2207 = vmatmul.mubr.bf16.gmra.mrb[0].mxu0 %v1107
        %v2208 = vpop.f32.mrb[0].mxu0
        %v2209 = vadd.f32 %v2048, %v2208
        %v2210 = vpop.f32.mrb[0].mxu0
        %v2211 = vpop.f32.mrb[0].mxu0
        %v2212 = vadd.f32 %v2051, %v2211
        %v2213 = vpop.f32.mrb[0].mxu0
        %2214 = vmatprep.mubr.bf16.mxu0 %v1138
        %2215 = vmatmul.mubr.bf16.gmra.mrb[0].mxu0 %v1127
        %v2216 = vpop.f32.mrb[0].mxu0
        %v2217 = vadd.f32 %v2056, %v2216
        %v2218 = vpop.f32.mrb[0].mxu0
        %v2219 = vpop.f32.mrb[0].mxu0
        %v2220 = vadd.f32 %v2059, %v2219
        %v2221 = vpop.f32.mrb[0].mxu0
        %2222 = vdwg.mxu0
        %2223 = vmatprep.subr.bf16.mxu0 0
        %2224 = vmatpush1.bf16.msra.mxu0 %v1499
        %2225 = vmatprep.subr.bf16.mxu0 0
        %2226 = vmatpush1.bf16.msra.mxu0 %v1500
        %2227 = vmatprep.subr.bf16.mxu0 0
        %2228 = vmatpush1.bf16.msra.mxu0 %v1501
        %2229 = vmatprep.subr.bf16.mxu0 0
        %2230 = vmatpush1.bf16.msra.mxu0 %v1502
        %2231 = vmatprep.subr.bf16.mxu0 0
        %2232 = vmatpush1.bf16.msra.mxu0 %v1503
        %2233 = vmatprep.subr.bf16.mxu0 0
        %2234 = vmatpush1.bf16.msra.mxu0 %v1504
        %2235 = vmatprep.subr.bf16.mxu0 0
        %2236 = vmatpush1.bf16.msra.mxu0 %v1505
        %2237 = vmatprep.subr.bf16.mxu0 0
        %2238 = vmatpush1.bf16.msra.mxu0 %v1506
        %2239 = vmatprep.subr.bf16.mxu0 0
        %2240 = vmatpush1.bf16.msra.mxu0 0
        %2241 = vmatprep.subr.bf16.mxu0 0
        %2242 = vmatpush1.bf16.msra.mxu0 0
        %2243 = vmatprep.subr.bf16.mxu0 0
        %2244 = vmatpush1.bf16.msra.mxu0 0
        %2245 = vmatprep.subr.bf16.mxu0 0
        %2246 = vmatpush1.bf16.msra.mxu0 0
        %2247 = vmatprep.subr.bf16.mxu0 0
        %2248 = vmatpush1.bf16.msra.mxu0 0
        %2249 = vmatprep.subr.bf16.mxu0 0
        %2250 = vmatpush1.bf16.msra.mxu0 0
        %2251 = vmatprep.subr.bf16.mxu0 0
        %2252 = vmatpush1.bf16.msra.mxu0 0
        %2253 = vmatprep.subr.bf16.mxu0 0
        %2254 = vmatpush1.bf16.msra.mxu0 0
        %2255 = vmatprep.mubr.bf16.mxu0 0
        %2256 = vmatmul.mubr.bf16.gmra.mrb[0].mxu0 %v1093
        %v2257 = vpop.f32.mrb[0].mxu0
        %v2258 = vadd.f32 %v2097, %v2257
        %v2259 = vpop.f32.mrb[0].mxu0
        %v2260 = vpop.f32.mrb[0].mxu0
        %v2261 = vadd.f32 %v2100, %v2260
        %v2262 = vpop.f32.mrb[0].mxu0
        %2263 = vmatprep.mubr.bf16.mxu0 0
        %2264 = vmatmul.mubr.bf16.gmra.mrb[0].mxu0 %v1094
        %v2265 = vpop.f32.mrb[0].mxu0
        %v2266 = vadd.f32 %v2105, %v2265
        %v2267 = vpop.f32.mrb[0].mxu0
        %v2268 = vpop.f32.mrb[0].mxu0
        %v2269 = vadd.f32 %v2108, %v2268
        %v2270 = vpop.f32.mrb[0].mxu0
        %2271 = vmatprep.mubr.bf16.mxu0 0
        %2272 = vmatmul.mubr.bf16.gmra.mrb[0].mxu0 %v1095
        %v2273 = vpop.f32.mrb[0].mxu0
        %v2274 = vadd.f32 %v2113, %v2273
        %v2275 = vpop.f32.mrb[0].mxu0
        %v2276 = vpop.f32.mrb[0].mxu0
        %v2277 = vadd.f32 %v2116, %v2276
        %v2278 = vpop.f32.mrb[0].mxu0
        %2279 = vmatprep.mubr.bf16.mxu0 0
        %2280 = vmatmul.mubr.bf16.gmra.mrb[0].mxu0 %v1096
        %v2281 = vpop.f32.mrb[0].mxu0
        %v2282 = vadd.f32 %v2121, %v2281
        %v2283 = vpop.f32.mrb[0].mxu0
        %v2284 = vpop.f32.mrb[0].mxu0
        %v2285 = vadd.f32 %v2124, %v2284
        %v2286 = vpop.f32.mrb[0].mxu0
        %2287 = vmatprep.mubr.bf16.mxu0 0
        %2288 = vmatmul.mubr.bf16.gmra.mrb[0].mxu0 %v1097
        %v2289 = vpop.f32.mrb[0].mxu0
        %v2290 = vadd.f32 %v2129, %v2289
        %v2291 = vpop.f32.mrb[0].mxu0
        %v2292 = vpop.f32.mrb[0].mxu0
        %v2293 = vadd.f32 %v2132, %v2292
        %v2294 = vpop.f32.mrb[0].mxu0
        %2295 = vmatprep.mubr.bf16.mxu0 0
        %2296 = vmatmul.mubr.bf16.gmra.mrb[0].mxu0 %v1098
        %v2297 = vpop.f32.mrb[0].mxu0
        %v2298 = vadd.f32 %v2137, %v2297
        %v2299 = vpop.f32.mrb[0].mxu0
        %v2300 = vpop.f32.mrb[0].mxu0
        %v2301 = vadd.f32 %v2140, %v2300
        %v2302 = vpop.f32.mrb[0].mxu0
        %2303 = vmatprep.mubr.bf16.mxu0 0
        %2304 = vmatmul.mubr.bf16.gmra.mrb[0].mxu0 %v1099
        %v2305 = vpop.f32.mrb[0].mxu0
        %v2306 = vadd.f32 %v2145, %v2305
        %v2307 = vpop.f32.mrb[0].mxu0
        %v2308 = vpop.f32.mrb[0].mxu0
        %v2309 = vadd.f32 %v2148, %v2308
        %v2310 = vpop.f32.mrb[0].mxu0
        %2311 = vmatprep.mubr.bf16.mxu0 0
        %2312 = vmatmul.mubr.bf16.gmra.mrb[0].mxu0 %v1100
        %v2313 = vpop.f32.mrb[0].mxu0
        %v2314 = vadd.f32 %v2153, %v2313
        %v2315 = vpop.f32.mrb[0].mxu0
        %v2316 = vpop.f32.mrb[0].mxu0
        %v2317 = vadd.f32 %v2156, %v2316
        %v2318 = vpop.f32.mrb[0].mxu0
        %2319 = vmatprep.mubr.bf16.mxu0 0
        %2320 = vmatmul.mubr.bf16.gmra.mrb[0].mxu0 %v1101
        %v2321 = vpop.f32.mrb[0].mxu0
        %v2322 = vadd.f32 %v2161, %v2321
        %v2323 = vpop.f32.mrb[0].mxu0
        %v2324 = vpop.f32.mrb[0].mxu0
        %v2325 = vadd.f32 %v2164, %v2324
        %v2326 = vpop.f32.mrb[0].mxu0
        %2327 = vmatprep.mubr.bf16.mxu0 0
        %2328 = vmatmul.mubr.bf16.gmra.mrb[0].mxu0 %v1102
        %v2329 = vpop.f32.mrb[0].mxu0
        %v2330 = vadd.f32 %v2169, %v2329
        %v2331 = vpop.f32.mrb[0].mxu0
        %v2332 = vpop.f32.mrb[0].mxu0
        %v2333 = vadd.f32 %v2172, %v2332
        %v2334 = vpop.f32.mrb[0].mxu0
        %2335 = vmatprep.mubr.bf16.mxu0 0
        %2336 = vmatmul.mubr.bf16.gmra.mrb[0].mxu0 %v1103
        %v2337 = vpop.f32.mrb[0].mxu0
        %v2338 = vadd.f32 %v2177, %v2337
        %v2339 = vpop.f32.mrb[0].mxu0
        %v2340 = vpop.f32.mrb[0].mxu0
        %v2341 = vadd.f32 %v2180, %v2340
        %v2342 = vpop.f32.mrb[0].mxu0
        %2343 = vmatprep.mubr.bf16.mxu0 0
        %2344 = vmatmul.mubr.bf16.gmra.mrb[0].mxu0 %v1104
        %v2345 = vpop.f32.mrb[0].mxu0
        %v2346 = vadd.f32 %v2185, %v2345
        %v2347 = vpop.f32.mrb[0].mxu0
        %v2348 = vpop.f32.mrb[0].mxu0
        %v2349 = vadd.f32 %v2188, %v2348
        %v2350 = vpop.f32.mrb[0].mxu0
        %2351 = vmatprep.mubr.bf16.mxu0 0
        %2352 = vmatmul.mubr.bf16.gmra.mrb[0].mxu0 %v1105
        %v2353 = vpop.f32.mrb[0].mxu0
        %v2354 = vadd.f32 %v2193, %v2353
        %v2355 = vpop.f32.mrb[0].mxu0
        %v2356 = vpop.f32.mrb[0].mxu0
        %v2357 = vadd.f32 %v2196, %v2356
        %v2358 = vpop.f32.mrb[0].mxu0
        %2359 = vmatprep.mubr.bf16.mxu0 0
        %2360 = vmatmul.mubr.bf16.gmra.mrb[0].mxu0 %v1106
        %v2361 = vpop.f32.mrb[0].mxu0
        %v2362 = vadd.f32 %v2201, %v2361
        %v2363 = vpop.f32.mrb[0].mxu0
        %v2364 = vpop.f32.mrb[0].mxu0
        %v2365 = vadd.f32 %v2204, %v2364
        %v2366 = vpop.f32.mrb[0].mxu0
        %2367 = vmatprep.mubr.bf16.mxu0 0
        %2368 = vmatmul.mubr.bf16.gmra.mrb[0].mxu0 %v1126
        %v2369 = vpop.f32.mrb[0].mxu0
        %v2370 = vadd.f32 %v2209, %v2369
        %v2371 = vpop.f32.mrb[0].mxu0
        %v2372 = vpop.f32.mrb[0].mxu0
        %v2373 = vadd.f32 %v2212, %v2372
        %v2374 = vpop.f32.mrb[0].mxu0
        %2375 = vmatprep.mubr.bf16.mxu0 0
        %2376 = vmatmul.mubr.bf16.gmra.mrb[0].mxu0 %v1146
        %v2377 = vpop.f32.mrb[0].mxu0
        %v2378 = vadd.f32 %v2217, %v2377
        %v2379 = vpop.f32.mrb[0].mxu0
        %v2380 = vpop.f32.mrb[0].mxu0
        %v2381 = vadd.f32 %v2220, %v2380
        %v2382 = vpop.f32.mrb[0].mxu0
        %2383 = vdwg.mxu0
        %v2384 = vld [vmem:[%s4] sm:$0x1]
        %v2386 = vlaneseq
        %v2387 = vshrl.u32 %v2386, 7
        %v2388 = vsub.s32 0, %v2387
        %v2389 = vrot.slane %v2384, %v2388
        %v2391 = vmul.f32 %v2258, %v2389
        %v2392 = vmul.f32 %v2261, %v2389
        %v2393 = vmul.f32 %v2266, %v2389
        %v2394 = vmul.f32 %v2269, %v2389
        %v2395 = vmul.f32 %v2274, %v2389
        %v2396 = vmul.f32 %v2277, %v2389
        %v2397 = vmul.f32 %v2282, %v2389
        %v2398 = vmul.f32 %v2285, %v2389
        %v2399 = vmul.f32 %v2290, %v2389
        %v2400 = vmul.f32 %v2293, %v2389
        %v2401 = vmul.f32 %v2298, %v2389
        %v2402 = vmul.f32 %v2301, %v2389
        %v2403 = vmul.f32 %v2306, %v2389
        %v2404 = vmul.f32 %v2309, %v2389
        %v2405 = vmul.f32 %v2314, %v2389
        %v2406 = vmul.f32 %v2317, %v2389
        %v2407 = vmul.f32 %v2322, %v2389
        %v2408 = vmul.f32 %v2325, %v2389
        %v2409 = vmul.f32 %v2330, %v2389
        %v2410 = vmul.f32 %v2333, %v2389
        %v2411 = vmul.f32 %v2338, %v2389
        %v2412 = vmul.f32 %v2341, %v2389
        %v2413 = vmul.f32 %v2346, %v2389
        %v2414 = vmul.f32 %v2349, %v2389
        %v2415 = vmul.f32 %v2354, %v2389
        %v2416 = vmul.f32 %v2357, %v2389
        %v2417 = vmul.f32 %v2362, %v2389
        %v2418 = vmul.f32 %v2365, %v2389
        %v2419 = vmul.f32 %v2370, %v2389
        %v2420 = vmul.f32 %v2373, %v2389
        %v2421 = vmul.f32 %v2378, %v2389
        %v2422 = vmul.f32 %v2381, %v2389
        %v2423 = vld [vmem:[%s5] sm:$0x1]
        %v2425 = vlaneseq
        %v2426 = vshrl.u32 %v2425, 7
        %v2427 = vsub.s32 0, %v2426
        %v2428 = vrot.slane %v2423, %v2427
        %v2430 = vadd.f32 %v2391, %v2428
        %v2431 = vadd.f32 %v2392, %v2428
        %v2432 = vadd.f32 %v2393, %v2428
        %v2433 = vadd.f32 %v2394, %v2428
        %v2434 = vadd.f32 %v2395, %v2428
        %v2435 = vadd.f32 %v2396, %v2428
        %v2436 = vadd.f32 %v2397, %v2428
        %v2437 = vadd.f32 %v2398, %v2428
        %v2438 = vadd.f32 %v2399, %v2428
        %v2439 = vadd.f32 %v2400, %v2428
        %v2440 = vadd.f32 %v2401, %v2428
        %v2441 = vadd.f32 %v2402, %v2428
        %v2442 = vadd.f32 %v2403, %v2428
        %v2443 = vadd.f32 %v2404, %v2428
        %v2444 = vadd.f32 %v2405, %v2428
        %v2445 = vadd.f32 %v2406, %v2428
        %v2446 = vadd.f32 %v2407, %v2428
        %v2447 = vadd.f32 %v2408, %v2428
        %v2448 = vadd.f32 %v2409, %v2428
        %v2449 = vadd.f32 %v2410, %v2428
        %v2450 = vadd.f32 %v2411, %v2428
        %v2451 = vadd.f32 %v2412, %v2428
        %v2452 = vadd.f32 %v2413, %v2428
        %v2453 = vadd.f32 %v2414, %v2428
        %v2454 = vadd.f32 %v2415, %v2428
        %v2455 = vadd.f32 %v2416, %v2428
        %v2456 = vadd.f32 %v2417, %v2428
        %v2457 = vadd.f32 %v2418, %v2428
        %v2458 = vadd.f32 %v2419, %v2428
        %v2459 = vadd.f32 %v2420, %v2428
        %v2460 = vadd.f32 %v2421, %v2428
        %v2461 = vadd.f32 %v2422, %v2428
        %v2462 = vmax.f32 %v2430, 0.0
        %v2463 = vmax.f32 %v2431, 0.0
        %v2464 = vmax.f32 %v2432, 0.0
        %v2465 = vmax.f32 %v2433, 0.0
        %v2466 = vmax.f32 %v2434, 0.0
        %v2467 = vmax.f32 %v2435, 0.0
        %v2468 = vmax.f32 %v2436, 0.0
        %v2469 = vmax.f32 %v2437, 0.0
        %v2470 = vmax.f32 %v2438, 0.0
        %v2471 = vmax.f32 %v2439, 0.0
        %v2472 = vmax.f32 %v2440, 0.0
        %v2473 = vmax.f32 %v2441, 0.0
        %v2474 = vmax.f32 %v2442, 0.0
        %v2475 = vmax.f32 %v2443, 0.0
        %v2476 = vmax.f32 %v2444, 0.0
        %v2477 = vmax.f32 %v2445, 0.0
        %v2478 = vmax.f32 %v2446, 0.0
        %v2479 = vmax.f32 %v2447, 0.0
        %v2480 = vmax.f32 %v2448, 0.0
        %v2481 = vmax.f32 %v2449, 0.0
        %v2482 = vmax.f32 %v2450, 0.0
        %v2483 = vmax.f32 %v2451, 0.0
        %v2484 = vmax.f32 %v2452, 0.0
        %v2485 = vmax.f32 %v2453, 0.0
        %v2486 = vmax.f32 %v2454, 0.0
        %v2487 = vmax.f32 %v2455, 0.0
        %v2488 = vmax.f32 %v2456, 0.0
        %v2489 = vmax.f32 %v2457, 0.0
        %v2490 = vmax.f32 %v2458, 0.0
        %v2491 = vmax.f32 %v2459, 0.0
        %v2492 = vmax.f32 %v2460, 0.0
        %v2493 = vmax.f32 %v2461, 0.0
        %2494 = vst [vmem:[#allocation3] sm:$0xff] 0.0
        %2495 = vst [vmem:[#allocation3 + $0x8] sm:$0xff] 0.0
        %2496 = vst [vmem:[#allocation3 + $0x10] sm:$0x3] 0.0
        %s2497 = scalar_lea.vmem [#allocation3], 408
        %2498 = vst [vmem:[%s2497] sm:$0xff] 0.0
        %2499 = vst [vmem:[%s2497 + $0x8] sm:$0xff] 0.0
        %2500 = vst [vmem:[%s2497 + $0x10] sm:$0x3] 0.0
        %2501 = vst [vmem:[#allocation3] sm:$0x1] 0.0
        %2502 = vst [vmem:[#allocation3 + $0x18] sm:$0x1] 0.0
        %2503 = vst [vmem:[#allocation3 + $0x30] sm:$0x1] 0.0
        %2504 = vst [vmem:[#allocation3 + $0x48] sm:$0x1] 0.0
        %2505 = vst [vmem:[#allocation3 + $0x60] sm:$0x1] 0.0
        %2506 = vst [vmem:[#allocation3 + $0x78] sm:$0x1] 0.0
        %2507 = vst [vmem:[#allocation3 + $0x90] sm:$0x1] 0.0
        %2508 = vst [vmem:[#allocation3 + $0xa8] sm:$0x1] 0.0
        %2509 = vst [vmem:[#allocation3 + $0xc0] sm:$0x1] 0.0
        %2510 = vst [vmem:[#allocation3 + $0xd8] sm:$0x1] 0.0
        %2511 = vst [vmem:[#allocation3 + $0xf0] sm:$0x1] 0.0
        %2512 = vst [vmem:[#allocation3 + $0x108] sm:$0x1] 0.0
        %2513 = vst [vmem:[#allocation3 + $0x120] sm:$0x1] 0.0
        %2514 = vst [vmem:[#allocation3 + $0x138] sm:$0x1] 0.0
        %2515 = vst [vmem:[#allocation3 + $0x150] sm:$0x1] 0.0
        %2516 = vst [vmem:[#allocation3 + $0x168] sm:$0x1] 0.0
        %2517 = vst [vmem:[#allocation3 + $0x180] sm:$0x1] 0.0
        %2518 = vst [vmem:[#allocation3 + $0x198] sm:$0x1] 0.0
        %2519 = vst [vmem:[#allocation3 + $0x11] sm:$0x1] 0.0
        %2520 = vst [vmem:[#allocation3 + $0x29] sm:$0x1] 0.0
        %2521 = vst [vmem:[#allocation3 + $0x41] sm:$0x1] 0.0
        %2522 = vst [vmem:[#allocation3 + $0x59] sm:$0x1] 0.0
        %2523 = vst [vmem:[#allocation3 + $0x71] sm:$0x1] 0.0
        %2524 = vst [vmem:[#allocation3 + $0x89] sm:$0x1] 0.0
        %2525 = vst [vmem:[#allocation3 + $0xa1] sm:$0x1] 0.0
        %2526 = vst [vmem:[#allocation3 + $0xb9] sm:$0x1] 0.0
        %2527 = vst [vmem:[#allocation3 + $0xd1] sm:$0x1] 0.0
        %2528 = vst [vmem:[#allocation3 + $0xe9] sm:$0x1] 0.0
        %2529 = vst [vmem:[#allocation3 + $0x101] sm:$0x1] 0.0
        %2530 = vst [vmem:[#allocation3 + $0x119] sm:$0x1] 0.0
        %2531 = vst [vmem:[#allocation3 + $0x131] sm:$0x1] 0.0
        %2532 = vst [vmem:[#allocation3 + $0x149] sm:$0x1] 0.0
        %2533 = vst [vmem:[#allocation3 + $0x161] sm:$0x1] 0.0
        %2534 = vst [vmem:[#allocation3 + $0x179] sm:$0x1] 0.0
        %2535 = vst [vmem:[#allocation3 + $0x191] sm:$0x1] 0.0
        %2536 = vst [vmem:[#allocation3 + $0x1a9] sm:$0x1] 0.0
        %s2537 = scalar_lea.vmem [#allocation3], 24
        %2538 = vst [vmem:[%s2537 + $0x1] sm:$0xff] %v2462
        %2539 = vst [vmem:[%s2537 + $0x9] sm:$0xff] %v2463
        %2540 = vst [vmem:[%s2537 + $0x19] sm:$0xff] %v2464
        %2541 = vst [vmem:[%s2537 + $0x21] sm:$0xff] %v2465
        %2542 = vst [vmem:[%s2537 + $0x31] sm:$0xff] %v2466
        %2543 = vst [vmem:[%s2537 + $0x39] sm:$0xff] %v2467
        %2544 = vst [vmem:[%s2537 + $0x49] sm:$0xff] %v2468
        %2545 = vst [vmem:[%s2537 + $0x51] sm:$0xff] %v2469
        %2546 = vst [vmem:[%s2537 + $0x61] sm:$0xff] %v2470
        %2547 = vst [vmem:[%s2537 + $0x69] sm:$0xff] %v2471
        %2548 = vst [vmem:[%s2537 + $0x79] sm:$0xff] %v2472
        %2549 = vst [vmem:[%s2537 + $0x81] sm:$0xff] %v2473
        %2550 = vst [vmem:[%s2537 + $0x91] sm:$0xff] %v2474
        %2551 = vst [vmem:[%s2537 + $0x99] sm:$0xff] %v2475
        %2552 = vst [vmem:[%s2537 + $0xa9] sm:$0xff] %v2476
        %2553 = vst [vmem:[%s2537 + $0xb1] sm:$0xff] %v2477
        %2554 = vst [vmem:[%s2537 + $0xc1] sm:$0xff] %v2478
        %2555 = vst [vmem:[%s2537 + $0xc9] sm:$0xff] %v2479
        %2556 = vst [vmem:[%s2537 + $0xd9] sm:$0xff] %v2480
        %2557 = vst [vmem:[%s2537 + $0xe1] sm:$0xff] %v2481
        %2558 = vst [vmem:[%s2537 + $0xf1] sm:$0xff] %v2482
        %2559 = vst [vmem:[%s2537 + $0xf9] sm:$0xff] %v2483
        %2560 = vst [vmem:[%s2537 + $0x109] sm:$0xff] %v2484
        %2561 = vst [vmem:[%s2537 + $0x111] sm:$0xff] %v2485
        %2562 = vst [vmem:[%s2537 + $0x121] sm:$0xff] %v2486
        %2563 = vst [vmem:[%s2537 + $0x129] sm:$0xff] %v2487
        %2564 = vst [vmem:[%s2537 + $0x139] sm:$0xff] %v2488
        %2565 = vst [vmem:[%s2537 + $0x141] sm:$0xff] %v2489
        %2566 = vst [vmem:[%s2537 + $0x151] sm:$0xff] %v2490
        %2567 = vst [vmem:[%s2537 + $0x159] sm:$0xff] %v2491
        %2568 = vst [vmem:[%s2537 + $0x169] sm:$0xff] %v2492
        %2569 = vst [vmem:[%s2537 + $0x171] sm:$0xff] %v2493
        %v2570 = vld [vmem:[#allocation3] sm:$0xff]
        %v2571 = vld [vmem:[#allocation3 + $0x8] sm:$0xff]
        %v2572 = vld [vmem:[#allocation3 + $0x10] sm:$0x3]
        %v2573 = vld [vmem:[#allocation3 + $0x18] sm:$0xff]
        %v2574 = vld [vmem:[#allocation3 + $0x20] sm:$0xff]
        %v2575 = vld [vmem:[#allocation3 + $0x28] sm:$0x3]
        %v2576 = vld [vmem:[#allocation3 + $0x30] sm:$0xff]
        %v2577 = vld [vmem:[#allocation3 + $0x38] sm:$0xff]
        %v2578 = vld [vmem:[#allocation3 + $0x40] sm:$0x3]
        %v2579 = vld [vmem:[#allocation3 + $0x48] sm:$0xff]
        %v2580 = vld [vmem:[#allocation3 + $0x50] sm:$0xff]
        %v2581 = vld [vmem:[#allocation3 + $0x58] sm:$0x3]
        %v2582 = vld [vmem:[#allocation3 + $0x60] sm:$0xff]
        %v2583 = vld [vmem:[#allocation3 + $0x68] sm:$0xff]
        %v2584 = vld [vmem:[#allocation3 + $0x70] sm:$0x3]
        %v2585 = vld [vmem:[#allocation3 + $0x78] sm:$0xff]
        %v2586 = vld [vmem:[#allocation3 + $0x80] sm:$0xff]
        %v2587 = vld [vmem:[#allocation3 + $0x88] sm:$0x3]
        %v2588 = vld [vmem:[#allocation3 + $0x90] sm:$0xff]
        %v2589 = vld [vmem:[#allocation3 + $0x98] sm:$0xff]
        %v2590 = vld [vmem:[#allocation3 + $0xa0] sm:$0x3]
        %v2591 = vld [vmem:[#allocation3 + $0xa8] sm:$0xff]
        %v2592 = vld [vmem:[#allocation3 + $0xb0] sm:$0xff]
        %v2593 = vld [vmem:[#allocation3 + $0xb8] sm:$0x3]
        %v2594 = vld [vmem:[#allocation3 + $0xc0] sm:$0xff]
        %v2595 = vld [vmem:[#allocation3 + $0xc8] sm:$0xff]
        %v2596 = vld [vmem:[#allocation3 + $0xd0] sm:$0x3]
        %v2597 = vld [vmem:[#allocation3 + $0xd8] sm:$0xff]
        %v2598 = vld [vmem:[#allocation3 + $0xe0] sm:$0xff]
        %v2599 = vld [vmem:[#allocation3 + $0xe8] sm:$0x3]
        %v2600 = vld [vmem:[#allocation3 + $0xf0] sm:$0xff]
        %v2601 = vld [vmem:[#allocation3 + $0xf8] sm:$0xff]
        %v2602 = vld [vmem:[#allocation3 + $0x100] sm:$0x3]
        %v2603 = vld [vmem:[#allocation3 + $0x108] sm:$0xff]
        %v2604 = vld [vmem:[#allocation3 + $0x110] sm:$0xff]
        %v2605 = vld [vmem:[#allocation3 + $0x118] sm:$0x3]
        %v2606 = vld [vmem:[#allocation3 + $0x120] sm:$0xff]
        %v2607 = vld [vmem:[#allocation3 + $0x128] sm:$0xff]
        %v2608 = vld [vmem:[#allocation3 + $0x130] sm:$0x3]
        %v2609 = vld [vmem:[#allocation3 + $0x138] sm:$0xff]
        %v2610 = vld [vmem:[#allocation3 + $0x140] sm:$0xff]
        %v2611 = vld [vmem:[#allocation3 + $0x148] sm:$0x3]
        %v2612 = vld [vmem:[#allocation3 + $0x150] sm:$0xff]
        %v2613 = vld [vmem:[#allocation3 + $0x158] sm:$0xff]
        %v2614 = vld [vmem:[#allocation3 + $0x160] sm:$0x3]
        %v2615 = vld [vmem:[#allocation3 + $0x168] sm:$0xff]
        %v2616 = vld [vmem:[#allocation3 + $0x170] sm:$0xff]
        %v2617 = vld [vmem:[#allocation3 + $0x178] sm:$0x3]
        %v2618 = vld [vmem:[#allocation3 + $0x180] sm:$0xff]
        %v2619 = vld [vmem:[#allocation3 + $0x188] sm:$0xff]
        %v2620 = vld [vmem:[#allocation3 + $0x190] sm:$0x3]
        %v2621 = vld [vmem:[#allocation3 + $0x198] sm:$0xff]
        %v2622 = vld [vmem:[#allocation3 + $0x1a0] sm:$0xff]
        %v2623 = vld [vmem:[#allocation3 + $0x1a8] sm:$0x3]
        %v2624 = vld [vmem:[#allocation9] sm:$0xf]
        %v2625 = vld [vmem:[#allocation9 + $0x4] sm:$0xf]
        %v2626 = vld [vmem:[#allocation9 + $0x8] sm:$0xf]
        %v2627 = vld [vmem:[#allocation9 + $0xc] sm:$0xf]
        %v2628 = vld [vmem:[#allocation9 + $0x10] sm:$0xf]
        %v2629 = vld [vmem:[#allocation9 + $0x14] sm:$0xf]
        %v2630 = vld [vmem:[#allocation9 + $0x18] sm:$0xf]
        %v2631 = vld [vmem:[#allocation9 + $0x1c] sm:$0xf]
        %v2632 = vld [vmem:[#allocation9 + $0x20] sm:$0xf]
        %v2633 = vld [vmem:[#allocation9 + $0x24] sm:$0xf]
        %v2634 = vld [vmem:[#allocation9 + $0x28] sm:$0xf]
        %v2635 = vld [vmem:[#allocation9 + $0x2c] sm:$0xf]
        %v2636 = vld [vmem:[#allocation9 + $0x30] sm:$0xf]
        %v2637 = vld [vmem:[#allocation9 + $0x34] sm:$0xf]
        %v2638 = vld [vmem:[#allocation9 + $0x38] sm:$0xf]
        %v2639 = vld [vmem:[#allocation9 + $0x3c] sm:$0xf]
        %v2640 = vld [vmem:[#allocation9 + $0x40] sm:$0xf]
        %v2641 = vld [vmem:[#allocation9 + $0x44] sm:$0xf]
        %v2642 = vld [vmem:[#allocation9 + $0x48] sm:$0xf]
        %v2643 = vld [vmem:[#allocation9 + $0x4c] sm:$0xf]
        %v2644 = vld [vmem:[#allocation9 + $0x50] sm:$0xf]
        %v2645 = vld [vmem:[#allocation9 + $0x54] sm:$0xf]
        %v2646 = vld [vmem:[#allocation9 + $0x58] sm:$0xf]
        %v2647 = vld [vmem:[#allocation9 + $0x5c] sm:$0xf]
        %v2648 = vld [vmem:[#allocation9 + $0x60] sm:$0xf]
        %v2649 = vld [vmem:[#allocation9 + $0x64] sm:$0xf]
        %v2650 = vld [vmem:[#allocation9 + $0x68] sm:$0xf]
        %v2651 = vld [vmem:[#allocation9 + $0x6c] sm:$0xf]
        %v2652 = vld [vmem:[#allocation9 + $0x70] sm:$0xf]
        %v2653 = vld [vmem:[#allocation9 + $0x74] sm:$0xf]
        %v2654 = vld [vmem:[#allocation9 + $0x78] sm:$0xf]
        %v2655 = vld [vmem:[#allocation9 + $0x7c] sm:$0xf]
        %v2656 = vld [vmem:[#allocation9 + $0x80] sm:$0xf]
        %v2657 = vld [vmem:[#allocation9 + $0x84] sm:$0xf]
        %v2658 = vld [vmem:[#allocation9 + $0x88] sm:$0xf]
        %v2659 = vld [vmem:[#allocation9 + $0x8c] sm:$0xf]
        %v2660 = vld [vmem:[#allocation9 + $0x90] sm:$0xf]
        %v2661 = vld [vmem:[#allocation9 + $0x94] sm:$0xf]
        %v2662 = vld [vmem:[#allocation9 + $0x98] sm:$0xf]
        %v2663 = vld [vmem:[#allocation9 + $0x9c] sm:$0xf]
        %v2664 = vld [vmem:[#allocation9 + $0xa0] sm:$0xf]
        %v2665 = vld [vmem:[#allocation9 + $0xa4] sm:$0xf]
        %v2666 = vld [vmem:[#allocation9 + $0xa8] sm:$0xf]
        %v2667 = vld [vmem:[#allocation9 + $0xac] sm:$0xf]
        %v2668 = vld [vmem:[#allocation9 + $0xb0] sm:$0xf]
        %v2669 = vld [vmem:[#allocation9 + $0xb4] sm:$0xf]
        %v2670 = vld [vmem:[#allocation9 + $0xb8] sm:$0xf]
        %v2671 = vld [vmem:[#allocation9 + $0xbc] sm:$0xf]
        %v2672 = vld [vmem:[#allocation9 + $0xc0] sm:$0xf]
        %v2673 = vld [vmem:[#allocation9 + $0xc4] sm:$0xf]
        %v2674 = vld [vmem:[#allocation9 + $0xc8] sm:$0xf]
        %v2675 = vld [vmem:[#allocation9 + $0xcc] sm:$0xf]
        %v2676 = vld [vmem:[#allocation9 + $0xd0] sm:$0xf]
        %v2677 = vld [vmem:[#allocation9 + $0xd4] sm:$0xf]
        %v2678 = vld [vmem:[#allocation9 + $0xd8] sm:$0xf]
        %v2679 = vld [vmem:[#allocation9 + $0xdc] sm:$0xf]
        %v2680 = vld [vmem:[#allocation9 + $0xe0] sm:$0xf]
        %v2681 = vld [vmem:[#allocation9 + $0xe4] sm:$0xf]
        %v2682 = vld [vmem:[#allocation9 + $0xe8] sm:$0xf]
        %v2683 = vld [vmem:[#allocation9 + $0xec] sm:$0xf]
        %v2684 = vld [vmem:[#allocation9 + $0xf0] sm:$0xf]
        %v2685 = vld [vmem:[#allocation9 + $0xf4] sm:$0xf]
        %v2686 = vld [vmem:[#allocation9 + $0xf8] sm:$0xf]
        %v2687 = vld [vmem:[#allocation9 + $0xfc] sm:$0xf]
        %v2688 = vld [vmem:[#allocation9 + $0x100] sm:$0xf]
        %v2689 = vld [vmem:[#allocation9 + $0x104] sm:$0xf]
        %v2690 = vld [vmem:[#allocation9 + $0x108] sm:$0xf]
        %v2691 = vld [vmem:[#allocation9 + $0x10c] sm:$0xf]
        %v2692 = vld [vmem:[#allocation9 + $0x110] sm:$0xf]
        %v2693 = vld [vmem:[#allocation9 + $0x114] sm:$0xf]
        %v2694 = vld [vmem:[#allocation9 + $0x118] sm:$0xf]
        %v2695 = vld [vmem:[#allocation9 + $0x11c] sm:$0xf]
        %v2696 = vld [vmem:[#allocation9 + $0x120] sm:$0xf]
        %v2697 = vld [vmem:[#allocation9 + $0x124] sm:$0xf]
        %v2698 = vld [vmem:[#allocation9 + $0x128] sm:$0xf]
        %v2699 = vld [vmem:[#allocation9 + $0x12c] sm:$0xf]
        %v2700 = vld [vmem:[#allocation9 + $0x130] sm:$0xf]
        %v2701 = vld [vmem:[#allocation9 + $0x134] sm:$0xf]
        %v2702 = vld [vmem:[#allocation9 + $0x138] sm:$0xf]
        %v2703 = vld [vmem:[#allocation9 + $0x13c] sm:$0xf]
        %v2704 = vld [vmem:[#allocation9 + $0x140] sm:$0xf]
        %v2705 = vld [vmem:[#allocation9 + $0x144] sm:$0xf]
        %v2706 = vld [vmem:[#allocation9 + $0x148] sm:$0xf]
        %v2707 = vld [vmem:[#allocation9 + $0x14c] sm:$0xf]
        %v2708 = vld [vmem:[#allocation9 + $0x150] sm:$0xf]
        %v2709 = vld [vmem:[#allocation9 + $0x154] sm:$0xf]
        %v2710 = vld [vmem:[#allocation9 + $0x158] sm:$0xf]
        %v2711 = vld [vmem:[#allocation9 + $0x15c] sm:$0xf]
        %v2712 = vld [vmem:[#allocation9 + $0x160] sm:$0xf]
        %v2713 = vld [vmem:[#allocation9 + $0x164] sm:$0xf]
        %v2714 = vld [vmem:[#allocation9 + $0x168] sm:$0xf]
        %v2715 = vld [vmem:[#allocation9 + $0x16c] sm:$0xf]
        %v2716 = vld [vmem:[#allocation9 + $0x170] sm:$0xf]
        %v2717 = vld [vmem:[#allocation9 + $0x174] sm:$0xf]
        %v2718 = vld [vmem:[#allocation9 + $0x178] sm:$0xf]
        %v2719 = vld [vmem:[#allocation9 + $0x17c] sm:$0xf]
        %v2720 = vld [vmem:[#allocation9 + $0x180] sm:$0xf]
        %v2721 = vld [vmem:[#allocation9 + $0x184] sm:$0xf]
        %v2722 = vld [vmem:[#allocation9 + $0x188] sm:$0xf]
        %v2723 = vld [vmem:[#allocation9 + $0x18c] sm:$0xf]
        %v2724 = vld [vmem:[#allocation9 + $0x190] sm:$0xf]
        %v2725 = vld [vmem:[#allocation9 + $0x194] sm:$0xf]
        %v2726 = vld [vmem:[#allocation9 + $0x198] sm:$0xf]
        %v2727 = vld [vmem:[#allocation9 + $0x19c] sm:$0xf]
        %v2728 = vld [vmem:[#allocation9 + $0x1a0] sm:$0xf]
        %v2729 = vld [vmem:[#allocation9 + $0x1a4] sm:$0xf]
        %v2730 = vld [vmem:[#allocation9 + $0x1a8] sm:$0xf]
        %v2731 = vld [vmem:[#allocation9 + $0x1ac] sm:$0xf]
        %v2732 = vld [vmem:[#allocation9 + $0x1b0] sm:$0xf]
        %v2733 = vld [vmem:[#allocation9 + $0x1b4] sm:$0xf]
        %v2734 = vld [vmem:[#allocation9 + $0x1b8] sm:$0xf]
        %v2735 = vld [vmem:[#allocation9 + $0x1bc] sm:$0xf]
        %v2736 = vld [vmem:[#allocation9 + $0x1c0] sm:$0xf]
        %v2737 = vld [vmem:[#allocation9 + $0x1c4] sm:$0xf]
        %v2738 = vld [vmem:[#allocation9 + $0x1c8] sm:$0xf]
        %v2739 = vld [vmem:[#allocation9 + $0x1cc] sm:$0xf]
        %v2740 = vld [vmem:[#allocation9 + $0x1d0] sm:$0xf]
        %v2741 = vld [vmem:[#allocation9 + $0x1d4] sm:$0xf]
        %v2742 = vld [vmem:[#allocation9 + $0x1d8] sm:$0xf]
        %v2743 = vld [vmem:[#allocation9 + $0x1dc] sm:$0xf]
        %v2744 = vld [vmem:[#allocation9 + $0x1e0] sm:$0xf]
        %v2745 = vld [vmem:[#allocation9 + $0x1e4] sm:$0xf]
        %v2746 = vld [vmem:[#allocation9 + $0x1e8] sm:$0xf]
        %v2747 = vld [vmem:[#allocation9 + $0x1ec] sm:$0xf]
        %v2748 = vld [vmem:[#allocation9 + $0x1f0] sm:$0xf]
        %v2749 = vld [vmem:[#allocation9 + $0x1f4] sm:$0xf]
        %v2750 = vld [vmem:[#allocation9 + $0x1f8] sm:$0xf]
        %v2751 = vld [vmem:[#allocation9 + $0x1fc] sm:$0xf]
        %v2752 = vld [vmem:[#allocation9 + $0x200] sm:$0xf]
        %v2753 = vld [vmem:[#allocation9 + $0x204] sm:$0xf]
        %v2754 = vld [vmem:[#allocation9 + $0x208] sm:$0xf]
        %v2755 = vld [vmem:[#allocation9 + $0x20c] sm:$0xf]
        %v2756 = vld [vmem:[#allocation9 + $0x210] sm:$0xf]
        %v2757 = vld [vmem:[#allocation9 + $0x214] sm:$0xf]
        %v2758 = vld [vmem:[#allocation9 + $0x218] sm:$0xf]
        %v2759 = vld [vmem:[#allocation9 + $0x21c] sm:$0xf]
        %v2760 = vld [vmem:[#allocation9 + $0x220] sm:$0xf]
        %v2761 = vld [vmem:[#allocation9 + $0x224] sm:$0xf]
        %v2762 = vld [vmem:[#allocation9 + $0x228] sm:$0xf]
        %v2763 = vld [vmem:[#allocation9 + $0x22c] sm:$0xf]
        %v2764 = vld [vmem:[#allocation9 + $0x230] sm:$0xf]
        %v2765 = vld [vmem:[#allocation9 + $0x234] sm:$0xf]
        %v2766 = vld [vmem:[#allocation9 + $0x238] sm:$0xf]
        %v2767 = vld [vmem:[#allocation9 + $0x23c] sm:$0xf]
        %v2768 = vpack.c.bf16 %v2571, %v2570
        %v2769 = vpack.c.bf16 %v2574, %v2573
        %v2770 = vpack.c.bf16 %v2577, %v2576
        %v2771 = vpack.c.bf16 %v2580, %v2579
        %v2772 = vpack.c.bf16 %v2583, %v2582
        %v2773 = vpack.c.bf16 %v2586, %v2585
        %v2774 = vpack.c.bf16 %v2589, %v2588
        %v2775 = vpack.c.bf16 %v2592, %v2591
        %v2776 = vpack.c.bf16 %v2595, %v2594
        %v2777 = vpack.c.bf16 %v2598, %v2597
        %v2778 = vpack.c.bf16 %v2601, %v2600
        %v2779 = vpack.c.bf16 %v2604, %v2603
        %v2780 = vpack.c.bf16 %v2607, %v2606
        %v2781 = vpack.c.bf16 %v2610, %v2609
        %v2782 = vpack.c.bf16 %v2613, %v2612
        %v2783 = vpack.c.bf16 %v2616, %v2615
        %v2832 = vrot.slane %v2570, 1
        %v2833 = vrot.slane %v2571, 1
        %v2834 = vsel %vm849, %v2832, %v2833
        %v2835 = vrot.slane %v2572, 1
        %v2836 = vsel %vm849, %v2833, %v2835
        %v2837 = vrot.slane %v2573, 1
        %v2838 = vrot.slane %v2574, 1
        %v2839 = vsel %vm849, %v2837, %v2838
        %v2840 = vrot.slane %v2575, 1
        %v2841 = vsel %vm849, %v2838, %v2840
        %v2842 = vrot.slane %v2576, 1
        %v2843 = vrot.slane %v2577, 1
        %v2844 = vsel %vm849, %v2842, %v2843
        %v2845 = vrot.slane %v2578, 1
        %v2846 = vsel %vm849, %v2843, %v2845
        %v2847 = vrot.slane %v2579, 1
        %v2848 = vrot.slane %v2580, 1
        %v2849 = vsel %vm849, %v2847, %v2848
        %v2850 = vrot.slane %v2581, 1
        %v2851 = vsel %vm849, %v2848, %v2850
        %v2852 = vrot.slane %v2582, 1
        %v2853 = vrot.slane %v2583, 1
        %v2854 = vsel %vm849, %v2852, %v2853
        %v2855 = vrot.slane %v2584, 1
        %v2856 = vsel %vm849, %v2853, %v2855
        %v2857 = vrot.slane %v2585, 1
        %v2858 = vrot.slane %v2586, 1
        %v2859 = vsel %vm849, %v2857, %v2858
        %v2860 = vrot.slane %v2587, 1
        %v2861 = vsel %vm849, %v2858, %v2860
        %v2862 = vrot.slane %v2588, 1
        %v2863 = vrot.slane %v2589, 1
        %v2864 = vsel %vm849, %v2862, %v2863
        %v2865 = vrot.slane %v2590, 1
        %v2866 = vsel %vm849, %v2863, %v2865
        %v2867 = vrot.slane %v2591, 1
        %v2868 = vrot.slane %v2592, 1
        %v2869 = vsel %vm849, %v2867, %v2868
        %v2870 = vrot.slane %v2593, 1
        %v2871 = vsel %vm849, %v2868, %v2870
        %v2872 = vrot.slane %v2594, 1
        %v2873 = vrot.slane %v2595, 1
        %v2874 = vsel %vm849, %v2872, %v2873
        %v2875 = vrot.slane %v2596, 1
        %v2876 = vsel %vm849, %v2873, %v2875
        %v2877 = vrot.slane %v2597, 1
        %v2878 = vrot.slane %v2598, 1
        %v2879 = vsel %vm849, %v2877, %v2878
        %v2880 = vrot.slane %v2599, 1
        %v2881 = vsel %vm849, %v2878, %v2880
        %v2882 = vrot.slane %v2600, 1
        %v2883 = vrot.slane %v2601, 1
        %v2884 = vsel %vm849, %v2882, %v2883
        %v2885 = vrot.slane %v2602, 1
        %v2886 = vsel %vm849, %v2883, %v2885
        %v2887 = vrot.slane %v2603, 1
        %v2888 = vrot.slane %v2604, 1
        %v2889 = vsel %vm849, %v2887, %v2888
        %v2890 = vrot.slane %v2605, 1
        %v2891 = vsel %vm849, %v2888, %v2890
        %v2892 = vrot.slane %v2606, 1
        %v2893 = vrot.slane %v2607, 1
        %v2894 = vsel %vm849, %v2892, %v2893
        %v2895 = vrot.slane %v2608, 1
        %v2896 = vsel %vm849, %v2893, %v2895
        %v2897 = vrot.slane %v2609, 1
        %v2898 = vrot.slane %v2610, 1
        %v2899 = vsel %vm849, %v2897, %v2898
        %v2900 = vrot.slane %v2611, 1
        %v2901 = vsel %vm849, %v2898, %v2900
        %v2902 = vrot.slane %v2612, 1
        %v2903 = vrot.slane %v2613, 1
        %v2904 = vsel %vm849, %v2902, %v2903
        %v2905 = vrot.slane %v2614, 1
        %v2906 = vsel %vm849, %v2903, %v2905
        %v2907 = vrot.slane %v2615, 1
        %v2908 = vrot.slane %v2616, 1
        %v2909 = vsel %vm849, %v2907, %v2908
        %v2910 = vrot.slane %v2617, 1
        %v2911 = vsel %vm849, %v2908, %v2910
        %v2944 = vpack.c.bf16 %v2836, %v2834
        %v2945 = vpack.c.bf16 %v2841, %v2839
        %v2946 = vpack.c.bf16 %v2846, %v2844
        %v2947 = vpack.c.bf16 %v2851, %v2849
        %v2948 = vpack.c.bf16 %v2856, %v2854
        %v2949 = vpack.c.bf16 %v2861, %v2859
        %v2950 = vpack.c.bf16 %v2866, %v2864
        %v2951 = vpack.c.bf16 %v2871, %v2869
        %v2952 = vpack.c.bf16 %v2876, %v2874
        %v2953 = vpack.c.bf16 %v2881, %v2879
        %v2954 = vpack.c.bf16 %v2886, %v2884
        %v2955 = vpack.c.bf16 %v2891, %v2889
        %v2956 = vpack.c.bf16 %v2896, %v2894
        %v2957 = vpack.c.bf16 %v2901, %v2899
        %v2958 = vpack.c.bf16 %v2906, %v2904
        %v2959 = vpack.c.bf16 %v2911, %v2909
        %v2960 = vrot.slane %v2570, 2
        %v2961 = vrot.slane %v2571, 2
        %v2962 = vsel %vm978, %v2960, %v2961
        %v2963 = vrot.slane %v2572, 2
        %v2964 = vsel %vm978, %v2961, %v2963
        %v2965 = vrot.slane %v2573, 2
        %v2966 = vrot.slane %v2574, 2
        %v2967 = vsel %vm978, %v2965, %v2966
        %v2968 = vrot.slane %v2575, 2
        %v2969 = vsel %vm978, %v2966, %v2968
        %v2970 = vrot.slane %v2576, 2
        %v2971 = vrot.slane %v2577, 2
        %v2972 = vsel %vm978, %v2970, %v2971
        %v2973 = vrot.slane %v2578, 2
        %v2974 = vsel %vm978, %v2971, %v2973
        %v2975 = vrot.slane %v2579, 2
        %v2976 = vrot.slane %v2580, 2
        %v2977 = vsel %vm978, %v2975, %v2976
        %v2978 = vrot.slane %v2581, 2
        %v2979 = vsel %vm978, %v2976, %v2978
        %v2980 = vrot.slane %v2582, 2
        %v2981 = vrot.slane %v2583, 2
        %v2982 = vsel %vm978, %v2980, %v2981
        %v2983 = vrot.slane %v2584, 2
        %v2984 = vsel %vm978, %v2981, %v2983
        %v2985 = vrot.slane %v2585, 2
        %v2986 = vrot.slane %v2586, 2
        %v2987 = vsel %vm978, %v2985, %v2986
        %v2988 = vrot.slane %v2587, 2
        %v2989 = vsel %vm978, %v2986, %v2988
        %v2990 = vrot.slane %v2588, 2
        %v2991 = vrot.slane %v2589, 2
        %v2992 = vsel %vm978, %v2990, %v2991
        %v2993 = vrot.slane %v2590, 2
        %v2994 = vsel %vm978, %v2991, %v2993
        %v2995 = vrot.slane %v2591, 2
        %v2996 = vrot.slane %v2592, 2
        %v2997 = vsel %vm978, %v2995, %v2996
        %v2998 = vrot.slane %v2593, 2
        %v2999 = vsel %vm978, %v2996, %v2998
        %v3000 = vrot.slane %v2594, 2
        %v3001 = vrot.slane %v2595, 2
        %v3002 = vsel %vm978, %v3000, %v3001
        %v3003 = vrot.slane %v2596, 2
        %v3004 = vsel %vm978, %v3001, %v3003
        %v3005 = vrot.slane %v2597, 2
        %v3006 = vrot.slane %v2598, 2
        %v3007 = vsel %vm978, %v3005, %v3006
        %v3008 = vrot.slane %v2599, 2
        %v3009 = vsel %vm978, %v3006, %v3008
        %v3010 = vrot.slane %v2600, 2
        %v3011 = vrot.slane %v2601, 2
        %v3012 = vsel %vm978, %v3010, %v3011
        %v3013 = vrot.slane %v2602, 2
        %v3014 = vsel %vm978, %v3011, %v3013
        %v3015 = vrot.slane %v2603, 2
        %v3016 = vrot.slane %v2604, 2
        %v3017 = vsel %vm978, %v3015, %v3016
        %v3018 = vrot.slane %v2605, 2
        %v3019 = vsel %vm978, %v3016, %v3018
        %v3020 = vrot.slane %v2606, 2
        %v3021 = vrot.slane %v2607, 2
        %v3022 = vsel %vm978, %v3020, %v3021
        %v3023 = vrot.slane %v2608, 2
        %v3024 = vsel %vm978, %v3021, %v3023
        %v3025 = vrot.slane %v2609, 2
        %v3026 = vrot.slane %v2610, 2
        %v3027 = vsel %vm978, %v3025, %v3026
        %v3028 = vrot.slane %v2611, 2
        %v3029 = vsel %vm978, %v3026, %v3028
        %v3030 = vrot.slane %v2612, 2
        %v3031 = vrot.slane %v2613, 2
        %v3032 = vsel %vm978, %v3030, %v3031
        %v3033 = vrot.slane %v2614, 2
        %v3034 = vsel %vm978, %v3031, %v3033
        %v3035 = vrot.slane %v2615, 2
        %v3036 = vrot.slane %v2616, 2
        %v3037 = vsel %vm978, %v3035, %v3036
        %v3038 = vrot.slane %v2617, 2
        %v3039 = vsel %vm978, %v3036, %v3038
        %v3072 = vpack.c.bf16 %v2964, %v2962
        %v3073 = vpack.c.bf16 %v2969, %v2967
        %v3074 = vpack.c.bf16 %v2974, %v2972
        %v3075 = vpack.c.bf16 %v2979, %v2977
        %v3076 = vpack.c.bf16 %v2984, %v2982
        %v3077 = vpack.c.bf16 %v2989, %v2987
        %v3078 = vpack.c.bf16 %v2994, %v2992
        %v3079 = vpack.c.bf16 %v2999, %v2997
        %v3080 = vpack.c.bf16 %v3004, %v3002
        %v3081 = vpack.c.bf16 %v3009, %v3007
        %v3082 = vpack.c.bf16 %v3014, %v3012
        %v3083 = vpack.c.bf16 %v3019, %v3017
        %v3084 = vpack.c.bf16 %v3024, %v3022
        %v3085 = vpack.c.bf16 %v3029, %v3027
        %v3086 = vpack.c.bf16 %v3034, %v3032
        %v3087 = vpack.c.bf16 %v3039, %v3037
        %v3088 = vpack.c.bf16 %v2619, %v2618
        %v3092 = vrot.slane %v2618, 1
        %v3093 = vrot.slane %v2619, 1
        %v3094 = vsel %vm849, %v3092, %v3093
        %v3095 = vrot.slane %v2620, 1
        %v3096 = vsel %vm849, %v3093, %v3095
        %v3099 = vpack.c.bf16 %v3096, %v3094
        %v3100 = vrot.slane %v2618, 2
        %v3101 = vrot.slane %v2619, 2
        %v3102 = vsel %vm978, %v3100, %v3101
        %v3103 = vrot.slane %v2620, 2
        %v3104 = vsel %vm978, %v3101, %v3103
        %v3107 = vpack.c.bf16 %v3104, %v3102
        %v3108 = vpack.c.bf16 %v2622, %v2621
        %v3112 = vrot.slane %v2621, 1
        %v3113 = vrot.slane %v2622, 1
        %v3114 = vsel %vm849, %v3112, %v3113
        %v3115 = vrot.slane %v2623, 1
        %v3116 = vsel %vm849, %v3113, %v3115
        %v3119 = vpack.c.bf16 %v3116, %v3114
        %v3120 = vrot.slane %v2621, 2
        %v3121 = vrot.slane %v2622, 2
        %v3122 = vsel %vm978, %v3120, %v3121
        %v3123 = vrot.slane %v2623, 2
        %v3124 = vsel %vm978, %v3121, %v3123
        %v3127 = vpack.c.bf16 %v3124, %v3122
        %v3128 = vpack.c.bf16 %v480, %v479
        %v3129 = vpack.c.bf16 %v482, %v481
        %v3130 = vpack.c.bf16 %v484, %v483
        %v3131 = vpack.c.bf16 %v486, %v485
        %v3132 = vpack.c.bf16 %v488, %v487
        %v3133 = vpack.c.bf16 %v490, %v489
        %v3134 = vpack.c.bf16 %v492, %v491
        %v3135 = vpack.c.bf16 %v494, %v493
        %v3136 = vpack.c.bf16 %v496, %v495
        %v3137 = vpack.c.bf16 %v498, %v497
        %v3138 = vpack.c.bf16 %v500, %v499
        %v3139 = vpack.c.bf16 %v502, %v501
        %v3140 = vpack.c.bf16 %v504, %v503
        %v3141 = vpack.c.bf16 %v506, %v505
        %v3142 = vpack.c.bf16 %v508, %v507
        %v3143 = vpack.c.bf16 %v510, %v509
        %v3144 = vld [vmem:[#allocation10] sm:$0xf]
        %v3145 = vld [vmem:[#allocation10 + $0x4] sm:$0xf]
        %v3146 = vld [vmem:[#allocation10 + $0x8] sm:$0xf]
        %v3147 = vld [vmem:[#allocation10 + $0xc] sm:$0xf]
        %v3148 = vld [vmem:[#allocation10 + $0x10] sm:$0xf]
        %v3149 = vld [vmem:[#allocation10 + $0x14] sm:$0xf]
        %v3150 = vld [vmem:[#allocation10 + $0x18] sm:$0xf]
        %v3151 = vld [vmem:[#allocation10 + $0x1c] sm:$0xf]
        %v3152 = vld [vmem:[#allocation10 + $0x20] sm:$0xf]
        %v3153 = vld [vmem:[#allocation10 + $0x24] sm:$0xf]
        %v3154 = vld [vmem:[#allocation10 + $0x28] sm:$0xf]
        %v3155 = vld [vmem:[#allocation10 + $0x2c] sm:$0xf]
        %v3156 = vld [vmem:[#allocation10 + $0x30] sm:$0xf]
        %v3157 = vld [vmem:[#allocation10 + $0x34] sm:$0xf]
        %v3158 = vld [vmem:[#allocation10 + $0x38] sm:$0xf]
        %v3159 = vld [vmem:[#allocation10 + $0x3c] sm:$0xf]
        %v3176 = vunpack.c.l.b16 %v3144
        %v3177 = vunpack.c.l.b16 %v3145
        %v3178 = vunpack.c.l.b16 %v3146
        %v3179 = vunpack.c.l.b16 %v3147
        %v3180 = vunpack.c.l.b16 %v3148
        %v3181 = vunpack.c.l.b16 %v3149
        %v3182 = vunpack.c.l.b16 %v3150
        %v3183 = vunpack.c.l.b16 %v3151
        %v3184 = vunpack.c.l.b16 %v3152
        %v3185 = vunpack.c.l.b16 %v3153
        %v3186 = vunpack.c.l.b16 %v3154
        %v3187 = vunpack.c.l.b16 %v3155
        %v3188 = vunpack.c.l.b16 %v3156
        %v3189 = vunpack.c.l.b16 %v3157
        %v3190 = vunpack.c.l.b16 %v3158
        %v3191 = vunpack.c.l.b16 %v3159
        %v3192 = vpack.c.b16 %v3177, %v3176
        %v3193 = vpack.c.b16 %v3179, %v3178
        %v3194 = vpack.c.b16 %v3181, %v3180
        %v3195 = vpack.c.b16 %v3183, %v3182
        %v3196 = vpack.c.b16 %v3185, %v3184
        %v3197 = vpack.c.b16 %v3187, %v3186
        %v3198 = vpack.c.b16 %v3189, %v3188
        %v3199 = vpack.c.b16 %v3191, %v3190
        %3208 = vmatprep.subr.bf16.mxu0 0
        %3209 = vmatpush1.bf16.msra.mxu0 %v3192
        %3210 = vmatprep.subr.bf16.mxu0 0
        %3211 = vmatpush1.bf16.msra.mxu0 %v3193
        %3212 = vmatprep.subr.bf16.mxu0 0
        %3213 = vmatpush1.bf16.msra.mxu0 %v3194
        %3214 = vmatprep.subr.bf16.mxu0 0
        %3215 = vmatpush1.bf16.msra.mxu0 %v3195
        %3216 = vmatprep.subr.bf16.mxu0 0
        %3217 = vmatpush1.bf16.msra.mxu0 %v3196
        %3218 = vmatprep.subr.bf16.mxu0 0
        %3219 = vmatpush1.bf16.msra.mxu0 %v3197
        %3220 = vmatprep.subr.bf16.mxu0 0
        %3221 = vmatpush1.bf16.msra.mxu0 %v3198
        %3222 = vmatprep.subr.bf16.mxu0 0
        %3223 = vmatpush1.bf16.msra.mxu0 %v3199
        %3224 = vmatprep.subr.bf16.mxu0 0
        %3225 = vmatpush1.bf16.msra.mxu0 0
        %3226 = vmatprep.subr.bf16.mxu0 0
        %3227 = vmatpush1.bf16.msra.mxu0 0
        %3228 = vmatprep.subr.bf16.mxu0 0
        %3229 = vmatpush1.bf16.msra.mxu0 0
        %3230 = vmatprep.subr.bf16.mxu0 0
        %3231 = vmatpush1.bf16.msra.mxu0 0
        %3232 = vmatprep.subr.bf16.mxu0 0
        %3233 = vmatpush1.bf16.msra.mxu0 0
        %3234 = vmatprep.subr.bf16.mxu0 0
        %3235 = vmatpush1.bf16.msra.mxu0 0
        %3236 = vmatprep.subr.bf16.mxu0 0
        %3237 = vmatpush1.bf16.msra.mxu0 0
        %3238 = vmatprep.subr.bf16.mxu0 0
        %3239 = vmatpush1.bf16.msra.mxu0 0
        %3240 = vmatprep.mubr.bf16.mxu0 0
        %3241 = vmatmul.mubr.bf16.gmra.mrb[0].mxu0 %v3128
        %v3242 = vpop.f32.mrb[0].mxu0
        %v3243 = vadd.f32 0.0, %v3242
        %v3244 = vpop.f32.mrb[0].mxu0
        %v3245 = vpop.f32.mrb[0].mxu0
        %v3246 = vadd.f32 0.0, %v3245
        %v3247 = vpop.f32.mrb[0].mxu0
        %3248 = vmatprep.mubr.bf16.mxu0 0
        %3249 = vmatmul.mubr.bf16.gmra.mrb[0].mxu0 %v3129
        %v3250 = vpop.f32.mrb[0].mxu0
        %v3251 = vadd.f32 0.0, %v3250
        %v3252 = vpop.f32.mrb[0].mxu0
        %v3253 = vpop.f32.mrb[0].mxu0
        %v3254 = vadd.f32 0.0, %v3253
        %v3255 = vpop.f32.mrb[0].mxu0
        %3256 = vmatprep.mubr.bf16.mxu0 0
        %3257 = vmatmul.mubr.bf16.gmra.mrb[0].mxu0 %v3130
        %v3258 = vpop.f32.mrb[0].mxu0
        %v3259 = vadd.f32 0.0, %v3258
        %v3260 = vpop.f32.mrb[0].mxu0
        %v3261 = vpop.f32.mrb[0].mxu0
        %v3262 = vadd.f32 0.0, %v3261
        %v3263 = vpop.f32.mrb[0].mxu0
        %3264 = vmatprep.mubr.bf16.mxu0 0
        %3265 = vmatmul.mubr.bf16.gmra.mrb[0].mxu0 %v3131
        %v3266 = vpop.f32.mrb[0].mxu0
        %v3267 = vadd.f32 0.0, %v3266
        %v3268 = vpop.f32.mrb[0].mxu0
        %v3269 = vpop.f32.mrb[0].mxu0
        %v3270 = vadd.f32 0.0, %v3269
        %v3271 = vpop.f32.mrb[0].mxu0
        %3272 = vmatprep.mubr.bf16.mxu0 0
        %3273 = vmatmul.mubr.bf16.gmra.mrb[0].mxu0 %v3132
        %v3274 = vpop.f32.mrb[0].mxu0
        %v3275 = vadd.f32 0.0, %v3274
        %v3276 = vpop.f32.mrb[0].mxu0
        %v3277 = vpop.f32.mrb[0].mxu0
        %v3278 = vadd.f32 0.0, %v3277
        %v3279 = vpop.f32.mrb[0].mxu0
        %3280 = vmatprep.mubr.bf16.mxu0 0
        %3281 = vmatmul.mubr.bf16.gmra.mrb[0].mxu0 %v3133
        %v3282 = vpop.f32.mrb[0].mxu0
        %v3283 = vadd.f32 0.0, %v3282
        %v3284 = vpop.f32.mrb[0].mxu0
        %v3285 = vpop.f32.mrb[0].mxu0
        %v3286 = vadd.f32 0.0, %v3285
        %v3287 = vpop.f32.mrb[0].mxu0
        %3288 = vmatprep.mubr.bf16.mxu0 0
        %3289 = vmatmul.mubr.bf16.gmra.mrb[0].mxu0 %v3134
        %v3290 = vpop.f32.mrb[0].mxu0
        %v3291 = vadd.f32 0.0, %v3290
        %v3292 = vpop.f32.mrb[0].mxu0
        %v3293 = vpop.f32.mrb[0].mxu0
        %v3294 = vadd.f32 0.0, %v3293
        %v3295 = vpop.f32.mrb[0].mxu0
        %3296 = vmatprep.mubr.bf16.mxu0 0
        %3297 = vmatmul.mubr.bf16.gmra.mrb[0].mxu0 %v3135
        %v3298 = vpop.f32.mrb[0].mxu0
        %v3299 = vadd.f32 0.0, %v3298
        %v3300 = vpop.f32.mrb[0].mxu0
        %v3301 = vpop.f32.mrb[0].mxu0
        %v3302 = vadd.f32 0.0, %v3301
        %v3303 = vpop.f32.mrb[0].mxu0
        %3304 = vmatprep.mubr.bf16.mxu0 0
        %3305 = vmatmul.mubr.bf16.gmra.mrb[0].mxu0 %v3136
        %v3306 = vpop.f32.mrb[0].mxu0
        %v3307 = vadd.f32 0.0, %v3306
        %v3308 = vpop.f32.mrb[0].mxu0
        %v3309 = vpop.f32.mrb[0].mxu0
        %v3310 = vadd.f32 0.0, %v3309
        %v3311 = vpop.f32.mrb[0].mxu0
        %3312 = vmatprep.mubr.bf16.mxu0 0
        %3313 = vmatmul.mubr.bf16.gmra.mrb[0].mxu0 %v3137
        %v3314 = vpop.f32.mrb[0].mxu0
        %v3315 = vadd.f32 0.0, %v3314
        %v3316 = vpop.f32.mrb[0].mxu0
        %v3317 = vpop.f32.mrb[0].mxu0
        %v3318 = vadd.f32 0.0, %v3317
        %v3319 = vpop.f32.mrb[0].mxu0
        %3320 = vmatprep.mubr.bf16.mxu0 0
        %3321 = vmatmul.mubr.bf16.gmra.mrb[0].mxu0 %v3138
        %v3322 = vpop.f32.mrb[0].mxu0
        %v3323 = vadd.f32 0.0, %v3322
        %v3324 = vpop.f32.mrb[0].mxu0
        %v3325 = vpop.f32.mrb[0].mxu0
        %v3326 = vadd.f32 0.0, %v3325
        %v3327 = vpop.f32.mrb[0].mxu0
        %3328 = vmatprep.mubr.bf16.mxu0 0
        %3329 = vmatmul.mubr.bf16.gmra.mrb[0].mxu0 %v3139
        %v3330 = vpop.f32.mrb[0].mxu0
        %v3331 = vadd.f32 0.0, %v3330
        %v3332 = vpop.f32.mrb[0].mxu0
        %v3333 = vpop.f32.mrb[0].mxu0
        %v3334 = vadd.f32 0.0, %v3333
        %v3335 = vpop.f32.mrb[0].mxu0
        %3336 = vmatprep.mubr.bf16.mxu0 0
        %3337 = vmatmul.mubr.bf16.gmra.mrb[0].mxu0 %v3140
        %v3338 = vpop.f32.mrb[0].mxu0
        %v3339 = vadd.f32 0.0, %v3338
        %v3340 = vpop.f32.mrb[0].mxu0
        %v3341 = vpop.f32.mrb[0].mxu0
        %v3342 = vadd.f32 0.0, %v3341
        %v3343 = vpop.f32.mrb[0].mxu0
        %3344 = vmatprep.mubr.bf16.mxu0 0
        %3345 = vmatmul.mubr.bf16.gmra.mrb[0].mxu0 %v3141
        %v3346 = vpop.f32.mrb[0].mxu0
        %v3347 = vadd.f32 0.0, %v3346
        %v3348 = vpop.f32.mrb[0].mxu0
        %v3349 = vpop.f32.mrb[0].mxu0
        %v3350 = vadd.f32 0.0, %v3349
        %v3351 = vpop.f32.mrb[0].mxu0
        %3352 = vmatprep.mubr.bf16.mxu0 0
        %3353 = vmatmul.mubr.bf16.gmra.mrb[0].mxu0 %v3142
        %v3354 = vpop.f32.mrb[0].mxu0
        %v3355 = vadd.f32 0.0, %v3354
        %v3356 = vpop.f32.mrb[0].mxu0
        %v3357 = vpop.f32.mrb[0].mxu0
        %v3358 = vadd.f32 0.0, %v3357
        %v3359 = vpop.f32.mrb[0].mxu0
        %3360 = vmatprep.mubr.bf16.mxu0 0
        %3361 = vmatmul.mubr.bf16.gmra.mrb[0].mxu0 %v3143
        %v3362 = vpop.f32.mrb[0].mxu0
        %v3363 = vadd.f32 0.0, %v3362
        %v3364 = vpop.f32.mrb[0].mxu0
        %v3365 = vpop.f32.mrb[0].mxu0
        %v3366 = vadd.f32 0.0, %v3365
        %v3367 = vpop.f32.mrb[0].mxu0
        %3368 = vdwg.mxu0
        %v3513 = vunpack.c.l.b16 %v2624
        %v3514 = vunpack.c.l.b16 %v2625
        %v3515 = vunpack.c.l.b16 %v2626
        %v3516 = vunpack.c.l.b16 %v2627
        %v3517 = vunpack.c.l.b16 %v2628
        %v3518 = vunpack.c.l.b16 %v2629
        %v3519 = vunpack.c.l.b16 %v2630
        %v3520 = vunpack.c.l.b16 %v2631
        %v3521 = vunpack.c.l.b16 %v2632
        %v3522 = vunpack.c.l.b16 %v2633
        %v3523 = vunpack.c.l.b16 %v2634
        %v3524 = vunpack.c.l.b16 %v2635
        %v3525 = vunpack.c.l.b16 %v2636
        %v3526 = vunpack.c.l.b16 %v2637
        %v3527 = vunpack.c.l.b16 %v2638
        %v3528 = vunpack.c.l.b16 %v2639
        %v3529 = vunpack.c.l.b16 %v2640
        %v3530 = vunpack.c.l.b16 %v2641
        %v3531 = vunpack.c.l.b16 %v2642
        %v3532 = vunpack.c.l.b16 %v2643
        %v3533 = vunpack.c.l.b16 %v2644
        %v3534 = vunpack.c.l.b16 %v2645
        %v3535 = vunpack.c.l.b16 %v2646
        %v3536 = vunpack.c.l.b16 %v2647
        %v3537 = vunpack.c.l.b16 %v2648
        %v3538 = vunpack.c.l.b16 %v2649
        %v3539 = vunpack.c.l.b16 %v2650
        %v3540 = vunpack.c.l.b16 %v2651
        %v3541 = vunpack.c.l.b16 %v2652
        %v3542 = vunpack.c.l.b16 %v2653
        %v3543 = vunpack.c.l.b16 %v2654
        %v3544 = vunpack.c.l.b16 %v2655
        %v3545 = vunpack.c.l.b16 %v2656
        %v3546 = vunpack.c.l.b16 %v2657
        %v3547 = vunpack.c.l.b16 %v2658
        %v3548 = vunpack.c.l.b16 %v2659
        %v3549 = vunpack.c.l.b16 %v2660
        %v3550 = vunpack.c.l.b16 %v2661
        %v3551 = vunpack.c.l.b16 %v2662
        %v3552 = vunpack.c.l.b16 %v2663
        %v3553 = vunpack.c.l.b16 %v2664
        %v3554 = vunpack.c.l.b16 %v2665
        %v3555 = vunpack.c.l.b16 %v2666
        %v3556 = vunpack.c.l.b16 %v2667
        %v3557 = vunpack.c.l.b16 %v2668
        %v3558 = vunpack.c.l.b16 %v2669
        %v3559 = vunpack.c.l.b16 %v2670
        %v3560 = vunpack.c.l.b16 %v2671
        %v3561 = vunpack.c.l.b16 %v2672
        %v3562 = vunpack.c.l.b16 %v2673
        %v3563 = vunpack.c.l.b16 %v2674
        %v3564 = vunpack.c.l.b16 %v2675
        %v3565 = vunpack.c.l.b16 %v2676
        %v3566 = vunpack.c.l.b16 %v2677
        %v3567 = vunpack.c.l.b16 %v2678
        %v3568 = vunpack.c.l.b16 %v2679
        %v3569 = vunpack.c.l.b16 %v2680
        %v3570 = vunpack.c.l.b16 %v2681
        %v3571 = vunpack.c.l.b16 %v2682
        %v3572 = vunpack.c.l.b16 %v2683
        %v3573 = vunpack.c.l.b16 %v2684
        %v3574 = vunpack.c.l.b16 %v2685
        %v3575 = vunpack.c.l.b16 %v2686
        %v3576 = vunpack.c.l.b16 %v2687
        %v3577 = vunpack.c.l.b16 %v2688
        %v3578 = vunpack.c.l.b16 %v2689
        %v3579 = vunpack.c.l.b16 %v2690
        %v3580 = vunpack.c.l.b16 %v2691
        %v3581 = vunpack.c.l.b16 %v2692
        %v3582 = vunpack.c.l.b16 %v2693
        %v3583 = vunpack.c.l.b16 %v2694
        %v3584 = vunpack.c.l.b16 %v2695
        %v3585 = vunpack.c.l.b16 %v2696
        %v3586 = vunpack.c.l.b16 %v2697
        %v3587 = vunpack.c.l.b16 %v2698
        %v3588 = vunpack.c.l.b16 %v2699
        %v3589 = vunpack.c.l.b16 %v2700
        %v3590 = vunpack.c.l.b16 %v2701
        %v3591 = vunpack.c.l.b16 %v2702
        %v3592 = vunpack.c.l.b16 %v2703
        %v3593 = vunpack.c.l.b16 %v2704
        %v3594 = vunpack.c.l.b16 %v2705
        %v3595 = vunpack.c.l.b16 %v2706
        %v3596 = vunpack.c.l.b16 %v2707
        %v3597 = vunpack.c.l.b16 %v2708
        %v3598 = vunpack.c.l.b16 %v2709
        %v3599 = vunpack.c.l.b16 %v2710
        %v3600 = vunpack.c.l.b16 %v2711
        %v3601 = vunpack.c.l.b16 %v2712
        %v3602 = vunpack.c.l.b16 %v2713
        %v3603 = vunpack.c.l.b16 %v2714
        %v3604 = vunpack.c.l.b16 %v2715
        %v3605 = vunpack.c.l.b16 %v2716
        %v3606 = vunpack.c.l.b16 %v2717
        %v3607 = vunpack.c.l.b16 %v2718
        %v3608 = vunpack.c.l.b16 %v2719
        %v3609 = vunpack.c.l.b16 %v2720
        %v3610 = vunpack.c.l.b16 %v2721
        %v3611 = vunpack.c.l.b16 %v2722
        %v3612 = vunpack.c.l.b16 %v2723
        %v3613 = vunpack.c.l.b16 %v2724
        %v3614 = vunpack.c.l.b16 %v2725
        %v3615 = vunpack.c.l.b16 %v2726
        %v3616 = vunpack.c.l.b16 %v2727
        %v3617 = vunpack.c.l.b16 %v2728
        %v3618 = vunpack.c.l.b16 %v2729
        %v3619 = vunpack.c.l.b16 %v2730
        %v3620 = vunpack.c.l.b16 %v2731
        %v3621 = vunpack.c.l.b16 %v2732
        %v3622 = vunpack.c.l.b16 %v2733
        %v3623 = vunpack.c.l.b16 %v2734
        %v3624 = vunpack.c.l.b16 %v2735
        %v3625 = vunpack.c.l.b16 %v2736
        %v3626 = vunpack.c.l.b16 %v2737
        %v3627 = vunpack.c.l.b16 %v2738
        %v3628 = vunpack.c.l.b16 %v2739
        %v3629 = vunpack.c.l.b16 %v2740
        %v3630 = vunpack.c.l.b16 %v2741
        %v3631 = vunpack.c.l.b16 %v2742
        %v3632 = vunpack.c.l.b16 %v2743
        %v3633 = vunpack.c.l.b16 %v2744
        %v3634 = vunpack.c.l.b16 %v2745
        %v3635 = vunpack.c.l.b16 %v2746
        %v3636 = vunpack.c.l.b16 %v2747
        %v3637 = vunpack.c.l.b16 %v2748
        %v3638 = vunpack.c.l.b16 %v2749
        %v3639 = vunpack.c.l.b16 %v2750
        %v3640 = vunpack.c.l.b16 %v2751
        %v3641 = vunpack.c.l.b16 %v2752
        %v3642 = vunpack.c.l.b16 %v2753
        %v3643 = vunpack.c.l.b16 %v2754
        %v3644 = vunpack.c.l.b16 %v2755
        %v3645 = vunpack.c.l.b16 %v2756
        %v3646 = vunpack.c.l.b16 %v2757
        %v3647 = vunpack.c.l.b16 %v2758
        %v3648 = vunpack.c.l.b16 %v2759
        %v3649 = vunpack.c.l.b16 %v2760
        %v3650 = vunpack.c.l.b16 %v2761
        %v3651 = vunpack.c.l.b16 %v2762
        %v3652 = vunpack.c.l.b16 %v2763
        %v3653 = vunpack.c.l.b16 %v2764
        %v3654 = vunpack.c.l.b16 %v2765
        %v3655 = vunpack.c.l.b16 %v2766
        %v3656 = vunpack.c.l.b16 %v2767
        %v3657 = vpack.c.b16 %v3514, %v3513
        %v3658 = vpack.c.b16 %v3516, %v3515
        %v3659 = vpack.c.b16 %v3518, %v3517
        %v3660 = vpack.c.b16 %v3520, %v3519
        %v3661 = vpack.c.b16 %v3522, %v3521
        %v3662 = vpack.c.b16 %v3524, %v3523
        %v3663 = vpack.c.b16 %v3526, %v3525
        %v3664 = vpack.c.b16 %v3528, %v3527
        %v3665 = vpack.c.b16 %v3530, %v3529
        %v3666 = vpack.c.b16 %v3532, %v3531
        %v3667 = vpack.c.b16 %v3534, %v3533
        %v3668 = vpack.c.b16 %v3536, %v3535
        %v3669 = vpack.c.b16 %v3538, %v3537
        %v3670 = vpack.c.b16 %v3540, %v3539
        %v3671 = vpack.c.b16 %v3542, %v3541
        %v3672 = vpack.c.b16 %v3544, %v3543
        %v3673 = vpack.c.b16 %v3546, %v3545
        %v3674 = vpack.c.b16 %v3548, %v3547
        %v3675 = vpack.c.b16 %v3550, %v3549
        %v3676 = vpack.c.b16 %v3552, %v3551
        %v3677 = vpack.c.b16 %v3554, %v3553
        %v3678 = vpack.c.b16 %v3556, %v3555
        %v3679 = vpack.c.b16 %v3558, %v3557
        %v3680 = vpack.c.b16 %v3560, %v3559
        %v3681 = vpack.c.b16 %v3562, %v3561
        %v3682 = vpack.c.b16 %v3564, %v3563
        %v3683 = vpack.c.b16 %v3566, %v3565
        %v3684 = vpack.c.b16 %v3568, %v3567
        %v3685 = vpack.c.b16 %v3570, %v3569
        %v3686 = vpack.c.b16 %v3572, %v3571
        %v3687 = vpack.c.b16 %v3574, %v3573
        %v3688 = vpack.c.b16 %v3576, %v3575
        %v3689 = vpack.c.b16 %v3578, %v3577
        %v3690 = vpack.c.b16 %v3580, %v3579
        %v3691 = vpack.c.b16 %v3582, %v3581
        %v3692 = vpack.c.b16 %v3584, %v3583
        %v3693 = vpack.c.b16 %v3586, %v3585
        %v3694 = vpack.c.b16 %v3588, %v3587
        %v3695 = vpack.c.b16 %v3590, %v3589
        %v3696 = vpack.c.b16 %v3592, %v3591
        %v3697 = vpack.c.b16 %v3594, %v3593
        %v3698 = vpack.c.b16 %v3596, %v3595
        %v3699 = vpack.c.b16 %v3598, %v3597
        %v3700 = vpack.c.b16 %v3600, %v3599
        %v3701 = vpack.c.b16 %v3602, %v3601
        %v3702 = vpack.c.b16 %v3604, %v3603
        %v3703 = vpack.c.b16 %v3606, %v3605
        %v3704 = vpack.c.b16 %v3608, %v3607
        %v3705 = vpack.c.b16 %v3610, %v3609
        %v3706 = vpack.c.b16 %v3612, %v3611
        %v3707 = vpack.c.b16 %v3614, %v3613
        %v3708 = vpack.c.b16 %v3616, %v3615
        %v3709 = vpack.c.b16 %v3618, %v3617
        %v3710 = vpack.c.b16 %v3620, %v3619
        %v3711 = vpack.c.b16 %v3622, %v3621
        %v3712 = vpack.c.b16 %v3624, %v3623
        %v3713 = vpack.c.b16 %v3626, %v3625
        %v3714 = vpack.c.b16 %v3628, %v3627
        %v3715 = vpack.c.b16 %v3630, %v3629
        %v3716 = vpack.c.b16 %v3632, %v3631
        %v3717 = vpack.c.b16 %v3634, %v3633
        %v3718 = vpack.c.b16 %v3636, %v3635
        %v3719 = vpack.c.b16 %v3638, %v3637
        %v3720 = vpack.c.b16 %v3640, %v3639
        %v3721 = vpack.c.b16 %v3642, %v3641
        %v3722 = vpack.c.b16 %v3644, %v3643
        %v3723 = vpack.c.b16 %v3646, %v3645
        %v3724 = vpack.c.b16 %v3648, %v3647
        %v3725 = vpack.c.b16 %v3650, %v3649
        %v3726 = vpack.c.b16 %v3652, %v3651
        %v3727 = vpack.c.b16 %v3654, %v3653
        %v3728 = vpack.c.b16 %v3656, %v3655
        %3801 = vmatprep.subr.bf16.mxu0 0
        %3802 = vmatpush1.bf16.msra.mxu0 %v3657
        %3803 = vmatprep.subr.bf16.mxu0 0
        %3804 = vmatpush1.bf16.msra.mxu0 %v3658
        %3805 = vmatprep.subr.bf16.mxu0 0
        %3806 = vmatpush1.bf16.msra.mxu0 %v3659
        %3807 = vmatprep.subr.bf16.mxu0 0
        %3808 = vmatpush1.bf16.msra.mxu0 %v3660
        %3809 = vmatprep.subr.bf16.mxu0 0
        %3810 = vmatpush1.bf16.msra.mxu0 %v3661
        %3811 = vmatprep.subr.bf16.mxu0 0
        %3812 = vmatpush1.bf16.msra.mxu0 %v3662
        %3813 = vmatprep.subr.bf16.mxu0 0
        %3814 = vmatpush1.bf16.msra.mxu0 %v3663
        %3815 = vmatprep.subr.bf16.mxu0 0
        %3816 = vmatpush1.bf16.msra.mxu0 %v3664
        %3817 = vmatprep.subr.bf16.mxu0 0
        %3818 = vmatpush1.bf16.msra.mxu0 %v3665
        %3819 = vmatprep.subr.bf16.mxu0 0
        %3820 = vmatpush1.bf16.msra.mxu0 %v3666
        %3821 = vmatprep.subr.bf16.mxu0 0
        %3822 = vmatpush1.bf16.msra.mxu0 %v3667
        %3823 = vmatprep.subr.bf16.mxu0 0
        %3824 = vmatpush1.bf16.msra.mxu0 %v3668
        %3825 = vmatprep.subr.bf16.mxu0 0
        %3826 = vmatpush1.bf16.msra.mxu0 %v3669
        %3827 = vmatprep.subr.bf16.mxu0 0
        %3828 = vmatpush1.bf16.msra.mxu0 %v3670
        %3829 = vmatprep.subr.bf16.mxu0 0
        %3830 = vmatpush1.bf16.msra.mxu0 %v3671
        %3831 = vmatprep.subr.bf16.mxu0 0
        %3832 = vmatpush1.bf16.msra.mxu0 %v3672
        %3833 = vmatprep.mubr.bf16.mxu0 %v2944
        %3834 = vmatmul.mubr.bf16.gmra.mrb[0].mxu0 %v2768
        %v3835 = vpop.f32.mrb[0].mxu0
        %v3836 = vadd.f32 %v3243, %v3835
        %v3837 = vpop.f32.mrb[0].mxu0
        %v3838 = vpop.f32.mrb[0].mxu0
        %v3839 = vadd.f32 %v3246, %v3838
        %v3840 = vpop.f32.mrb[0].mxu0
        %3841 = vmatprep.mubr.bf16.mxu0 %v2945
        %3842 = vmatmul.mubr.bf16.gmra.mrb[0].mxu0 %v2769
        %v3843 = vpop.f32.mrb[0].mxu0
        %v3844 = vadd.f32 %v3251, %v3843
        %v3845 = vpop.f32.mrb[0].mxu0
        %v3846 = vpop.f32.mrb[0].mxu0
        %v3847 = vadd.f32 %v3254, %v3846
        %v3848 = vpop.f32.mrb[0].mxu0
        %3849 = vmatprep.mubr.bf16.mxu0 %v2946
        %3850 = vmatmul.mubr.bf16.gmra.mrb[0].mxu0 %v2770
        %v3851 = vpop.f32.mrb[0].mxu0
        %v3852 = vadd.f32 %v3259, %v3851
        %v3853 = vpop.f32.mrb[0].mxu0
        %v3854 = vpop.f32.mrb[0].mxu0
        %v3855 = vadd.f32 %v3262, %v3854
        %v3856 = vpop.f32.mrb[0].mxu0
        %3857 = vmatprep.mubr.bf16.mxu0 %v2947
        %3858 = vmatmul.mubr.bf16.gmra.mrb[0].mxu0 %v2771
        %v3859 = vpop.f32.mrb[0].mxu0
        %v3860 = vadd.f32 %v3267, %v3859
        %v3861 = vpop.f32.mrb[0].mxu0
        %v3862 = vpop.f32.mrb[0].mxu0
        %v3863 = vadd.f32 %v3270, %v3862
        %v3864 = vpop.f32.mrb[0].mxu0
        %3865 = vmatprep.mubr.bf16.mxu0 %v2948
        %3866 = vmatmul.mubr.bf16.gmra.mrb[0].mxu0 %v2772
        %v3867 = vpop.f32.mrb[0].mxu0
        %v3868 = vadd.f32 %v3275, %v3867
        %v3869 = vpop.f32.mrb[0].mxu0
        %v3870 = vpop.f32.mrb[0].mxu0
        %v3871 = vadd.f32 %v3278, %v3870
        %v3872 = vpop.f32.mrb[0].mxu0
        %3873 = vmatprep.mubr.bf16.mxu0 %v2949
        %3874 = vmatmul.mubr.bf16.gmra.mrb[0].mxu0 %v2773
        %v3875 = vpop.f32.mrb[0].mxu0
        %v3876 = vadd.f32 %v3283, %v3875
        %v3877 = vpop.f32.mrb[0].mxu0
        %v3878 = vpop.f32.mrb[0].mxu0
        %v3879 = vadd.f32 %v3286, %v3878
        %v3880 = vpop.f32.mrb[0].mxu0
        %3881 = vmatprep.mubr.bf16.mxu0 %v2950
        %3882 = vmatmul.mubr.bf16.gmra.mrb[0].mxu0 %v2774
        %v3883 = vpop.f32.mrb[0].mxu0
        %v3884 = vadd.f32 %v3291, %v3883
        %v3885 = vpop.f32.mrb[0].mxu0
        %v3886 = vpop.f32.mrb[0].mxu0
        %v3887 = vadd.f32 %v3294, %v3886
        %v3888 = vpop.f32.mrb[0].mxu0
        %3889 = vmatprep.mubr.bf16.mxu0 %v2951
        %3890 = vmatmul.mubr.bf16.gmra.mrb[0].mxu0 %v2775
        %v3891 = vpop.f32.mrb[0].mxu0
        %v3892 = vadd.f32 %v3299, %v3891
        %v3893 = vpop.f32.mrb[0].mxu0
        %v3894 = vpop.f32.mrb[0].mxu0
        %v3895 = vadd.f32 %v3302, %v3894
        %v3896 = vpop.f32.mrb[0].mxu0
        %3897 = vmatprep.mubr.bf16.mxu0 %v2952
        %3898 = vmatmul.mubr.bf16.gmra.mrb[0].mxu0 %v2776
        %v3899 = vpop.f32.mrb[0].mxu0
        %v3900 = vadd.f32 %v3307, %v3899
        %v3901 = vpop.f32.mrb[0].mxu0
        %v3902 = vpop.f32.mrb[0].mxu0
        %v3903 = vadd.f32 %v3310, %v3902
        %v3904 = vpop.f32.mrb[0].mxu0
        %3905 = vmatprep.mubr.bf16.mxu0 %v2953
        %3906 = vmatmul.mubr.bf16.gmra.mrb[0].mxu0 %v2777
        %v3907 = vpop.f32.mrb[0].mxu0
        %v3908 = vadd.f32 %v3315, %v3907
        %v3909 = vpop.f32.mrb[0].mxu0
        %v3910 = vpop.f32.mrb[0].mxu0
        %v3911 = vadd.f32 %v3318, %v3910
        %v3912 = vpop.f32.mrb[0].mxu0
        %3913 = vmatprep.mubr.bf16.mxu0 %v2954
        %3914 = vmatmul.mubr.bf16.gmra.mrb[0].mxu0 %v2778
        %v3915 = vpop.f32.mrb[0].mxu0
        %v3916 = vadd.f32 %v3323, %v3915
        %v3917 = vpop.f32.mrb[0].mxu0
        %v3918 = vpop.f32.mrb[0].mxu0
        %v3919 = vadd.f32 %v3326, %v3918
        %v3920 = vpop.f32.mrb[0].mxu0
        %3921 = vmatprep.mubr.bf16.mxu0 %v2955
        %3922 = vmatmul.mubr.bf16.gmra.mrb[0].mxu0 %v2779
        %v3923 = vpop.f32.mrb[0].mxu0
        %v3924 = vadd.f32 %v3331, %v3923
        %v3925 = vpop.f32.mrb[0].mxu0
        %v3926 = vpop.f32.mrb[0].mxu0
        %v3927 = vadd.f32 %v3334, %v3926
        %v3928 = vpop.f32.mrb[0].mxu0
        %3929 = vmatprep.mubr.bf16.mxu0 %v2956
        %3930 = vmatmul.mubr.bf16.gmra.mrb[0].mxu0 %v2780
        %v3931 = vpop.f32.mrb[0].mxu0
        %v3932 = vadd.f32 %v3339, %v3931
        %v3933 = vpop.f32.mrb[0].mxu0
        %v3934 = vpop.f32.mrb[0].mxu0
        %v3935 = vadd.f32 %v3342, %v3934
        %v3936 = vpop.f32.mrb[0].mxu0
        %3937 = vmatprep.mubr.bf16.mxu0 %v2957
        %3938 = vmatmul.mubr.bf16.gmra.mrb[0].mxu0 %v2781
        %v3939 = vpop.f32.mrb[0].mxu0
        %v3940 = vadd.f32 %v3347, %v3939
        %v3941 = vpop.f32.mrb[0].mxu0
        %v3942 = vpop.f32.mrb[0].mxu0
        %v3943 = vadd.f32 %v3350, %v3942
        %v3944 = vpop.f32.mrb[0].mxu0
        %3945 = vmatprep.mubr.bf16.mxu0 %v2958
        %3946 = vmatmul.mubr.bf16.gmra.mrb[0].mxu0 %v2782
        %v3947 = vpop.f32.mrb[0].mxu0
        %v3948 = vadd.f32 %v3355, %v3947
        %v3949 = vpop.f32.mrb[0].mxu0
        %v3950 = vpop.f32.mrb[0].mxu0
        %v3951 = vadd.f32 %v3358, %v3950
        %v3952 = vpop.f32.mrb[0].mxu0
        %3953 = vmatprep.mubr.bf16.mxu0 %v2959
        %3954 = vmatmul.mubr.bf16.gmra.mrb[0].mxu0 %v2783
        %v3955 = vpop.f32.mrb[0].mxu0
        %v3956 = vadd.f32 %v3363, %v3955
        %v3957 = vpop.f32.mrb[0].mxu0
        %v3958 = vpop.f32.mrb[0].mxu0
        %v3959 = vadd.f32 %v3366, %v3958
        %v3960 = vpop.f32.mrb[0].mxu0
        %3961 = vdwg.mxu0
        %3962 = vmatprep.subr.bf16.mxu0 0
        %3963 = vmatpush1.bf16.msra.mxu0 %v3673
        %3964 = vmatprep.subr.bf16.mxu0 0
        %3965 = vmatpush1.bf16.msra.mxu0 %v3674
        %3966 = vmatprep.subr.bf16.mxu0 0
        %3967 = vmatpush1.bf16.msra.mxu0 %v3675
        %3968 = vmatprep.subr.bf16.mxu0 0
        %3969 = vmatpush1.bf16.msra.mxu0 %v3676
        %3970 = vmatprep.subr.bf16.mxu0 0
        %3971 = vmatpush1.bf16.msra.mxu0 %v3677
        %3972 = vmatprep.subr.bf16.mxu0 0
        %3973 = vmatpush1.bf16.msra.mxu0 %v3678
        %3974 = vmatprep.subr.bf16.mxu0 0
        %3975 = vmatpush1.bf16.msra.mxu0 %v3679
        %3976 = vmatprep.subr.bf16.mxu0 0
        %3977 = vmatpush1.bf16.msra.mxu0 %v3680
        %3978 = vmatprep.subr.bf16.mxu0 0
        %3979 = vmatpush1.bf16.msra.mxu0 %v3681
        %3980 = vmatprep.subr.bf16.mxu0 0
        %3981 = vmatpush1.bf16.msra.mxu0 %v3682
        %3982 = vmatprep.subr.bf16.mxu0 0
        %3983 = vmatpush1.bf16.msra.mxu0 %v3683
        %3984 = vmatprep.subr.bf16.mxu0 0
        %3985 = vmatpush1.bf16.msra.mxu0 %v3684
        %3986 = vmatprep.subr.bf16.mxu0 0
        %3987 = vmatpush1.bf16.msra.mxu0 %v3685
        %3988 = vmatprep.subr.bf16.mxu0 0
        %3989 = vmatpush1.bf16.msra.mxu0 %v3686
        %3990 = vmatprep.subr.bf16.mxu0 0
        %3991 = vmatpush1.bf16.msra.mxu0 %v3687
        %3992 = vmatprep.subr.bf16.mxu0 0
        %3993 = vmatpush1.bf16.msra.mxu0 %v3688
        %3994 = vmatprep.mubr.bf16.mxu0 %v2769
        %3995 = vmatmul.mubr.bf16.gmra.mrb[0].mxu0 %v3072
        %v3996 = vpop.f32.mrb[0].mxu0
        %v3997 = vadd.f32 %v3836, %v3996
        %v3998 = vpop.f32.mrb[0].mxu0
        %v3999 = vpop.f32.mrb[0].mxu0
        %v4000 = vadd.f32 %v3839, %v3999
        %v4001 = vpop.f32.mrb[0].mxu0
        %4002 = vmatprep.mubr.bf16.mxu0 %v2770
        %4003 = vmatmul.mubr.bf16.gmra.mrb[0].mxu0 %v3073
        %v4004 = vpop.f32.mrb[0].mxu0
        %v4005 = vadd.f32 %v3844, %v4004
        %v4006 = vpop.f32.mrb[0].mxu0
        %v4007 = vpop.f32.mrb[0].mxu0
        %v4008 = vadd.f32 %v3847, %v4007
        %v4009 = vpop.f32.mrb[0].mxu0
        %4010 = vmatprep.mubr.bf16.mxu0 %v2771
        %4011 = vmatmul.mubr.bf16.gmra.mrb[0].mxu0 %v3074
        %v4012 = vpop.f32.mrb[0].mxu0
        %v4013 = vadd.f32 %v3852, %v4012
        %v4014 = vpop.f32.mrb[0].mxu0
        %v4015 = vpop.f32.mrb[0].mxu0
        %v4016 = vadd.f32 %v3855, %v4015
        %v4017 = vpop.f32.mrb[0].mxu0
        %4018 = vmatprep.mubr.bf16.mxu0 %v2772
        %4019 = vmatmul.mubr.bf16.gmra.mrb[0].mxu0 %v3075
        %v4020 = vpop.f32.mrb[0].mxu0
        %v4021 = vadd.f32 %v3860, %v4020
        %v4022 = vpop.f32.mrb[0].mxu0
        %v4023 = vpop.f32.mrb[0].mxu0
        %v4024 = vadd.f32 %v3863, %v4023
        %v4025 = vpop.f32.mrb[0].mxu0
        %4026 = vmatprep.mubr.bf16.mxu0 %v2773
        %4027 = vmatmul.mubr.bf16.gmra.mrb[0].mxu0 %v3076
        %v4028 = vpop.f32.mrb[0].mxu0
        %v4029 = vadd.f32 %v3868, %v4028
        %v4030 = vpop.f32.mrb[0].mxu0
        %v4031 = vpop.f32.mrb[0].mxu0
        %v4032 = vadd.f32 %v3871, %v4031
        %v4033 = vpop.f32.mrb[0].mxu0
        %4034 = vmatprep.mubr.bf16.mxu0 %v2774
        %4035 = vmatmul.mubr.bf16.gmra.mrb[0].mxu0 %v3077
        %v4036 = vpop.f32.mrb[0].mxu0
        %v4037 = vadd.f32 %v3876, %v4036
        %v4038 = vpop.f32.mrb[0].mxu0
        %v4039 = vpop.f32.mrb[0].mxu0
        %v4040 = vadd.f32 %v3879, %v4039
        %v4041 = vpop.f32.mrb[0].mxu0
        %4042 = vmatprep.mubr.bf16.mxu0 %v2775
        %4043 = vmatmul.mubr.bf16.gmra.mrb[0].mxu0 %v3078
        %v4044 = vpop.f32.mrb[0].mxu0
        %v4045 = vadd.f32 %v3884, %v4044
        %v4046 = vpop.f32.mrb[0].mxu0
        %v4047 = vpop.f32.mrb[0].mxu0
        %v4048 = vadd.f32 %v3887, %v4047
        %v4049 = vpop.f32.mrb[0].mxu0
        %4050 = vmatprep.mubr.bf16.mxu0 %v2776
        %4051 = vmatmul.mubr.bf16.gmra.mrb[0].mxu0 %v3079
        %v4052 = vpop.f32.mrb[0].mxu0
        %v4053 = vadd.f32 %v3892, %v4052
        %v4054 = vpop.f32.mrb[0].mxu0
        %v4055 = vpop.f32.mrb[0].mxu0
        %v4056 = vadd.f32 %v3895, %v4055
        %v4057 = vpop.f32.mrb[0].mxu0
        %4058 = vmatprep.mubr.bf16.mxu0 %v2777
        %4059 = vmatmul.mubr.bf16.gmra.mrb[0].mxu0 %v3080
        %v4060 = vpop.f32.mrb[0].mxu0
        %v4061 = vadd.f32 %v3900, %v4060
        %v4062 = vpop.f32.mrb[0].mxu0
        %v4063 = vpop.f32.mrb[0].mxu0
        %v4064 = vadd.f32 %v3903, %v4063
        %v4065 = vpop.f32.mrb[0].mxu0
        %4066 = vmatprep.mubr.bf16.mxu0 %v2778
        %4067 = vmatmul.mubr.bf16.gmra.mrb[0].mxu0 %v3081
        %v4068 = vpop.f32.mrb[0].mxu0
        %v4069 = vadd.f32 %v3908, %v4068
        %v4070 = vpop.f32.mrb[0].mxu0
        %v4071 = vpop.f32.mrb[0].mxu0
        %v4072 = vadd.f32 %v3911, %v4071
        %v4073 = vpop.f32.mrb[0].mxu0
        %4074 = vmatprep.mubr.bf16.mxu0 %v2779
        %4075 = vmatmul.mubr.bf16.gmra.mrb[0].mxu0 %v3082
        %v4076 = vpop.f32.mrb[0].mxu0
        %v4077 = vadd.f32 %v3916, %v4076
        %v4078 = vpop.f32.mrb[0].mxu0
        %v4079 = vpop.f32.mrb[0].mxu0
        %v4080 = vadd.f32 %v3919, %v4079
        %v4081 = vpop.f32.mrb[0].mxu0
        %4082 = vmatprep.mubr.bf16.mxu0 %v2780
        %4083 = vmatmul.mubr.bf16.gmra.mrb[0].mxu0 %v3083
        %v4084 = vpop.f32.mrb[0].mxu0
        %v4085 = vadd.f32 %v3924, %v4084
        %v4086 = vpop.f32.mrb[0].mxu0
        %v4087 = vpop.f32.mrb[0].mxu0
        %v4088 = vadd.f32 %v3927, %v4087
        %v4089 = vpop.f32.mrb[0].mxu0
        %4090 = vmatprep.mubr.bf16.mxu0 %v2781
        %4091 = vmatmul.mubr.bf16.gmra.mrb[0].mxu0 %v3084
        %v4092 = vpop.f32.mrb[0].mxu0
        %v4093 = vadd.f32 %v3932, %v4092
        %v4094 = vpop.f32.mrb[0].mxu0
        %v4095 = vpop.f32.mrb[0].mxu0
        %v4096 = vadd.f32 %v3935, %v4095
        %v4097 = vpop.f32.mrb[0].mxu0
        %4098 = vmatprep.mubr.bf16.mxu0 %v2782
        %4099 = vmatmul.mubr.bf16.gmra.mrb[0].mxu0 %v3085
        %v4100 = vpop.f32.mrb[0].mxu0
        %v4101 = vadd.f32 %v3940, %v4100
        %v4102 = vpop.f32.mrb[0].mxu0
        %v4103 = vpop.f32.mrb[0].mxu0
        %v4104 = vadd.f32 %v3943, %v4103
        %v4105 = vpop.f32.mrb[0].mxu0
        %4106 = vmatprep.mubr.bf16.mxu0 %v2783
        %4107 = vmatmul.mubr.bf16.gmra.mrb[0].mxu0 %v3086
        %v4108 = vpop.f32.mrb[0].mxu0
        %v4109 = vadd.f32 %v3948, %v4108
        %v4110 = vpop.f32.mrb[0].mxu0
        %v4111 = vpop.f32.mrb[0].mxu0
        %v4112 = vadd.f32 %v3951, %v4111
        %v4113 = vpop.f32.mrb[0].mxu0
        %4114 = vmatprep.mubr.bf16.mxu0 %v3088
        %4115 = vmatmul.mubr.bf16.gmra.mrb[0].mxu0 %v3087
        %v4116 = vpop.f32.mrb[0].mxu0
        %v4117 = vadd.f32 %v3956, %v4116
        %v4118 = vpop.f32.mrb[0].mxu0
        %v4119 = vpop.f32.mrb[0].mxu0
        %v4120 = vadd.f32 %v3959, %v4119
        %v4121 = vpop.f32.mrb[0].mxu0
        %4122 = vdwg.mxu0
        %4123 = vmatprep.subr.bf16.mxu0 0
        %4124 = vmatpush1.bf16.msra.mxu0 %v3689
        %4125 = vmatprep.subr.bf16.mxu0 0
        %4126 = vmatpush1.bf16.msra.mxu0 %v3690
        %4127 = vmatprep.subr.bf16.mxu0 0
        %4128 = vmatpush1.bf16.msra.mxu0 %v3691
        %4129 = vmatprep.subr.bf16.mxu0 0
        %4130 = vmatpush1.bf16.msra.mxu0 %v3692
        %4131 = vmatprep.subr.bf16.mxu0 0
        %4132 = vmatpush1.bf16.msra.mxu0 %v3693
        %4133 = vmatprep.subr.bf16.mxu0 0
        %4134 = vmatpush1.bf16.msra.mxu0 %v3694
        %4135 = vmatprep.subr.bf16.mxu0 0
        %4136 = vmatpush1.bf16.msra.mxu0 %v3695
        %4137 = vmatprep.subr.bf16.mxu0 0
        %4138 = vmatpush1.bf16.msra.mxu0 %v3696
        %4139 = vmatprep.subr.bf16.mxu0 0
        %4140 = vmatpush1.bf16.msra.mxu0 %v3697
        %4141 = vmatprep.subr.bf16.mxu0 0
        %4142 = vmatpush1.bf16.msra.mxu0 %v3698
        %4143 = vmatprep.subr.bf16.mxu0 0
        %4144 = vmatpush1.bf16.msra.mxu0 %v3699
        %4145 = vmatprep.subr.bf16.mxu0 0
        %4146 = vmatpush1.bf16.msra.mxu0 %v3700
        %4147 = vmatprep.subr.bf16.mxu0 0
        %4148 = vmatpush1.bf16.msra.mxu0 %v3701
        %4149 = vmatprep.subr.bf16.mxu0 0
        %4150 = vmatpush1.bf16.msra.mxu0 %v3702
        %4151 = vmatprep.subr.bf16.mxu0 0
        %4152 = vmatpush1.bf16.msra.mxu0 %v3703
        %4153 = vmatprep.subr.bf16.mxu0 0
        %4154 = vmatpush1.bf16.msra.mxu0 %v3704
        %4155 = vmatprep.mubr.bf16.mxu0 %v3073
        %4156 = vmatmul.mubr.bf16.gmra.mrb[0].mxu0 %v2945
        %v4157 = vpop.f32.mrb[0].mxu0
        %v4158 = vadd.f32 %v3997, %v4157
        %v4159 = vpop.f32.mrb[0].mxu0
        %v4160 = vpop.f32.mrb[0].mxu0
        %v4161 = vadd.f32 %v4000, %v4160
        %v4162 = vpop.f32.mrb[0].mxu0
        %4163 = vmatprep.mubr.bf16.mxu0 %v3074
        %4164 = vmatmul.mubr.bf16.gmra.mrb[0].mxu0 %v2946
        %v4165 = vpop.f32.mrb[0].mxu0
        %v4166 = vadd.f32 %v4005, %v4165
        %v4167 = vpop.f32.mrb[0].mxu0
        %v4168 = vpop.f32.mrb[0].mxu0
        %v4169 = vadd.f32 %v4008, %v4168
        %v4170 = vpop.f32.mrb[0].mxu0
        %4171 = vmatprep.mubr.bf16.mxu0 %v3075
        %4172 = vmatmul.mubr.bf16.gmra.mrb[0].mxu0 %v2947
        %v4173 = vpop.f32.mrb[0].mxu0
        %v4174 = vadd.f32 %v4013, %v4173
        %v4175 = vpop.f32.mrb[0].mxu0
        %v4176 = vpop.f32.mrb[0].mxu0
        %v4177 = vadd.f32 %v4016, %v4176
        %v4178 = vpop.f32.mrb[0].mxu0
        %4179 = vmatprep.mubr.bf16.mxu0 %v3076
        %4180 = vmatmul.mubr.bf16.gmra.mrb[0].mxu0 %v2948
        %v4181 = vpop.f32.mrb[0].mxu0
        %v4182 = vadd.f32 %v4021, %v4181
        %v4183 = vpop.f32.mrb[0].mxu0
        %v4184 = vpop.f32.mrb[0].mxu0
        %v4185 = vadd.f32 %v4024, %v4184
        %v4186 = vpop.f32.mrb[0].mxu0
        %4187 = vmatprep.mubr.bf16.mxu0 %v3077
        %4188 = vmatmul.mubr.bf16.gmra.mrb[0].mxu0 %v2949
        %v4189 = vpop.f32.mrb[0].mxu0
        %v4190 = vadd.f32 %v4029, %v4189
        %v4191 = vpop.f32.mrb[0].mxu0
        %v4192 = vpop.f32.mrb[0].mxu0
        %v4193 = vadd.f32 %v4032, %v4192
        %v4194 = vpop.f32.mrb[0].mxu0
        %4195 = vmatprep.mubr.bf16.mxu0 %v3078
        %4196 = vmatmul.mubr.bf16.gmra.mrb[0].mxu0 %v2950
        %v4197 = vpop.f32.mrb[0].mxu0
        %v4198 = vadd.f32 %v4037, %v4197
        %v4199 = vpop.f32.mrb[0].mxu0
        %v4200 = vpop.f32.mrb[0].mxu0
        %v4201 = vadd.f32 %v4040, %v4200
        %v4202 = vpop.f32.mrb[0].mxu0
        %4203 = vmatprep.mubr.bf16.mxu0 %v3079
        %4204 = vmatmul.mubr.bf16.gmra.mrb[0].mxu0 %v2951
        %v4205 = vpop.f32.mrb[0].mxu0
        %v4206 = vadd.f32 %v4045, %v4205
        %v4207 = vpop.f32.mrb[0].mxu0
        %v4208 = vpop.f32.mrb[0].mxu0
        %v4209 = vadd.f32 %v4048, %v4208
        %v4210 = vpop.f32.mrb[0].mxu0
        %4211 = vmatprep.mubr.bf16.mxu0 %v3080
        %4212 = vmatmul.mubr.bf16.gmra.mrb[0].mxu0 %v2952
        %v4213 = vpop.f32.mrb[0].mxu0
        %v4214 = vadd.f32 %v4053, %v4213
        %v4215 = vpop.f32.mrb[0].mxu0
        %v4216 = vpop.f32.mrb[0].mxu0
        %v4217 = vadd.f32 %v4056, %v4216
        %v4218 = vpop.f32.mrb[0].mxu0
        %4219 = vmatprep.mubr.bf16.mxu0 %v3081
        %4220 = vmatmul.mubr.bf16.gmra.mrb[0].mxu0 %v2953
        %v4221 = vpop.f32.mrb[0].mxu0
        %v4222 = vadd.f32 %v4061, %v4221
        %v4223 = vpop.f32.mrb[0].mxu0
        %v4224 = vpop.f32.mrb[0].mxu0
        %v4225 = vadd.f32 %v4064, %v4224
        %v4226 = vpop.f32.mrb[0].mxu0
        %4227 = vmatprep.mubr.bf16.mxu0 %v3082
        %4228 = vmatmul.mubr.bf16.gmra.mrb[0].mxu0 %v2954
        %v4229 = vpop.f32.mrb[0].mxu0
        %v4230 = vadd.f32 %v4069, %v4229
        %v4231 = vpop.f32.mrb[0].mxu0
        %v4232 = vpop.f32.mrb[0].mxu0
        %v4233 = vadd.f32 %v4072, %v4232
        %v4234 = vpop.f32.mrb[0].mxu0
        %4235 = vmatprep.mubr.bf16.mxu0 %v3083
        %4236 = vmatmul.mubr.bf16.gmra.mrb[0].mxu0 %v2955
        %v4237 = vpop.f32.mrb[0].mxu0
        %v4238 = vadd.f32 %v4077, %v4237
        %v4239 = vpop.f32.mrb[0].mxu0
        %v4240 = vpop.f32.mrb[0].mxu0
        %v4241 = vadd.f32 %v4080, %v4240
        %v4242 = vpop.f32.mrb[0].mxu0
        %4243 = vmatprep.mubr.bf16.mxu0 %v3084
        %4244 = vmatmul.mubr.bf16.gmra.mrb[0].mxu0 %v2956
        %v4245 = vpop.f32.mrb[0].mxu0
        %v4246 = vadd.f32 %v4085, %v4245
        %v4247 = vpop.f32.mrb[0].mxu0
        %v4248 = vpop.f32.mrb[0].mxu0
        %v4249 = vadd.f32 %v4088, %v4248
        %v4250 = vpop.f32.mrb[0].mxu0
        %4251 = vmatprep.mubr.bf16.mxu0 %v3085
        %4252 = vmatmul.mubr.bf16.gmra.mrb[0].mxu0 %v2957
        %v4253 = vpop.f32.mrb[0].mxu0
        %v4254 = vadd.f32 %v4093, %v4253
        %v4255 = vpop.f32.mrb[0].mxu0
        %v4256 = vpop.f32.mrb[0].mxu0
        %v4257 = vadd.f32 %v4096, %v4256
        %v4258 = vpop.f32.mrb[0].mxu0
        %4259 = vmatprep.mubr.bf16.mxu0 %v3086
        %4260 = vmatmul.mubr.bf16.gmra.mrb[0].mxu0 %v2958
        %v4261 = vpop.f32.mrb[0].mxu0
        %v4262 = vadd.f32 %v4101, %v4261
        %v4263 = vpop.f32.mrb[0].mxu0
        %v4264 = vpop.f32.mrb[0].mxu0
        %v4265 = vadd.f32 %v4104, %v4264
        %v4266 = vpop.f32.mrb[0].mxu0
        %4267 = vmatprep.mubr.bf16.mxu0 %v3087
        %4268 = vmatmul.mubr.bf16.gmra.mrb[0].mxu0 %v2959
        %v4269 = vpop.f32.mrb[0].mxu0
        %v4270 = vadd.f32 %v4109, %v4269
        %v4271 = vpop.f32.mrb[0].mxu0
        %v4272 = vpop.f32.mrb[0].mxu0
        %v4273 = vadd.f32 %v4112, %v4272
        %v4274 = vpop.f32.mrb[0].mxu0
        %4275 = vmatprep.mubr.bf16.mxu0 %v3107
        %4276 = vmatmul.mubr.bf16.gmra.mrb[0].mxu0 %v3099
        %v4277 = vpop.f32.mrb[0].mxu0
        %v4278 = vadd.f32 %v4117, %v4277
        %v4279 = vpop.f32.mrb[0].mxu0
        %v4280 = vpop.f32.mrb[0].mxu0
        %v4281 = vadd.f32 %v4120, %v4280
        %v4282 = vpop.f32.mrb[0].mxu0
        %4283 = vdwg.mxu0
        %4284 = vmatprep.subr.bf16.mxu0 0
        %4285 = vmatpush1.bf16.msra.mxu0 %v3705
        %4286 = vmatprep.subr.bf16.mxu0 0
        %4287 = vmatpush1.bf16.msra.mxu0 %v3706
        %4288 = vmatprep.subr.bf16.mxu0 0
        %4289 = vmatpush1.bf16.msra.mxu0 %v3707
        %4290 = vmatprep.subr.bf16.mxu0 0
        %4291 = vmatpush1.bf16.msra.mxu0 %v3708
        %4292 = vmatprep.subr.bf16.mxu0 0
        %4293 = vmatpush1.bf16.msra.mxu0 %v3709
        %4294 = vmatprep.subr.bf16.mxu0 0
        %4295 = vmatpush1.bf16.msra.mxu0 %v3710
        %4296 = vmatprep.subr.bf16.mxu0 0
        %4297 = vmatpush1.bf16.msra.mxu0 %v3711
        %4298 = vmatprep.subr.bf16.mxu0 0
        %4299 = vmatpush1.bf16.msra.mxu0 %v3712
        %4300 = vmatprep.subr.bf16.mxu0 0
        %4301 = vmatpush1.bf16.msra.mxu0 %v3713
        %4302 = vmatprep.subr.bf16.mxu0 0
        %4303 = vmatpush1.bf16.msra.mxu0 %v3714
        %4304 = vmatprep.subr.bf16.mxu0 0
        %4305 = vmatpush1.bf16.msra.mxu0 %v3715
        %4306 = vmatprep.subr.bf16.mxu0 0
        %4307 = vmatpush1.bf16.msra.mxu0 %v3716
        %4308 = vmatprep.subr.bf16.mxu0 0
        %4309 = vmatpush1.bf16.msra.mxu0 %v3717
        %4310 = vmatprep.subr.bf16.mxu0 0
        %4311 = vmatpush1.bf16.msra.mxu0 %v3718
        %4312 = vmatprep.subr.bf16.mxu0 0
        %4313 = vmatpush1.bf16.msra.mxu0 %v3719
        %4314 = vmatprep.subr.bf16.mxu0 0
        %4315 = vmatpush1.bf16.msra.mxu0 %v3720
        %4316 = vmatprep.mubr.bf16.mxu0 %v2946
        %4317 = vmatmul.mubr.bf16.gmra.mrb[0].mxu0 %v2770
        %v4318 = vpop.f32.mrb[0].mxu0
        %v4319 = vadd.f32 %v4158, %v4318
        %v4320 = vpop.f32.mrb[0].mxu0
        %v4321 = vpop.f32.mrb[0].mxu0
        %v4322 = vadd.f32 %v4161, %v4321
        %v4323 = vpop.f32.mrb[0].mxu0
        %4324 = vmatprep.mubr.bf16.mxu0 %v2947
        %4325 = vmatmul.mubr.bf16.gmra.mrb[0].mxu0 %v2771
        %v4326 = vpop.f32.mrb[0].mxu0
        %v4327 = vadd.f32 %v4166, %v4326
        %v4328 = vpop.f32.mrb[0].mxu0
        %v4329 = vpop.f32.mrb[0].mxu0
        %v4330 = vadd.f32 %v4169, %v4329
        %v4331 = vpop.f32.mrb[0].mxu0
        %4332 = vmatprep.mubr.bf16.mxu0 %v2948
        %4333 = vmatmul.mubr.bf16.gmra.mrb[0].mxu0 %v2772
        %v4334 = vpop.f32.mrb[0].mxu0
        %v4335 = vadd.f32 %v4174, %v4334
        %v4336 = vpop.f32.mrb[0].mxu0
        %v4337 = vpop.f32.mrb[0].mxu0
        %v4338 = vadd.f32 %v4177, %v4337
        %v4339 = vpop.f32.mrb[0].mxu0
        %4340 = vmatprep.mubr.bf16.mxu0 %v2949
        %4341 = vmatmul.mubr.bf16.gmra.mrb[0].mxu0 %v2773
        %v4342 = vpop.f32.mrb[0].mxu0
        %v4343 = vadd.f32 %v4182, %v4342
        %v4344 = vpop.f32.mrb[0].mxu0
        %v4345 = vpop.f32.mrb[0].mxu0
        %v4346 = vadd.f32 %v4185, %v4345
        %v4347 = vpop.f32.mrb[0].mxu0
        %4348 = vmatprep.mubr.bf16.mxu0 %v2950
        %4349 = vmatmul.mubr.bf16.gmra.mrb[0].mxu0 %v2774
        %v4350 = vpop.f32.mrb[0].mxu0
        %v4351 = vadd.f32 %v4190, %v4350
        %v4352 = vpop.f32.mrb[0].mxu0
        %v4353 = vpop.f32.mrb[0].mxu0
        %v4354 = vadd.f32 %v4193, %v4353
        %v4355 = vpop.f32.mrb[0].mxu0
        %4356 = vmatprep.mubr.bf16.mxu0 %v2951
        %4357 = vmatmul.mubr.bf16.gmra.mrb[0].mxu0 %v2775
        %v4358 = vpop.f32.mrb[0].mxu0
        %v4359 = vadd.f32 %v4198, %v4358
        %v4360 = vpop.f32.mrb[0].mxu0
        %v4361 = vpop.f32.mrb[0].mxu0
        %v4362 = vadd.f32 %v4201, %v4361
        %v4363 = vpop.f32.mrb[0].mxu0
        %4364 = vmatprep.mubr.bf16.mxu0 %v2952
        %4365 = vmatmul.mubr.bf16.gmra.mrb[0].mxu0 %v2776
        %v4366 = vpop.f32.mrb[0].mxu0
        %v4367 = vadd.f32 %v4206, %v4366
        %v4368 = vpop.f32.mrb[0].mxu0
        %v4369 = vpop.f32.mrb[0].mxu0
        %v4370 = vadd.f32 %v4209, %v4369
        %v4371 = vpop.f32.mrb[0].mxu0
        %4372 = vmatprep.mubr.bf16.mxu0 %v2953
        %4373 = vmatmul.mubr.bf16.gmra.mrb[0].mxu0 %v2777
        %v4374 = vpop.f32.mrb[0].mxu0
        %v4375 = vadd.f32 %v4214, %v4374
        %v4376 = vpop.f32.mrb[0].mxu0
        %v4377 = vpop.f32.mrb[0].mxu0
        %v4378 = vadd.f32 %v4217, %v4377
        %v4379 = vpop.f32.mrb[0].mxu0
        %4380 = vmatprep.mubr.bf16.mxu0 %v2954
        %4381 = vmatmul.mubr.bf16.gmra.mrb[0].mxu0 %v2778
        %v4382 = vpop.f32.mrb[0].mxu0
        %v4383 = vadd.f32 %v4222, %v4382
        %v4384 = vpop.f32.mrb[0].mxu0
        %v4385 = vpop.f32.mrb[0].mxu0
        %v4386 = vadd.f32 %v4225, %v4385
        %v4387 = vpop.f32.mrb[0].mxu0
        %4388 = vmatprep.mubr.bf16.mxu0 %v2955
        %4389 = vmatmul.mubr.bf16.gmra.mrb[0].mxu0 %v2779
        %v4390 = vpop.f32.mrb[0].mxu0
        %v4391 = vadd.f32 %v4230, %v4390
        %v4392 = vpop.f32.mrb[0].mxu0
        %v4393 = vpop.f32.mrb[0].mxu0
        %v4394 = vadd.f32 %v4233, %v4393
        %v4395 = vpop.f32.mrb[0].mxu0
        %4396 = vmatprep.mubr.bf16.mxu0 %v2956
        %4397 = vmatmul.mubr.bf16.gmra.mrb[0].mxu0 %v2780
        %v4398 = vpop.f32.mrb[0].mxu0
        %v4399 = vadd.f32 %v4238, %v4398
        %v4400 = vpop.f32.mrb[0].mxu0
        %v4401 = vpop.f32.mrb[0].mxu0
        %v4402 = vadd.f32 %v4241, %v4401
        %v4403 = vpop.f32.mrb[0].mxu0
        %4404 = vmatprep.mubr.bf16.mxu0 %v2957
        %4405 = vmatmul.mubr.bf16.gmra.mrb[0].mxu0 %v2781
        %v4406 = vpop.f32.mrb[0].mxu0
        %v4407 = vadd.f32 %v4246, %v4406
        %v4408 = vpop.f32.mrb[0].mxu0
        %v4409 = vpop.f32.mrb[0].mxu0
        %v4410 = vadd.f32 %v4249, %v4409
        %v4411 = vpop.f32.mrb[0].mxu0
        %4412 = vmatprep.mubr.bf16.mxu0 %v2958
        %4413 = vmatmul.mubr.bf16.gmra.mrb[0].mxu0 %v2782
        %v4414 = vpop.f32.mrb[0].mxu0
        %v4415 = vadd.f32 %v4254, %v4414
        %v4416 = vpop.f32.mrb[0].mxu0
        %v4417 = vpop.f32.mrb[0].mxu0
        %v4418 = vadd.f32 %v4257, %v4417
        %v4419 = vpop.f32.mrb[0].mxu0
        %4420 = vmatprep.mubr.bf16.mxu0 %v2959
        %4421 = vmatmul.mubr.bf16.gmra.mrb[0].mxu0 %v2783
        %v4422 = vpop.f32.mrb[0].mxu0
        %v4423 = vadd.f32 %v4262, %v4422
        %v4424 = vpop.f32.mrb[0].mxu0
        %v4425 = vpop.f32.mrb[0].mxu0
        %v4426 = vadd.f32 %v4265, %v4425
        %v4427 = vpop.f32.mrb[0].mxu0
        %4428 = vmatprep.mubr.bf16.mxu0 %v3099
        %4429 = vmatmul.mubr.bf16.gmra.mrb[0].mxu0 %v3088
        %v4430 = vpop.f32.mrb[0].mxu0
        %v4431 = vadd.f32 %v4270, %v4430
        %v4432 = vpop.f32.mrb[0].mxu0
        %v4433 = vpop.f32.mrb[0].mxu0
        %v4434 = vadd.f32 %v4273, %v4433
        %v4435 = vpop.f32.mrb[0].mxu0
        %4436 = vmatprep.mubr.bf16.mxu0 %v3119
        %4437 = vmatmul.mubr.bf16.gmra.mrb[0].mxu0 %v3108
        %v4438 = vpop.f32.mrb[0].mxu0
        %v4439 = vadd.f32 %v4278, %v4438
        %v4440 = vpop.f32.mrb[0].mxu0
        %v4441 = vpop.f32.mrb[0].mxu0
        %v4442 = vadd.f32 %v4281, %v4441
        %v4443 = vpop.f32.mrb[0].mxu0
        %4444 = vdwg.mxu0
        %4445 = vmatprep.subr.bf16.mxu0 0
        %4446 = vmatpush1.bf16.msra.mxu0 %v3721
        %4447 = vmatprep.subr.bf16.mxu0 0
        %4448 = vmatpush1.bf16.msra.mxu0 %v3722
        %4449 = vmatprep.subr.bf16.mxu0 0
        %4450 = vmatpush1.bf16.msra.mxu0 %v3723
        %4451 = vmatprep.subr.bf16.mxu0 0
        %4452 = vmatpush1.bf16.msra.mxu0 %v3724
        %4453 = vmatprep.subr.bf16.mxu0 0
        %4454 = vmatpush1.bf16.msra.mxu0 %v3725
        %4455 = vmatprep.subr.bf16.mxu0 0
        %4456 = vmatpush1.bf16.msra.mxu0 %v3726
        %4457 = vmatprep.subr.bf16.mxu0 0
        %4458 = vmatpush1.bf16.msra.mxu0 %v3727
        %4459 = vmatprep.subr.bf16.mxu0 0
        %4460 = vmatpush1.bf16.msra.mxu0 %v3728
        %4461 = vmatprep.subr.bf16.mxu0 0
        %4462 = vmatpush1.bf16.msra.mxu0 0
        %4463 = vmatprep.subr.bf16.mxu0 0
        %4464 = vmatpush1.bf16.msra.mxu0 0
        %4465 = vmatprep.subr.bf16.mxu0 0
        %4466 = vmatpush1.bf16.msra.mxu0 0
        %4467 = vmatprep.subr.bf16.mxu0 0
        %4468 = vmatpush1.bf16.msra.mxu0 0
        %4469 = vmatprep.subr.bf16.mxu0 0
        %4470 = vmatpush1.bf16.msra.mxu0 0
        %4471 = vmatprep.subr.bf16.mxu0 0
        %4472 = vmatpush1.bf16.msra.mxu0 0
        %4473 = vmatprep.subr.bf16.mxu0 0
        %4474 = vmatpush1.bf16.msra.mxu0 0
        %4475 = vmatprep.subr.bf16.mxu0 0
        %4476 = vmatpush1.bf16.msra.mxu0 0
        %4477 = vmatprep.mubr.bf16.mxu0 0
        %4478 = vmatmul.mubr.bf16.gmra.mrb[0].mxu0 %v3074
        %v4479 = vpop.f32.mrb[0].mxu0
        %v4480 = vadd.f32 %v4319, %v4479
        %v4481 = vpop.f32.mrb[0].mxu0
        %v4482 = vpop.f32.mrb[0].mxu0
        %v4483 = vadd.f32 %v4322, %v4482
        %v4484 = vpop.f32.mrb[0].mxu0
        %4485 = vmatprep.mubr.bf16.mxu0 0
        %4486 = vmatmul.mubr.bf16.gmra.mrb[0].mxu0 %v3075
        %v4487 = vpop.f32.mrb[0].mxu0
        %v4488 = vadd.f32 %v4327, %v4487
        %v4489 = vpop.f32.mrb[0].mxu0
        %v4490 = vpop.f32.mrb[0].mxu0
        %v4491 = vadd.f32 %v4330, %v4490
        %v4492 = vpop.f32.mrb[0].mxu0
        %4493 = vmatprep.mubr.bf16.mxu0 0
        %4494 = vmatmul.mubr.bf16.gmra.mrb[0].mxu0 %v3076
        %v4495 = vpop.f32.mrb[0].mxu0
        %v4496 = vadd.f32 %v4335, %v4495
        %v4497 = vpop.f32.mrb[0].mxu0
        %v4498 = vpop.f32.mrb[0].mxu0
        %v4499 = vadd.f32 %v4338, %v4498
        %v4500 = vpop.f32.mrb[0].mxu0
        %4501 = vmatprep.mubr.bf16.mxu0 0
        %4502 = vmatmul.mubr.bf16.gmra.mrb[0].mxu0 %v3077
        %v4503 = vpop.f32.mrb[0].mxu0
        %v4504 = vadd.f32 %v4343, %v4503
        %v4505 = vpop.f32.mrb[0].mxu0
        %v4506 = vpop.f32.mrb[0].mxu0
        %v4507 = vadd.f32 %v4346, %v4506
        %v4508 = vpop.f32.mrb[0].mxu0
        %4509 = vmatprep.mubr.bf16.mxu0 0
        %4510 = vmatmul.mubr.bf16.gmra.mrb[0].mxu0 %v3078
        %v4511 = vpop.f32.mrb[0].mxu0
        %v4512 = vadd.f32 %v4351, %v4511
        %v4513 = vpop.f32.mrb[0].mxu0
        %v4514 = vpop.f32.mrb[0].mxu0
        %v4515 = vadd.f32 %v4354, %v4514
        %v4516 = vpop.f32.mrb[0].mxu0
        %4517 = vmatprep.mubr.bf16.mxu0 0
        %4518 = vmatmul.mubr.bf16.gmra.mrb[0].mxu0 %v3079
        %v4519 = vpop.f32.mrb[0].mxu0
        %v4520 = vadd.f32 %v4359, %v4519
        %v4521 = vpop.f32.mrb[0].mxu0
        %v4522 = vpop.f32.mrb[0].mxu0
        %v4523 = vadd.f32 %v4362, %v4522
        %v4524 = vpop.f32.mrb[0].mxu0
        %4525 = vmatprep.mubr.bf16.mxu0 0
        %4526 = vmatmul.mubr.bf16.gmra.mrb[0].mxu0 %v3080
        %v4527 = vpop.f32.mrb[0].mxu0
        %v4528 = vadd.f32 %v4367, %v4527
        %v4529 = vpop.f32.mrb[0].mxu0
        %v4530 = vpop.f32.mrb[0].mxu0
        %v4531 = vadd.f32 %v4370, %v4530
        %v4532 = vpop.f32.mrb[0].mxu0
        %4533 = vmatprep.mubr.bf16.mxu0 0
        %4534 = vmatmul.mubr.bf16.gmra.mrb[0].mxu0 %v3081
        %v4535 = vpop.f32.mrb[0].mxu0
        %v4536 = vadd.f32 %v4375, %v4535
        %v4537 = vpop.f32.mrb[0].mxu0
        %v4538 = vpop.f32.mrb[0].mxu0
        %v4539 = vadd.f32 %v4378, %v4538
        %v4540 = vpop.f32.mrb[0].mxu0
        %4541 = vmatprep.mubr.bf16.mxu0 0
        %4542 = vmatmul.mubr.bf16.gmra.mrb[0].mxu0 %v3082
        %v4543 = vpop.f32.mrb[0].mxu0
        %v4544 = vadd.f32 %v4383, %v4543
        %v4545 = vpop.f32.mrb[0].mxu0
        %v4546 = vpop.f32.mrb[0].mxu0
        %v4547 = vadd.f32 %v4386, %v4546
        %v4548 = vpop.f32.mrb[0].mxu0
        %4549 = vmatprep.mubr.bf16.mxu0 0
        %4550 = vmatmul.mubr.bf16.gmra.mrb[0].mxu0 %v3083
        %v4551 = vpop.f32.mrb[0].mxu0
        %v4552 = vadd.f32 %v4391, %v4551
        %v4553 = vpop.f32.mrb[0].mxu0
        %v4554 = vpop.f32.mrb[0].mxu0
        %v4555 = vadd.f32 %v4394, %v4554
        %v4556 = vpop.f32.mrb[0].mxu0
        %4557 = vmatprep.mubr.bf16.mxu0 0
        %4558 = vmatmul.mubr.bf16.gmra.mrb[0].mxu0 %v3084
        %v4559 = vpop.f32.mrb[0].mxu0
        %v4560 = vadd.f32 %v4399, %v4559
        %v4561 = vpop.f32.mrb[0].mxu0
        %v4562 = vpop.f32.mrb[0].mxu0
        %v4563 = vadd.f32 %v4402, %v4562
        %v4564 = vpop.f32.mrb[0].mxu0
        %4565 = vmatprep.mubr.bf16.mxu0 0
        %4566 = vmatmul.mubr.bf16.gmra.mrb[0].mxu0 %v3085
        %v4567 = vpop.f32.mrb[0].mxu0
        %v4568 = vadd.f32 %v4407, %v4567
        %v4569 = vpop.f32.mrb[0].mxu0
        %v4570 = vpop.f32.mrb[0].mxu0
        %v4571 = vadd.f32 %v4410, %v4570
        %v4572 = vpop.f32.mrb[0].mxu0
        %4573 = vmatprep.mubr.bf16.mxu0 0
        %4574 = vmatmul.mubr.bf16.gmra.mrb[0].mxu0 %v3086
        %v4575 = vpop.f32.mrb[0].mxu0
        %v4576 = vadd.f32 %v4415, %v4575
        %v4577 = vpop.f32.mrb[0].mxu0
        %v4578 = vpop.f32.mrb[0].mxu0
        %v4579 = vadd.f32 %v4418, %v4578
        %v4580 = vpop.f32.mrb[0].mxu0
        %4581 = vmatprep.mubr.bf16.mxu0 0
        %4582 = vmatmul.mubr.bf16.gmra.mrb[0].mxu0 %v3087
        %v4583 = vpop.f32.mrb[0].mxu0
        %v4584 = vadd.f32 %v4423, %v4583
        %v4585 = vpop.f32.mrb[0].mxu0
        %v4586 = vpop.f32.mrb[0].mxu0
        %v4587 = vadd.f32 %v4426, %v4586
        %v4588 = vpop.f32.mrb[0].mxu0
        %4589 = vmatprep.mubr.bf16.mxu0 0
        %4590 = vmatmul.mubr.bf16.gmra.mrb[0].mxu0 %v3107
        %v4591 = vpop.f32.mrb[0].mxu0
        %v4592 = vadd.f32 %v4431, %v4591
        %v4593 = vpop.f32.mrb[0].mxu0
        %v4594 = vpop.f32.mrb[0].mxu0
        %v4595 = vadd.f32 %v4434, %v4594
        %v4596 = vpop.f32.mrb[0].mxu0
        %4597 = vmatprep.mubr.bf16.mxu0 0
        %4598 = vmatmul.mubr.bf16.gmra.mrb[0].mxu0 %v3127
        %v4599 = vpop.f32.mrb[0].mxu0
        %v4600 = vadd.f32 %v4439, %v4599
        %v4601 = vpop.f32.mrb[0].mxu0
        %v4602 = vpop.f32.mrb[0].mxu0
        %v4603 = vadd.f32 %v4442, %v4602
        %v4604 = vpop.f32.mrb[0].mxu0
        %4605 = vdwg.mxu0
        %4606 = vst [vmem:[%s367] sm:$0xff] %v4480
        %4607 = vst [vmem:[%s367 + $0x8] sm:$0xff] %v4483
        %4608 = vst [vmem:[%s367 + $0x10] sm:$0xff] %v4488
        %4609 = vst [vmem:[%s367 + $0x18] sm:$0xff] %v4491
        %4610 = vst [vmem:[%s367 + $0x20] sm:$0xff] %v4496
        %4611 = vst [vmem:[%s367 + $0x28] sm:$0xff] %v4499
        %4612 = vst [vmem:[%s367 + $0x30] sm:$0xff] %v4504
        %4613 = vst [vmem:[%s367 + $0x38] sm:$0xff] %v4507
        %4614 = vst [vmem:[%s367 + $0x40] sm:$0xff] %v4512
        %4615 = vst [vmem:[%s367 + $0x48] sm:$0xff] %v4515
        %4616 = vst [vmem:[%s367 + $0x50] sm:$0xff] %v4520
        %4617 = vst [vmem:[%s367 + $0x58] sm:$0xff] %v4523
        %4618 = vst [vmem:[%s367 + $0x60] sm:$0xff] %v4528
        %4619 = vst [vmem:[%s367 + $0x68] sm:$0xff] %v4531
        %4620 = vst [vmem:[%s367 + $0x70] sm:$0xff] %v4536
        %4621 = vst [vmem:[%s367 + $0x78] sm:$0xff] %v4539
        %4622 = vst [vmem:[%s367 + $0x80] sm:$0xff] %v4544
        %4623 = vst [vmem:[%s367 + $0x88] sm:$0xff] %v4547
        %4624 = vst [vmem:[%s367 + $0x90] sm:$0xff] %v4552
        %4625 = vst [vmem:[%s367 + $0x98] sm:$0xff] %v4555
        %4626 = vst [vmem:[%s367 + $0xa0] sm:$0xff] %v4560
        %4627 = vst [vmem:[%s367 + $0xa8] sm:$0xff] %v4563
        %4628 = vst [vmem:[%s367 + $0xb0] sm:$0xff] %v4568
        %4629 = vst [vmem:[%s367 + $0xb8] sm:$0xff] %v4571
        %4630 = vst [vmem:[%s367 + $0xc0] sm:$0xff] %v4576
        %4631 = vst [vmem:[%s367 + $0xc8] sm:$0xff] %v4579
        %4632 = vst [vmem:[%s367 + $0xd0] sm:$0xff] %v4584
        %4633 = vst [vmem:[%s367 + $0xd8] sm:$0xff] %v4587
        %4634 = vst [vmem:[%s367 + $0xe0] sm:$0xff] %v4592
        %4635 = vst [vmem:[%s367 + $0xe8] sm:$0xff] %v4595
        %4636 = vst [vmem:[%s367 + $0xf0] sm:$0xff] %v4600
        %4637 = vst [vmem:[%s367 + $0xf8] sm:$0xff] %v4603
        %s4638 = sand.u32 %s208, 1
        %s4639 = scalar_lea.sflag [#allocation6], %s4638
        %s4640 = sand.u32 %s208, 1
        %s4641 = smul.addr %s4640, 256
        %s4642 = scalar_lea.vmem [#allocation12], %s4641
        // Predicated region
        $region69: #{tpu_custom_call.1} parent=51 // pred_check
          %p4643 = pneg %p218
        $region70: #{tpu_custom_call.1} parent=51 // pred_check_branch
          %4645 = sbr.rel (%p4643) target = $region72
        $region71: #{tpu_custom_call.1} parent=51 // pred_region
          %s4647 = ssub.s32 4096, 4096
          %4648 = vsyncadd %s4639, %s4647
          %s4649 = smul.addr %s27, 32
          %s4650 = smul.addr %s4649, 128
          %s4651 = scalar_lea.hbm %s8, %s4650
          %s4652 = sshll.u32 %s4642, 4
          %s4653 = int_to_ptr.vmem [resolvable:$true] %s4652
          %4658 = dma.vmem_to_hbm [thread:$0]  %s4653, 4096, %s4651, %s4639, 128, 128, 8
        $region72: #{tpu_custom_call.1} parent=51 // pred_fallthru
          _
      $region52: #{tpu_custom_call.1} parent=5 // pred_fallthru
        _
      %p4659 = scmp.le.s32.totalorder 2, %s22
      // Predicated region
      $region73: #{tpu_custom_call.1} parent=5 // pred_check
        %p4660 = pneg %p4659
      $region74: #{tpu_custom_call.1} parent=5 // pred_check_branch
        %4662 = sbr.rel (%p4660) target = $region76
      $region75: #{tpu_custom_call.1} parent=5 // pred_region
        %s4663 = ssub.s32 %s22, 2
        // Predicated region
        $region77: #{tpu_custom_call.1} parent=75 // pred_check
          %p4664 = pneg %p224
        $region78: #{tpu_custom_call.1} parent=75 // pred_check_branch
          %4666 = sbr.rel (%p4664) target = $region80
        $region79: #{tpu_custom_call.1} parent=75 // pred_region
          %s4667 = sand.u32 %s209, 1
          %s4668 = scalar_lea.sflag [#allocation6], %s4667
          %s4669 = sand.u32 %s209, 1
          %s4670 = smul.addr %s4669, 256
          %s4671 = scalar_lea.vmem [#allocation12], %s4670
          %4672 = dma.done %s4668, 4096
        $region80: #{tpu_custom_call.1} parent=75 // pred_fallthru
          _
      $region76: #{tpu_custom_call.1} parent=5 // pred_fallthru
        _
    $region6: #{tpu_custom_call.1} parent=1 // loop_footer
      %s26 = sadd.s32 1, %s22
    $region7: #{tpu_custom_call.1} parent=1 // loop_footer_branch
      %21 = sbr.rel target = $region3
    $region8: #{tpu_custom_call.1} parent=1 // loop_exit
      _
    %4673 = vsyncpa [#allocation5], 1
    %s4674 = scalar_lea.sflag [#allocation5], 1
    %4675 = vsyncpa %s4674, 1
    %4676 = vsyncpa [#allocation8], 1
    %4677 = vsyncpa [#allocation11], 1
    %4678 = vsyncpa [#allocation6], 1
    %s4679 = scalar_lea.sflag [#allocation6], 1
    %4680 = vsyncpa %s4679, 1

</llo_original>
